<compile_context>
chip_gen: v5e
topology: v5e:2x2
jax: 0.10.0
libtpu: 0.0.40
codegen_flags: <defaults>
</compile_context>

<pallas_src>
import functools
import math
from dataclasses import dataclass

import jax
import jax.numpy as jnp
from jax.experimental import pallas as pl
from jax.experimental.pallas import tpu as pltpu


# ----------------------------- config -----------------------------

@dataclass
class Config:
    n_embd: int = 32
    n_head: int = 4
    n_layer: int = 2
    vocab_size: int = 64
    block_size: int = 16
    dropout: float = 0.0
    bias: bool = True
    device: str = None


NEG = -1e30  # finite "-inf" for additive masks (no NaN risk)


# ------------------- in-kernel building blocks (pure value fns) -------------------

def _ln(x, w, b):
    # F.layer_norm over last dim, eps=1e-5, biased variance
    mean = jnp.mean(x, axis=-1, keepdims=True)
    var = jnp.mean(jnp.square(x - mean), axis=-1, keepdims=True)
    return (x - mean) * jax.lax.rsqrt(var + 1e-5) * w + b


def _gelu_tanh(x):
    c = 0.7978845608028654  # sqrt(2/pi)
    return 0.5 * x * (1.0 + jnp.tanh(c * (x + 0.044715 * x * x * x)))


def _bf16(x):
    return x.astype(jnp.bfloat16)


def _mlp(x, fc_w, fc_b, pr_w, pr_b):
    h = jnp.dot(_bf16(x), _bf16(fc_w), preferred_element_type=jnp.float32) + fc_b
    return jnp.dot(_bf16(_gelu_tanh(h)), _bf16(pr_w),
                   preferred_element_type=jnp.float32) + pr_b


def _mha(x_q, x_kv, w3, b3, wo3, out_b, bias, n_head, dh, scale):
    """Head-batched multi-head attention on one (T, E) sequence.

    w3  : (H, E, 3*dh)  per-head [q|k|v] projection columns
    b3  : (H, 1, 3*dh)  per-head [q|k|v] projection bias
    wo3 : (H, dh, E)    per-head rows of the output projection
    x_kv=None -> self-attention.  All activations are produced directly in the
    (H, T, *) head-batched layout; no in-kernel reshape/transpose needed.
    """
    T, E = x_q.shape
    if x_kv is None:
        xb = jnp.broadcast_to(x_q, (n_head, T, E))
        qkv = jnp.einsum('hte,hek->htk', _bf16(xb), _bf16(w3),
                         preferred_element_type=jnp.float32) + b3        # (H,T,3dh)
        q, k, v = qkv[..., :dh], qkv[..., dh:2 * dh], qkv[..., 2 * dh:]
    else:
        # cross-attention: Q from x_q only, K/V from x_kv only (half the proj work)
        xq = jnp.broadcast_to(x_q, (n_head, T, E))
        xk = jnp.broadcast_to(x_kv, (n_head, x_kv.shape[0], E))
        q = jnp.einsum('hte,hed->htd', _bf16(xq), _bf16(w3[..., :dh]),
                       preferred_element_type=jnp.float32) + b3[..., :dh]
        kv = jnp.einsum('hse,hek->hsk', _bf16(xk), _bf16(w3[..., dh:]),
                        preferred_element_type=jnp.float32) + b3[..., dh:]
        k, v = kv[..., :dh], kv[..., dh:]

    s = jnp.einsum('hqd,hkd->hqk', _bf16(q), _bf16(k),
                   preferred_element_type=jnp.float32) * scale           # (H,T,S)
    if bias is not None:
        s = s + bias                                 # (1,T) pad or (T,T) causal
    m = jnp.max(s, axis=-1, keepdims=True)
    p = jnp.exp(s - m)
    p = p * pl.reciprocal(jnp.sum(p, axis=-1, keepdims=True), approx=True)
    o = jnp.einsum('hqk,hkd->hqd', _bf16(p), _bf16(v),
                   preferred_element_type=jnp.float32)                   # (H,T,dh)
    # fold head merge into the output projection:
    #   concat_h(o_h) @ W_out == sum_h o_h @ W_out[h*dh:(h+1)*dh, :]
    contrib = jnp.einsum('htd,hde->hte', _bf16(o), _bf16(wo3),
                         preferred_element_type=jnp.float32)             # (H,T,E)
    return jnp.sum(contrib, axis=0) + out_b


# ----------------------------- fused forward kernel -----------------------------

def _fwd_kernel(xs_ref, mask_ref, tgt_ref,
                attn_w_ref, attn_o_ref, attn_b_ref,
                fc_w_ref, fc_b_ref, pr_w_ref,
                enc_vec_ref, dec_vec_ref, lnf_ref, lm_w_ref,
                logits_ref, loss_ref, cnt_ref,
                *, n_layer, n_head, dh):
    T = xs_ref.shape[2]
    L = n_layer
    scale = 1.0 / math.sqrt(dh)

    in_x = xs_ref[0, 0].astype(jnp.float32)       # (T, E) encoder input
    tg_x = xs_ref[0, 1].astype(jnp.float32)       # (T, E) decoder input

    # additive masks generated in-kernel
    pad_bias = jnp.where(mask_ref[0] > 0, 0.0, NEG).astype(jnp.float32)   # (1, T)
    r_i = jax.lax.broadcasted_iota(jnp.int32, (T, T), 0)
    c_i = jax.lax.broadcasted_iota(jnp.int32, (T, T), 1)
    causal_bias = jnp.where(c_i <= r_i, 0.0, NEG).astype(jnp.float32)     # (T, T)

    # ---------------- encoder stack (intermediates stay on-core) ----------------
    x = in_x
    for l in range(L):                            # static unroll over layers
        v = enc_vec_ref[l]                        # (6,E): ln1_w,ln1_b,ln2_w,ln2_b,out_b,pr_b
        xn = _ln(x, v[0:1], v[1:2])
        x = x + _mha(xn, None, attn_w_ref[l], attn_b_ref[l], attn_o_ref[l],
                     v[4:5], pad_bias, n_head, dh, scale)
        xn = _ln(x, v[2:3], v[3:4])
        x = x + _mlp(xn, fc_w_ref[l], fc_b_ref[l], pr_w_ref[l], v[5:6])
    enc = _ln(x, lnf_ref[0:1], lnf_ref[1:2])

    # ---------------- decoder stack ----------------
    x = tg_x
    for l in range(L):
        v = dec_vec_ref[l]                        # (9,E): ln1,ln2,ln3 (w,b), s_out_b,c_out_b,pr_b
        # causal self-attention (reference decoder gets key_padding_mask=None)
        xn = _ln(x, v[0:1], v[1:2])
        x = x + _mha(xn, None, attn_w_ref[L + l], attn_b_ref[L + l],
                     attn_o_ref[L + l], v[6:7], causal_bias, n_head, dh, scale)
        # cross-attention over encoder output (no mask, not causal)
        xn = _ln(x, v[2:3], v[3:4])
        x = x + _mha(xn, enc, attn_w_ref[2 * L + l], attn_b_ref[2 * L + l],
                     attn_o_ref[2 * L + l], v[7:8], None, n_head, dh, scale)
        # MLP
        xn = _ln(x, v[4:5], v[5:6])
        x = x + _mlp(xn, fc_w_ref[L + l], fc_b_ref[L + l], pr_w_ref[L + l], v[8:9])
    dec = _ln(x, lnf_ref[2:3], lnf_ref[3:4])

    # ---------------- tied LM head (no bias) fused with CE (ignore_index=0) ----------------
    logits = jnp.dot(_bf16(dec), _bf16(lm_w_ref[...]),
                     preferred_element_type=jnp.float32)                  # (T, V)
    logits_ref[0] = logits.astype(logits_ref.dtype)
    t = tgt_ref[0]                                                        # (T, 1) int32
    m = jnp.max(logits, axis=-1, keepdims=True)
    lse = m + jnp.log(jnp.sum(jnp.exp(logits - m), axis=-1, keepdims=True))
    vcols = jax.lax.broadcasted_iota(jnp.int32, logits.shape, 1)
    tgt_logit = jnp.sum(jnp.where(vcols == t, logits, 0.0), axis=-1, keepdims=True)
    valid = (t != 0).astype(jnp.float32)
    per_row = (lse - tgt_logit) * valid
    loss_ref[0] = jnp.sum(per_row, axis=0, keepdims=True)                 # (1, 1)
    cnt_ref[0] = jnp.sum(valid, axis=0, keepdims=True)                    # (1, 1)


# ----------------------------- pallas_call wrapper -----------------------------

def _batch_spec(shape):
    ndim = len(shape)
    return pl.BlockSpec((1,) + tuple(shape[1:]),
                        lambda b: (b,) + (0,) * (ndim - 1))


def _const_spec(arr):
    ndim = arr.ndim
    return pl.BlockSpec(arr.shape, lambda b: (0,) * ndim)


def encoder_decoder_forward(params, input_ids, input_attention_mask, label_ids, cfg):
    B, T = input_ids.shape
    E, H, L, V = cfg.n_embd, cfg.n_head, cfg.n_layer, cfg.vocab_size
    dh = E // H

    # target_true = cat(label_ids[:,1:], zeros) -- computed BEFORE label mutation
    target_true = jnp.concatenate(
        [label_ids[:, 1:], jnp.zeros((B, 1), label_ids.dtype)], axis=1)

    # in-place mutation: label_ids[:, label_ids.argmin() - 1] = 0
    # (flat argmin used as a column index; matches the reference when the global
    #  minimum lies in row 0, as planted in the test input)
    idx = (jnp.argmin(label_ids) - 1) % T
    label_ids = label_ids.at[:, idx].set(0)

    # TODO(synk): token/position embedding gathers stay in plain JAX (XLA gather);
    # a Pallas one-hot-matmul embedding would only add overhead at these sizes.
    pos = params["wpe"][:T][None]
    in_x = params["wte"][input_ids] + pos
    tg_x = params["wte"][label_ids] + pos
    xs = jnp.stack([in_x, tg_x], axis=1)                          # (B, 2, T, E)

    mask = input_attention_mask.astype(jnp.int32).reshape(B, 1, T)
    tgt = target_true.astype(jnp.int32).reshape(B, T, 1)

    w = params["packed"]
    weights = (w["attn_w"], w["attn_o"], w["attn_b"],
               w["fc_w"], w["fc_b"], w["pr_w"],
               w["enc_vec"], w["dec_vec"], w["lnf"], w["lm_w"])

    kern = functools.partial(_fwd_kernel, n_layer=L, n_head=H, dh=dh)
    logits, loss_sum, cnt = pl.pallas_call(
        kern,
        out_shape=(jax.ShapeDtypeStruct((B, T, V), jnp.float32),
                   jax.ShapeDtypeStruct((B, 1, 1), jnp.float32),
                   jax.ShapeDtypeStruct((B, 1, 1), jnp.float32)),
        grid=(B,),
        in_specs=[_batch_spec(xs.shape), _batch_spec(mask.shape),
                  _batch_spec(tgt.shape)] + [_const_spec(a) for a in weights],
        out_specs=(_batch_spec((B, T, V)),
                   _batch_spec((B, 1, 1)),
                   _batch_spec((B, 1, 1))),
        compiler_params=pltpu.CompilerParams(dimension_semantics=("parallel",)),
    )(xs, mask, tgt, *weights)

    # batch axis is "parallel" (megacore), so the tiny final reduction/divide
    # stays outside the kernel (accumulating across a parallel axis would race).
    loss = jnp.sum(loss_sum) / jnp.sum(cnt)
    return logits, loss


# ----------------------------- parameter init / packing -----------------------------

def _per_head_qkv(w, b, H, dh):
    """(E, 3E), (3E,)  ->  (H, E, 3*dh), (H, 1, 3*dh) with per-head [q|k|v] order."""
    E = w.shape[0]
    wq = w[:, :E].reshape(E, H, dh)
    wk = w[:, E:2 * E].reshape(E, H, dh)
    wv = w[:, 2 * E:].reshape(E, H, dh)
    w3 = jnp.concatenate([wq, wk, wv], axis=-1).transpose(1, 0, 2)
    bq = b[:E].reshape(H, 1, dh)
    bk = b[E:2 * E].reshape(H, 1, dh)
    bv = b[2 * E:].reshape(H, 1, dh)
    b3 = jnp.concatenate([bq, bk, bv], axis=-1)
    return w3, b3


def _per_head_out(w, H, dh):
    """(E, E) -> (H, dh, E): output-projection rows grouped per head."""
    E = w.shape[1]
    return w.reshape(H, dh, E)


def init_params(key, cfg):
    E, V, L, H = cfg.n_embd, cfg.vocab_size, cfg.n_layer, cfg.n_head
    dh = E // H
    H4 = 4 * E
    std = 0.02
    proj_std = 0.02 / math.sqrt(2 * L)       # embd_proj.weight special init
    keys = iter(jax.random.split(key, 128))

    def nrm(shape, s=std):
        return s * jax.random.normal(next(keys), shape, jnp.float32)

    ones = jnp.ones((E,), jnp.float32)
    zeros = jnp.zeros((E,), jnp.float32)

    def make_attn():
        w3, b3 = _per_head_qkv(nrm((E, 3 * E)), jnp.zeros((3 * E,), jnp.float32), H, dh)
        wo3 = _per_head_out(nrm((E, E)), H, dh)
        return w3, b3, wo3

    wte = nrm((V, E))                         # tied with lm_head.weight
    wpe = nrm((cfg.block_size, E))

    enc_attn, dec_self, dec_cross = [], [], []
    fc_w, fc_b, pr_w = [], [], []
    enc_vec, dec_vec = [], []

    for _ in range(L):                        # encoder layers
        enc_attn.append(make_attn())
        fc_w.append(nrm((E, H4)))
        fc_b.append(jnp.zeros((1, H4), jnp.float32))
        pr_w.append(nrm((H4, E), proj_std))
        enc_vec.append(jnp.stack([ones, zeros, ones, zeros, zeros, zeros]))
    for _ in range(L):                        # decoder layers
        dec_self.append(make_attn())
        dec_cross.append(make_attn())
        fc_w.append(nrm((E, H4)))
        fc_b.append(jnp.zeros((1, H4), jnp.float32))
        pr_w.append(nrm((H4, E), proj_std))
        dec_vec.append(jnp.stack([ones, zeros, ones, zeros, ones, zeros,
                                  zeros, zeros, zeros]))

    attn_all = enc_attn + dec_self + dec_cross          # index: l | L+l | 2L+l
    packed = dict(
        attn_w=jnp.stack([a[0] for a in attn_all]),     # (3L, H, E, 3dh)
        attn_b=jnp.stack([a[1] for a in attn_all]),     # (3L, H, 1, 3dh)
        attn_o=jnp.stack([a[2] for a in attn_all]),     # (3L, H, dh, E)
        fc_w=jnp.stack(fc_w),                           # (2L, E, 4E)  [enc | dec]
        fc_b=jnp.stack(fc_b),                           # (2L, 1, 4E)
        pr_w=jnp.stack(pr_w),                           # (2L, 4E, E)
        enc_vec=jnp.stack(enc_vec),                     # (L, 6, E)
        dec_vec=jnp.stack(dec_vec),                     # (L, 9, E)
        lnf=jnp.stack([ones, zeros, ones, zeros]),      # (4, E) enc/dec final LN
        lm_w=wte.T,                                     # (E, V) tied LM head
    )
    return dict(wte=wte, wpe=wpe, packed=packed)


# ----------------------------- main -----------------------------

if __name__ == "__main__":
    cfg = Config()
    key = jax.random.PRNGKey(0)
    pkey, k1, k2 = jax.random.split(key, 3)
    params = init_params(pkey, cfg)

    B, T = 2, 8
    input_ids = jax.random.randint(k1, (B, T), 1, cfg.vocab_size, dtype=jnp.int32)
    # label_ids >= 2 everywhere, global minimum planted in row 0 so that the
    # reference PyTorch in-place write (flat argmin - 1 as a column index) is
    # well defined.
    label_ids = jax.random.randint(k2, (B, T), 2, cfg.vocab_size, dtype=jnp.int32)
    label_ids = label_ids.at[0, 3].set(1)
    input_attention_mask = jnp.array([[1] * T, [1] * 6 + [0] * 2], dtype=jnp.int32)

    fwd = jax.jit(lambda p, i, m, l: encoder_decoder_forward(p, i, m, l, cfg))
    logits, loss = fwd(params, input_ids, input_attention_mask, label_ids)
    jax.block_until_ready((logits, loss))
    assert logits.shape == (B, T, cfg.vocab_size)
    assert bool(jnp.isfinite(loss))
    print("KERNEL_OK")
</pallas_src>

<mosaic_0001>
module attributes {stable_mosaic.version = 11 : i64} {
  func.func @_fwd_kernel(%arg0: i32, %arg1: memref<1x2x8x32xf32, #tpu.memory_space<vmem>>, %arg2: memref<1x1x8xi32, #tpu.memory_space<vmem>>, %arg3: memref<1x8x1xi32, #tpu.memory_space<vmem>>, %arg4: memref<6x4x32x24xf32, #tpu.memory_space<vmem>>, %arg5: memref<6x4x8x32xf32, #tpu.memory_space<vmem>>, %arg6: memref<6x4x1x24xf32, #tpu.memory_space<vmem>>, %arg7: memref<4x32x128xf32, #tpu.memory_space<vmem>>, %arg8: memref<4x1x128xf32, #tpu.memory_space<vmem>>, %arg9: memref<4x128x32xf32, #tpu.memory_space<vmem>>, %arg10: memref<2x6x32xf32, #tpu.memory_space<vmem>>, %arg11: memref<2x9x32xf32, #tpu.memory_space<vmem>>, %arg12: memref<4x32xf32, #tpu.memory_space<vmem>>, %arg13: memref<32x64xf32, #tpu.memory_space<vmem>>, %arg14: memref<1x8x64xf32, #tpu.memory_space<vmem>>, %arg15: memref<1x1x1xf32, #tpu.memory_space<vmem>>, %arg16: memref<1x1x1xf32, #tpu.memory_space<vmem>>) attributes {dimension_semantics = [#tpu.dimension_semantics<parallel>], iteration_bounds = array<i64: 2>, scalar_prefetch = 0 : i64, scratch_operands = 0 : i64, tpu.core_type = #tpu.core_type<tc>, window_params = [{transform_indices = @transform_0, window_bounds = array<i64: 1, 2, 8, 32>}, {transform_indices = @transform_1, window_bounds = array<i64: 1, 1, 8>}, {transform_indices = @transform_2, window_bounds = array<i64: 1, 8, 1>}, {pipeline_mode = #tpu.pipeline_mode<synchronous>, transform_indices = @transform_3, window_bounds = array<i64: 6, 4, 32, 24>}, {pipeline_mode = #tpu.pipeline_mode<synchronous>, transform_indices = @transform_4, window_bounds = array<i64: 6, 4, 8, 32>}, {pipeline_mode = #tpu.pipeline_mode<synchronous>, transform_indices = @transform_5, window_bounds = array<i64: 6, 4, 1, 24>}, {pipeline_mode = #tpu.pipeline_mode<synchronous>, transform_indices = @transform_6, window_bounds = array<i64: 4, 32, 128>}, {pipeline_mode = #tpu.pipeline_mode<synchronous>, transform_indices = @transform_7, window_bounds = array<i64: 4, 1, 128>}, {pipeline_mode = #tpu.pipeline_mode<synchronous>, transform_indices = @transform_8, window_bounds = array<i64: 4, 128, 32>}, {pipeline_mode = #tpu.pipeline_mode<synchronous>, transform_indices = @transform_9, window_bounds = array<i64: 2, 6, 32>}, {pipeline_mode = #tpu.pipeline_mode<synchronous>, transform_indices = @transform_10, window_bounds = array<i64: 2, 9, 32>}, {pipeline_mode = #tpu.pipeline_mode<synchronous>, transform_indices = @transform_11, window_bounds = array<i64: 4, 32>}, {pipeline_mode = #tpu.pipeline_mode<synchronous>, transform_indices = @transform_12, window_bounds = array<i64: 32, 64>}, {transform_indices = @transform_13, window_bounds = array<i64: 1, 8, 64>}, {transform_indices = @transform_14, window_bounds = array<i64: 1, 1, 1>}, {transform_indices = @transform_15, window_bounds = array<i64: 1, 1, 1>}]} {
    %c0 = arith.constant 0 : index
    %c0_0 = arith.constant 0 : index
    %c0_1 = arith.constant 0 : index
    %c0_2 = arith.constant 0 : index
    %0 = vector.load %arg1[%c0, %c0_0, %c0_1, %c0_2] : memref<1x2x8x32xf32, #tpu.memory_space<vmem>>, vector<1x1x8x32xf32>
    %1 = vector.shape_cast %0 : vector<1x1x8x32xf32> to vector<8x32xf32>
    %c0_3 = arith.constant 0 : index
    %c1 = arith.constant 1 : index
    %c0_4 = arith.constant 0 : index
    %c0_5 = arith.constant 0 : index
    %2 = vector.load %arg1[%c0_3, %c1, %c0_4, %c0_5] : memref<1x2x8x32xf32, #tpu.memory_space<vmem>>, vector<1x1x8x32xf32>
    %3 = vector.shape_cast %2 : vector<1x1x8x32xf32> to vector<8x32xf32>
    %c0_6 = arith.constant 0 : index
    %c0_7 = arith.constant 0 : index
    %c0_8 = arith.constant 0 : index
    %4 = vector.load %arg2[%c0_6, %c0_7, %c0_8] : memref<1x1x8xi32, #tpu.memory_space<vmem>>, vector<1x1x8xi32>
    %5 = vector.shape_cast %4 : vector<1x1x8xi32> to vector<1x8xi32>
    %c0_i32 = arith.constant 0 : i32
    %6 = vector.broadcast %c0_i32 : i32 to vector<1x8xi32>
    %7 = arith.cmpi sgt, %5, %6 : vector<1x8xi32>
    %cst = arith.constant 0.000000e+00 : f32
    %cst_9 = arith.constant -1.000000e+30 : f32
    %8 = vector.broadcast %cst : f32 to vector<1x8xf32>
    %9 = vector.broadcast %cst_9 : f32 to vector<1x8xf32>
    %10 = arith.select %7, %8, %9 : vector<1x8xi1>, vector<1x8xf32>
    %11 = tpu.iota {dimensions = array<i32: 0>} : vector<8x8xi32>
    %12 = tpu.iota {dimensions = array<i32: 1>} : vector<8x8xi32>
    %13 = arith.cmpi sle, %12, %11 : vector<8x8xi32>
    %cst_10 = arith.constant 0.000000e+00 : f32
    %cst_11 = arith.constant -1.000000e+30 : f32
    %14 = vector.broadcast %cst_10 : f32 to vector<8x8xf32>
    %15 = vector.broadcast %cst_11 : f32 to vector<8x8xf32>
    %16 = arith.select %13, %14, %15 : vector<8x8xi1>, vector<8x8xf32>
    %c0_12 = arith.constant 0 : index
    %c0_13 = arith.constant 0 : index
    %c0_14 = arith.constant 0 : index
    %17 = vector.load %arg10[%c0_12, %c0_13, %c0_14] : memref<2x6x32xf32, #tpu.memory_space<vmem>>, vector<1x6x32xf32>
    %18 = vector.shape_cast %17 : vector<1x6x32xf32> to vector<6x32xf32>
    %19 = vector.extract_strided_slice %18 {offsets = [0, 0], sizes = [1, 32], strides = [1, 1]} : vector<6x32xf32> to vector<1x32xf32>
    %20 = vector.extract_strided_slice %18 {offsets = [1, 0], sizes = [1, 32], strides = [1, 1]} : vector<6x32xf32> to vector<1x32xf32>
    %cst_15 = arith.constant dense<0.000000e+00> : vector<8xf32>
    %21 = vector.multi_reduction <add>, %1, %cst_15 [1] : vector<8x32xf32> to vector<8xf32>
    %22 = vector.shape_cast %21 : vector<8xf32> to vector<8x1xf32>
    %cst_16 = arith.constant 3.200000e+01 : f32
    %23 = vector.broadcast %cst_16 : f32 to vector<8x1xf32>
    %24 = arith.divf %22, %23 : vector<8x1xf32>
    %25 = vector.broadcast %24 : vector<8x1xf32> to vector<8x32xf32>
    %26 = arith.subf %1, %25 : vector<8x32xf32>
    %27 = arith.mulf %26, %26 : vector<8x32xf32>
    %cst_17 = arith.constant dense<0.000000e+00> : vector<8xf32>
    %28 = vector.multi_reduction <add>, %27, %cst_17 [1] : vector<8x32xf32> to vector<8xf32>
    %29 = vector.shape_cast %28 : vector<8xf32> to vector<8x1xf32>
    %cst_18 = arith.constant 3.200000e+01 : f32
    %30 = vector.broadcast %cst_18 : f32 to vector<8x1xf32>
    %31 = arith.divf %29, %30 : vector<8x1xf32>
    %32 = vector.broadcast %24 : vector<8x1xf32> to vector<8x32xf32>
    %33 = arith.subf %1, %32 : vector<8x32xf32>
    %cst_19 = arith.constant 9.99999974E-6 : f32
    %34 = vector.broadcast %cst_19 : f32 to vector<8x1xf32>
    %35 = arith.addf %31, %34 : vector<8x1xf32>
    %36 = math.rsqrt %35 : vector<8x1xf32>
    %37 = vector.broadcast %36 : vector<8x1xf32> to vector<8x32xf32>
    %38 = arith.mulf %33, %37 : vector<8x32xf32>
    %39 = vector.broadcast %19 : vector<1x32xf32> to vector<8x32xf32>
    %40 = arith.mulf %38, %39 : vector<8x32xf32>
    %41 = vector.broadcast %20 : vector<1x32xf32> to vector<8x32xf32>
    %42 = arith.addf %40, %41 : vector<8x32xf32>
    %c0_20 = arith.constant 0 : index
    %c0_21 = arith.constant 0 : index
    %c0_22 = arith.constant 0 : index
    %c0_23 = arith.constant 0 : index
    %43 = vector.load %arg4[%c0_20, %c0_21, %c0_22, %c0_23] : memref<6x4x32x24xf32, #tpu.memory_space<vmem>>, vector<1x4x32x24xf32>
    %44 = vector.shape_cast %43 : vector<1x4x32x24xf32> to vector<4x32x24xf32>
    %c0_24 = arith.constant 0 : index
    %c0_25 = arith.constant 0 : index
    %c0_26 = arith.constant 0 : index
    %c0_27 = arith.constant 0 : index
    %45 = vector.load %arg6[%c0_24, %c0_25, %c0_26, %c0_27] : memref<6x4x1x24xf32, #tpu.memory_space<vmem>>, vector<1x4x1x24xf32>
    %46 = vector.shape_cast %45 : vector<1x4x1x24xf32> to vector<4x1x24xf32>
    %c0_28 = arith.constant 0 : index
    %c0_29 = arith.constant 0 : index
    %c0_30 = arith.constant 0 : index
    %c0_31 = arith.constant 0 : index
    %47 = vector.load %arg5[%c0_28, %c0_29, %c0_30, %c0_31] : memref<6x4x8x32xf32, #tpu.memory_space<vmem>>, vector<1x4x8x32xf32>
    %48 = vector.shape_cast %47 : vector<1x4x8x32xf32> to vector<4x8x32xf32>
    %49 = vector.extract_strided_slice %18 {offsets = [4, 0], sizes = [1, 32], strides = [1, 1]} : vector<6x32xf32> to vector<1x32xf32>
    %50 = vector.shape_cast %42 : vector<8x32xf32> to vector<1x8x32xf32>
    %51 = vector.broadcast %50 : vector<1x8x32xf32> to vector<4x8x32xf32>
    %52 = arith.truncf %51 : vector<4x8x32xf32> to vector<4x8x32xbf16>
    %53 = arith.truncf %44 : vector<4x32x24xf32> to vector<4x32x24xbf16>
    "tpu.trace_start"() <{level = 10 : i32, message = "hte,hek->htk"}> : () -> ()
    %cst_32 = arith.constant dense<0.000000e+00> : vector<4x8x24xf32>
    %54 = tpu.matmul %52, %53, %cst_32 {dimension_numbers = #tpu.dot_dimension_numbers<[2], [1], [1], [2], [0, 0, 0, 1, 1, 2], [0], [0]>} : vector<4x8x32xbf16>, vector<4x32x24xbf16>, vector<4x8x24xf32> -> vector<4x8x24xf32>
    "tpu.trace_stop"() : () -> ()
    %55 = vector.broadcast %46 : vector<4x1x24xf32> to vector<4x8x24xf32>
    %56 = arith.addf %54, %55 : vector<4x8x24xf32>
    %57 = vector.extract_strided_slice %56 {offsets = [0, 0, 0], sizes = [4, 8, 8], strides = [1, 1, 1]} : vector<4x8x24xf32> to vector<4x8x8xf32>
    %58 = vector.extract_strided_slice %56 {offsets = [0, 0, 8], sizes = [4, 8, 8], strides = [1, 1, 1]} : vector<4x8x24xf32> to vector<4x8x8xf32>
    %59 = vector.extract_strided_slice %56 {offsets = [0, 0, 16], sizes = [4, 8, 8], strides = [1, 1, 1]} : vector<4x8x24xf32> to vector<4x8x8xf32>
    %60 = arith.truncf %57 : vector<4x8x8xf32> to vector<4x8x8xbf16>
    %61 = arith.truncf %58 : vector<4x8x8xf32> to vector<4x8x8xbf16>
    "tpu.trace_start"() <{level = 10 : i32, message = "hqd,hkd->hqk"}> : () -> ()
    %cst_33 = arith.constant dense<0.000000e+00> : vector<4x8x8xf32>
    %62 = tpu.matmul %60, %61, %cst_33 {dimension_numbers = #tpu.dot_dimension_numbers<[2], [2], [1], [1], [0, 0, 0, 1, 1, 1], [0], [0]>} : vector<4x8x8xbf16>, vector<4x8x8xbf16>, vector<4x8x8xf32> -> vector<4x8x8xf32>
    "tpu.trace_stop"() : () -> ()
    %cst_34 = arith.constant 0.353553385 : f32
    %63 = vector.broadcast %cst_34 : f32 to vector<4x8x8xf32>
    %64 = arith.mulf %62, %63 : vector<4x8x8xf32>
    %65 = vector.shape_cast %10 : vector<1x8xf32> to vector<1x1x8xf32>
    %66 = vector.broadcast %65 : vector<1x1x8xf32> to vector<4x8x8xf32>
    %67 = arith.addf %64, %66 : vector<4x8x8xf32>
    %cst_35 = arith.constant dense<0xFF800000> : vector<4x8xf32>
    %68 = vector.multi_reduction <maximumf>, %67, %cst_35 [2] : vector<4x8x8xf32> to vector<4x8xf32>
    %69 = vector.shape_cast %68 : vector<4x8xf32> to vector<4x8x1xf32>
    %70 = vector.broadcast %69 : vector<4x8x1xf32> to vector<4x8x8xf32>
    %71 = arith.subf %67, %70 : vector<4x8x8xf32>
    %72 = math.exp %71 : vector<4x8x8xf32>
    %cst_36 = arith.constant dense<0.000000e+00> : vector<4x8xf32>
    %73 = vector.multi_reduction <add>, %72, %cst_36 [2] : vector<4x8x8xf32> to vector<4x8xf32>
    %74 = vector.shape_cast %73 : vector<4x8xf32> to vector<4x8x1xf32>
    %75 = tpu.reciprocal %74 {approx = true} : vector<4x8x1xf32> -> vector<4x8x1xf32>
    %76 = vector.broadcast %75 : vector<4x8x1xf32> to vector<4x8x8xf32>
    %77 = arith.mulf %72, %76 : vector<4x8x8xf32>
    %78 = arith.truncf %77 : vector<4x8x8xf32> to vector<4x8x8xbf16>
    %79 = arith.truncf %59 : vector<4x8x8xf32> to vector<4x8x8xbf16>
    "tpu.trace_start"() <{level = 10 : i32, message = "hqk,hkd->hqd"}> : () -> ()
    %cst_37 = arith.constant dense<0.000000e+00> : vector<4x8x8xf32>
    %80 = tpu.matmul %78, %79, %cst_37 {dimension_numbers = #tpu.dot_dimension_numbers<[2], [1], [1], [2], [0, 0, 0, 1, 1, 2], [0], [0]>} : vector<4x8x8xbf16>, vector<4x8x8xbf16>, vector<4x8x8xf32> -> vector<4x8x8xf32>
    "tpu.trace_stop"() : () -> ()
    %81 = arith.truncf %80 : vector<4x8x8xf32> to vector<4x8x8xbf16>
    %82 = arith.truncf %48 : vector<4x8x32xf32> to vector<4x8x32xbf16>
    "tpu.trace_start"() <{level = 10 : i32, message = "htd,hde->hte"}> : () -> ()
    %cst_38 = arith.constant dense<0.000000e+00> : vector<4x8x32xf32>
    %83 = tpu.matmul %81, %82, %cst_38 {dimension_numbers = #tpu.dot_dimension_numbers<[2], [1], [1], [2], [0, 0, 0, 1, 1, 2], [0], [0]>} : vector<4x8x8xbf16>, vector<4x8x32xbf16>, vector<4x8x32xf32> -> vector<4x8x32xf32>
    "tpu.trace_stop"() : () -> ()
    %cst_39 = arith.constant dense<0.000000e+00> : vector<8x32xf32>
    %84 = vector.multi_reduction <add>, %83, %cst_39 [0] : vector<4x8x32xf32> to vector<8x32xf32>
    %85 = vector.broadcast %49 : vector<1x32xf32> to vector<8x32xf32>
    %86 = arith.addf %84, %85 : vector<8x32xf32>
    %87 = arith.addf %1, %86 : vector<8x32xf32>
    %88 = vector.extract_strided_slice %18 {offsets = [2, 0], sizes = [1, 32], strides = [1, 1]} : vector<6x32xf32> to vector<1x32xf32>
    %89 = vector.extract_strided_slice %18 {offsets = [3, 0], sizes = [1, 32], strides = [1, 1]} : vector<6x32xf32> to vector<1x32xf32>
    %cst_40 = arith.constant dense<0.000000e+00> : vector<8xf32>
    %90 = vector.multi_reduction <add>, %87, %cst_40 [1] : vector<8x32xf32> to vector<8xf32>
    %91 = vector.shape_cast %90 : vector<8xf32> to vector<8x1xf32>
    %cst_41 = arith.constant 3.200000e+01 : f32
    %92 = vector.broadcast %cst_41 : f32 to vector<8x1xf32>
    %93 = arith.divf %91, %92 : vector<8x1xf32>
    %94 = vector.broadcast %93 : vector<8x1xf32> to vector<8x32xf32>
    %95 = arith.subf %87, %94 : vector<8x32xf32>
    %96 = arith.mulf %95, %95 : vector<8x32xf32>
    %cst_42 = arith.constant dense<0.000000e+00> : vector<8xf32>
    %97 = vector.multi_reduction <add>, %96, %cst_42 [1] : vector<8x32xf32> to vector<8xf32>
    %98 = vector.shape_cast %97 : vector<8xf32> to vector<8x1xf32>
    %cst_43 = arith.constant 3.200000e+01 : f32
    %99 = vector.broadcast %cst_43 : f32 to vector<8x1xf32>
    %100 = arith.divf %98, %99 : vector<8x1xf32>
    %101 = vector.broadcast %93 : vector<8x1xf32> to vector<8x32xf32>
    %102 = arith.subf %87, %101 : vector<8x32xf32>
    %cst_44 = arith.constant 9.99999974E-6 : f32
    %103 = vector.broadcast %cst_44 : f32 to vector<8x1xf32>
    %104 = arith.addf %100, %103 : vector<8x1xf32>
    %105 = math.rsqrt %104 : vector<8x1xf32>
    %106 = vector.broadcast %105 : vector<8x1xf32> to vector<8x32xf32>
    %107 = arith.mulf %102, %106 : vector<8x32xf32>
    %108 = vector.broadcast %88 : vector<1x32xf32> to vector<8x32xf32>
    %109 = arith.mulf %107, %108 : vector<8x32xf32>
    %110 = vector.broadcast %89 : vector<1x32xf32> to vector<8x32xf32>
    %111 = arith.addf %109, %110 : vector<8x32xf32>
    %c0_45 = arith.constant 0 : index
    %c0_46 = arith.constant 0 : index
    %c0_47 = arith.constant 0 : index
    %112 = vector.load %arg7[%c0_45, %c0_46, %c0_47] : memref<4x32x128xf32, #tpu.memory_space<vmem>>, vector<1x32x128xf32>
    %113 = vector.shape_cast %112 : vector<1x32x128xf32> to vector<32x128xf32>
    %c0_48 = arith.constant 0 : index
    %c0_49 = arith.constant 0 : index
    %c0_50 = arith.constant 0 : index
    %114 = vector.load %arg8[%c0_48, %c0_49, %c0_50] : memref<4x1x128xf32, #tpu.memory_space<vmem>>, vector<1x1x128xf32>
    %115 = vector.shape_cast %114 : vector<1x1x128xf32> to vector<1x128xf32>
    %c0_51 = arith.constant 0 : index
    %c0_52 = arith.constant 0 : index
    %c0_53 = arith.constant 0 : index
    %116 = vector.load %arg9[%c0_51, %c0_52, %c0_53] : memref<4x128x32xf32, #tpu.memory_space<vmem>>, vector<1x128x32xf32>
    %117 = vector.shape_cast %116 : vector<1x128x32xf32> to vector<128x32xf32>
    %118 = vector.extract_strided_slice %18 {offsets = [5, 0], sizes = [1, 32], strides = [1, 1]} : vector<6x32xf32> to vector<1x32xf32>
    %119 = arith.truncf %111 : vector<8x32xf32> to vector<8x32xbf16>
    %120 = arith.truncf %113 : vector<32x128xf32> to vector<32x128xbf16>
    %cst_54 = arith.constant dense<0.000000e+00> : vector<8x128xf32>
    %121 = tpu.matmul %119, %120, %cst_54 {dimension_numbers = #tpu.dot_dimension_numbers<[1], [0], [0], [1], [0, 0, 1, 1], [], []>} : vector<8x32xbf16>, vector<32x128xbf16>, vector<8x128xf32> -> vector<8x128xf32>
    %122 = vector.broadcast %115 : vector<1x128xf32> to vector<8x128xf32>
    %123 = arith.addf %121, %122 : vector<8x128xf32>
    %cst_55 = arith.constant 5.000000e-01 : f32
    %124 = vector.broadcast %cst_55 : f32 to vector<8x128xf32>
    %125 = arith.mulf %124, %123 : vector<8x128xf32>
    %cst_56 = arith.constant 4.471500e-02 : f32
    %126 = vector.broadcast %cst_56 : f32 to vector<8x128xf32>
    %127 = arith.mulf %126, %123 : vector<8x128xf32>
    %128 = arith.mulf %127, %123 : vector<8x128xf32>
    %129 = arith.mulf %128, %123 : vector<8x128xf32>
    %130 = arith.addf %123, %129 : vector<8x128xf32>
    %cst_57 = arith.constant 0.797884583 : f32
    %131 = vector.broadcast %cst_57 : f32 to vector<8x128xf32>
    %132 = arith.mulf %131, %130 : vector<8x128xf32>
    %133 = math.tanh %132 : vector<8x128xf32>
    %cst_58 = arith.constant 1.000000e+00 : f32
    %134 = vector.broadcast %cst_58 : f32 to vector<8x128xf32>
    %135 = arith.addf %134, %133 : vector<8x128xf32>
    %136 = arith.mulf %125, %135 : vector<8x128xf32>
    %137 = arith.truncf %136 : vector<8x128xf32> to vector<8x128xbf16>
    %138 = arith.truncf %117 : vector<128x32xf32> to vector<128x32xbf16>
    %cst_59 = arith.constant dense<0.000000e+00> : vector<8x32xf32>
    %139 = tpu.matmul %137, %138, %cst_59 {dimension_numbers = #tpu.dot_dimension_numbers<[1], [0], [0], [1], [0, 0, 1, 1], [], []>} : vector<8x128xbf16>, vector<128x32xbf16>, vector<8x32xf32> -> vector<8x32xf32>
    %140 = vector.broadcast %118 : vector<1x32xf32> to vector<8x32xf32>
    %141 = arith.addf %139, %140 : vector<8x32xf32>
    %142 = arith.addf %87, %141 : vector<8x32xf32>
    %c1_60 = arith.constant 1 : index
    %c0_61 = arith.constant 0 : index
    %c0_62 = arith.constant 0 : index
    %143 = vector.load %arg10[%c1_60, %c0_61, %c0_62] : memref<2x6x32xf32, #tpu.memory_space<vmem>>, vector<1x6x32xf32>
    %144 = vector.shape_cast %143 : vector<1x6x32xf32> to vector<6x32xf32>
    %145 = vector.extract_strided_slice %144 {offsets = [0, 0], sizes = [1, 32], strides = [1, 1]} : vector<6x32xf32> to vector<1x32xf32>
    %146 = vector.extract_strided_slice %144 {offsets = [1, 0], sizes = [1, 32], strides = [1, 1]} : vector<6x32xf32> to vector<1x32xf32>
    %cst_63 = arith.constant dense<0.000000e+00> : vector<8xf32>
    %147 = vector.multi_reduction <add>, %142, %cst_63 [1] : vector<8x32xf32> to vector<8xf32>
    %148 = vector.shape_cast %147 : vector<8xf32> to vector<8x1xf32>
    %cst_64 = arith.constant 3.200000e+01 : f32
    %149 = vector.broadcast %cst_64 : f32 to vector<8x1xf32>
    %150 = arith.divf %148, %149 : vector<8x1xf32>
    %151 = vector.broadcast %150 : vector<8x1xf32> to vector<8x32xf32>
    %152 = arith.subf %142, %151 : vector<8x32xf32>
    %153 = arith.mulf %152, %152 : vector<8x32xf32>
    %cst_65 = arith.constant dense<0.000000e+00> : vector<8xf32>
    %154 = vector.multi_reduction <add>, %153, %cst_65 [1] : vector<8x32xf32> to vector<8xf32>
    %155 = vector.shape_cast %154 : vector<8xf32> to vector<8x1xf32>
    %cst_66 = arith.constant 3.200000e+01 : f32
    %156 = vector.broadcast %cst_66 : f32 to vector<8x1xf32>
    %157 = arith.divf %155, %156 : vector<8x1xf32>
    %158 = vector.broadcast %150 : vector<8x1xf32> to vector<8x32xf32>
    %159 = arith.subf %142, %158 : vector<8x32xf32>
    %cst_67 = arith.constant 9.99999974E-6 : f32
    %160 = vector.broadcast %cst_67 : f32 to vector<8x1xf32>
    %161 = arith.addf %157, %160 : vector<8x1xf32>
    %162 = math.rsqrt %161 : vector<8x1xf32>
    %163 = vector.broadcast %162 : vector<8x1xf32> to vector<8x32xf32>
    %164 = arith.mulf %159, %163 : vector<8x32xf32>
    %165 = vector.broadcast %145 : vector<1x32xf32> to vector<8x32xf32>
    %166 = arith.mulf %164, %165 : vector<8x32xf32>
    %167 = vector.broadcast %146 : vector<1x32xf32> to vector<8x32xf32>
    %168 = arith.addf %166, %167 : vector<8x32xf32>
    %c1_68 = arith.constant 1 : index
    %c0_69 = arith.constant 0 : index
    %c0_70 = arith.constant 0 : index
    %c0_71 = arith.constant 0 : index
    %169 = vector.load %arg4[%c1_68, %c0_69, %c0_70, %c0_71] : memref<6x4x32x24xf32, #tpu.memory_space<vmem>>, vector<1x4x32x24xf32>
    %170 = vector.shape_cast %169 : vector<1x4x32x24xf32> to vector<4x32x24xf32>
    %c1_72 = arith.constant 1 : index
    %c0_73 = arith.constant 0 : index
    %c0_74 = arith.constant 0 : index
    %c0_75 = arith.constant 0 : index
    %171 = vector.load %arg6[%c1_72, %c0_73, %c0_74, %c0_75] : memref<6x4x1x24xf32, #tpu.memory_space<vmem>>, vector<1x4x1x24xf32>
    %172 = vector.shape_cast %171 : vector<1x4x1x24xf32> to vector<4x1x24xf32>
    %c1_76 = arith.constant 1 : index
    %c0_77 = arith.constant 0 : index
    %c0_78 = arith.constant 0 : index
    %c0_79 = arith.constant 0 : index
    %173 = vector.load %arg5[%c1_76, %c0_77, %c0_78, %c0_79] : memref<6x4x8x32xf32, #tpu.memory_space<vmem>>, vector<1x4x8x32xf32>
    %174 = vector.shape_cast %173 : vector<1x4x8x32xf32> to vector<4x8x32xf32>
    %175 = vector.extract_strided_slice %144 {offsets = [4, 0], sizes = [1, 32], strides = [1, 1]} : vector<6x32xf32> to vector<1x32xf32>
    %176 = vector.shape_cast %168 : vector<8x32xf32> to vector<1x8x32xf32>
    %177 = vector.broadcast %176 : vector<1x8x32xf32> to vector<4x8x32xf32>
    %178 = arith.truncf %177 : vector<4x8x32xf32> to vector<4x8x32xbf16>
    %179 = arith.truncf %170 : vector<4x32x24xf32> to vector<4x32x24xbf16>
    "tpu.trace_start"() <{level = 10 : i32, message = "hte,hek->htk"}> : () -> ()
    %cst_80 = arith.constant dense<0.000000e+00> : vector<4x8x24xf32>
    %180 = tpu.matmul %178, %179, %cst_80 {dimension_numbers = #tpu.dot_dimension_numbers<[2], [1], [1], [2], [0, 0, 0, 1, 1, 2], [0], [0]>} : vector<4x8x32xbf16>, vector<4x32x24xbf16>, vector<4x8x24xf32> -> vector<4x8x24xf32>
    "tpu.trace_stop"() : () -> ()
    %181 = vector.broadcast %172 : vector<4x1x24xf32> to vector<4x8x24xf32>
    %182 = arith.addf %180, %181 : vector<4x8x24xf32>
    %183 = vector.extract_strided_slice %182 {offsets = [0, 0, 0], sizes = [4, 8, 8], strides = [1, 1, 1]} : vector<4x8x24xf32> to vector<4x8x8xf32>
    %184 = vector.extract_strided_slice %182 {offsets = [0, 0, 8], sizes = [4, 8, 8], strides = [1, 1, 1]} : vector<4x8x24xf32> to vector<4x8x8xf32>
    %185 = vector.extract_strided_slice %182 {offsets = [0, 0, 16], sizes = [4, 8, 8], strides = [1, 1, 1]} : vector<4x8x24xf32> to vector<4x8x8xf32>
    %186 = arith.truncf %183 : vector<4x8x8xf32> to vector<4x8x8xbf16>
    %187 = arith.truncf %184 : vector<4x8x8xf32> to vector<4x8x8xbf16>
    "tpu.trace_start"() <{level = 10 : i32, message = "hqd,hkd->hqk"}> : () -> ()
    %cst_81 = arith.constant dense<0.000000e+00> : vector<4x8x8xf32>
    %188 = tpu.matmul %186, %187, %cst_81 {dimension_numbers = #tpu.dot_dimension_numbers<[2], [2], [1], [1], [0, 0, 0, 1, 1, 1], [0], [0]>} : vector<4x8x8xbf16>, vector<4x8x8xbf16>, vector<4x8x8xf32> -> vector<4x8x8xf32>
    "tpu.trace_stop"() : () -> ()
    %cst_82 = arith.constant 0.353553385 : f32
    %189 = vector.broadcast %cst_82 : f32 to vector<4x8x8xf32>
    %190 = arith.mulf %188, %189 : vector<4x8x8xf32>
    %191 = vector.shape_cast %10 : vector<1x8xf32> to vector<1x1x8xf32>
    %192 = vector.broadcast %191 : vector<1x1x8xf32> to vector<4x8x8xf32>
    %193 = arith.addf %190, %192 : vector<4x8x8xf32>
    %cst_83 = arith.constant dense<0xFF800000> : vector<4x8xf32>
    %194 = vector.multi_reduction <maximumf>, %193, %cst_83 [2] : vector<4x8x8xf32> to vector<4x8xf32>
    %195 = vector.shape_cast %194 : vector<4x8xf32> to vector<4x8x1xf32>
    %196 = vector.broadcast %195 : vector<4x8x1xf32> to vector<4x8x8xf32>
    %197 = arith.subf %193, %196 : vector<4x8x8xf32>
    %198 = math.exp %197 : vector<4x8x8xf32>
    %cst_84 = arith.constant dense<0.000000e+00> : vector<4x8xf32>
    %199 = vector.multi_reduction <add>, %198, %cst_84 [2] : vector<4x8x8xf32> to vector<4x8xf32>
    %200 = vector.shape_cast %199 : vector<4x8xf32> to vector<4x8x1xf32>
    %201 = tpu.reciprocal %200 {approx = true} : vector<4x8x1xf32> -> vector<4x8x1xf32>
    %202 = vector.broadcast %201 : vector<4x8x1xf32> to vector<4x8x8xf32>
    %203 = arith.mulf %198, %202 : vector<4x8x8xf32>
    %204 = arith.truncf %203 : vector<4x8x8xf32> to vector<4x8x8xbf16>
    %205 = arith.truncf %185 : vector<4x8x8xf32> to vector<4x8x8xbf16>
    "tpu.trace_start"() <{level = 10 : i32, message = "hqk,hkd->hqd"}> : () -> ()
    %cst_85 = arith.constant dense<0.000000e+00> : vector<4x8x8xf32>
    %206 = tpu.matmul %204, %205, %cst_85 {dimension_numbers = #tpu.dot_dimension_numbers<[2], [1], [1], [2], [0, 0, 0, 1, 1, 2], [0], [0]>} : vector<4x8x8xbf16>, vector<4x8x8xbf16>, vector<4x8x8xf32> -> vector<4x8x8xf32>
    "tpu.trace_stop"() : () -> ()
    %207 = arith.truncf %206 : vector<4x8x8xf32> to vector<4x8x8xbf16>
    %208 = arith.truncf %174 : vector<4x8x32xf32> to vector<4x8x32xbf16>
    "tpu.trace_start"() <{level = 10 : i32, message = "htd,hde->hte"}> : () -> ()
    %cst_86 = arith.constant dense<0.000000e+00> : vector<4x8x32xf32>
    %209 = tpu.matmul %207, %208, %cst_86 {dimension_numbers = #tpu.dot_dimension_numbers<[2], [1], [1], [2], [0, 0, 0, 1, 1, 2], [0], [0]>} : vector<4x8x8xbf16>, vector<4x8x32xbf16>, vector<4x8x32xf32> -> vector<4x8x32xf32>
    "tpu.trace_stop"() : () -> ()
    %cst_87 = arith.constant dense<0.000000e+00> : vector<8x32xf32>
    %210 = vector.multi_reduction <add>, %209, %cst_87 [0] : vector<4x8x32xf32> to vector<8x32xf32>
    %211 = vector.broadcast %175 : vector<1x32xf32> to vector<8x32xf32>
    %212 = arith.addf %210, %211 : vector<8x32xf32>
    %213 = arith.addf %142, %212 : vector<8x32xf32>
    %214 = vector.extract_strided_slice %144 {offsets = [2, 0], sizes = [1, 32], strides = [1, 1]} : vector<6x32xf32> to vector<1x32xf32>
    %215 = vector.extract_strided_slice %144 {offsets = [3, 0], sizes = [1, 32], strides = [1, 1]} : vector<6x32xf32> to vector<1x32xf32>
    %cst_88 = arith.constant dense<0.000000e+00> : vector<8xf32>
    %216 = vector.multi_reduction <add>, %213, %cst_88 [1] : vector<8x32xf32> to vector<8xf32>
    %217 = vector.shape_cast %216 : vector<8xf32> to vector<8x1xf32>
    %cst_89 = arith.constant 3.200000e+01 : f32
    %218 = vector.broadcast %cst_89 : f32 to vector<8x1xf32>
    %219 = arith.divf %217, %218 : vector<8x1xf32>
    %220 = vector.broadcast %219 : vector<8x1xf32> to vector<8x32xf32>
    %221 = arith.subf %213, %220 : vector<8x32xf32>
    %222 = arith.mulf %221, %221 : vector<8x32xf32>
    %cst_90 = arith.constant dense<0.000000e+00> : vector<8xf32>
    %223 = vector.multi_reduction <add>, %222, %cst_90 [1] : vector<8x32xf32> to vector<8xf32>
    %224 = vector.shape_cast %223 : vector<8xf32> to vector<8x1xf32>
    %cst_91 = arith.constant 3.200000e+01 : f32
    %225 = vector.broadcast %cst_91 : f32 to vector<8x1xf32>
    %226 = arith.divf %224, %225 : vector<8x1xf32>
    %227 = vector.broadcast %219 : vector<8x1xf32> to vector<8x32xf32>
    %228 = arith.subf %213, %227 : vector<8x32xf32>
    %cst_92 = arith.constant 9.99999974E-6 : f32
    %229 = vector.broadcast %cst_92 : f32 to vector<8x1xf32>
    %230 = arith.addf %226, %229 : vector<8x1xf32>
    %231 = math.rsqrt %230 : vector<8x1xf32>
    %232 = vector.broadcast %231 : vector<8x1xf32> to vector<8x32xf32>
    %233 = arith.mulf %228, %232 : vector<8x32xf32>
    %234 = vector.broadcast %214 : vector<1x32xf32> to vector<8x32xf32>
    %235 = arith.mulf %233, %234 : vector<8x32xf32>
    %236 = vector.broadcast %215 : vector<1x32xf32> to vector<8x32xf32>
    %237 = arith.addf %235, %236 : vector<8x32xf32>
    %c1_93 = arith.constant 1 : index
    %c0_94 = arith.constant 0 : index
    %c0_95 = arith.constant 0 : index
    %238 = vector.load %arg7[%c1_93, %c0_94, %c0_95] : memref<4x32x128xf32, #tpu.memory_space<vmem>>, vector<1x32x128xf32>
    %239 = vector.shape_cast %238 : vector<1x32x128xf32> to vector<32x128xf32>
    %c1_96 = arith.constant 1 : index
    %c0_97 = arith.constant 0 : index
    %c0_98 = arith.constant 0 : index
    %240 = vector.load %arg8[%c1_96, %c0_97, %c0_98] : memref<4x1x128xf32, #tpu.memory_space<vmem>>, vector<1x1x128xf32>
    %241 = vector.shape_cast %240 : vector<1x1x128xf32> to vector<1x128xf32>
    %c1_99 = arith.constant 1 : index
    %c0_100 = arith.constant 0 : index
    %c0_101 = arith.constant 0 : index
    %242 = vector.load %arg9[%c1_99, %c0_100, %c0_101] : memref<4x128x32xf32, #tpu.memory_space<vmem>>, vector<1x128x32xf32>
    %243 = vector.shape_cast %242 : vector<1x128x32xf32> to vector<128x32xf32>
    %244 = vector.extract_strided_slice %144 {offsets = [5, 0], sizes = [1, 32], strides = [1, 1]} : vector<6x32xf32> to vector<1x32xf32>
    %245 = arith.truncf %237 : vector<8x32xf32> to vector<8x32xbf16>
    %246 = arith.truncf %239 : vector<32x128xf32> to vector<32x128xbf16>
    %cst_102 = arith.constant dense<0.000000e+00> : vector<8x128xf32>
    %247 = tpu.matmul %245, %246, %cst_102 {dimension_numbers = #tpu.dot_dimension_numbers<[1], [0], [0], [1], [0, 0, 1, 1], [], []>} : vector<8x32xbf16>, vector<32x128xbf16>, vector<8x128xf32> -> vector<8x128xf32>
    %248 = vector.broadcast %241 : vector<1x128xf32> to vector<8x128xf32>
    %249 = arith.addf %247, %248 : vector<8x128xf32>
    %cst_103 = arith.constant 5.000000e-01 : f32
    %250 = vector.broadcast %cst_103 : f32 to vector<8x128xf32>
    %251 = arith.mulf %250, %249 : vector<8x128xf32>
    %cst_104 = arith.constant 4.471500e-02 : f32
    %252 = vector.broadcast %cst_104 : f32 to vector<8x128xf32>
    %253 = arith.mulf %252, %249 : vector<8x128xf32>
    %254 = arith.mulf %253, %249 : vector<8x128xf32>
    %255 = arith.mulf %254, %249 : vector<8x128xf32>
    %256 = arith.addf %249, %255 : vector<8x128xf32>
    %cst_105 = arith.constant 0.797884583 : f32
    %257 = vector.broadcast %cst_105 : f32 to vector<8x128xf32>
    %258 = arith.mulf %257, %256 : vector<8x128xf32>
    %259 = math.tanh %258 : vector<8x128xf32>
    %cst_106 = arith.constant 1.000000e+00 : f32
    %260 = vector.broadcast %cst_106 : f32 to vector<8x128xf32>
    %261 = arith.addf %260, %259 : vector<8x128xf32>
    %262 = arith.mulf %251, %261 : vector<8x128xf32>
    %263 = arith.truncf %262 : vector<8x128xf32> to vector<8x128xbf16>
    %264 = arith.truncf %243 : vector<128x32xf32> to vector<128x32xbf16>
    %cst_107 = arith.constant dense<0.000000e+00> : vector<8x32xf32>
    %265 = tpu.matmul %263, %264, %cst_107 {dimension_numbers = #tpu.dot_dimension_numbers<[1], [0], [0], [1], [0, 0, 1, 1], [], []>} : vector<8x128xbf16>, vector<128x32xbf16>, vector<8x32xf32> -> vector<8x32xf32>
    %266 = vector.broadcast %244 : vector<1x32xf32> to vector<8x32xf32>
    %267 = arith.addf %265, %266 : vector<8x32xf32>
    %268 = arith.addf %213, %267 : vector<8x32xf32>
    %c0_108 = arith.constant 0 : index
    %c0_109 = arith.constant 0 : index
    %269 = vector.load %arg12[%c0_108, %c0_109] : memref<4x32xf32, #tpu.memory_space<vmem>>, vector<1x32xf32>
    %c1_110 = arith.constant 1 : index
    %c0_111 = arith.constant 0 : index
    %270 = vector.load %arg12[%c1_110, %c0_111] : memref<4x32xf32, #tpu.memory_space<vmem>>, vector<1x32xf32>
    %cst_112 = arith.constant dense<0.000000e+00> : vector<8xf32>
    %271 = vector.multi_reduction <add>, %268, %cst_112 [1] : vector<8x32xf32> to vector<8xf32>
    %272 = vector.shape_cast %271 : vector<8xf32> to vector<8x1xf32>
    %cst_113 = arith.constant 3.200000e+01 : f32
    %273 = vector.broadcast %cst_113 : f32 to vector<8x1xf32>
    %274 = arith.divf %272, %273 : vector<8x1xf32>
    %275 = vector.broadcast %274 : vector<8x1xf32> to vector<8x32xf32>
    %276 = arith.subf %268, %275 : vector<8x32xf32>
    %277 = arith.mulf %276, %276 : vector<8x32xf32>
    %cst_114 = arith.constant dense<0.000000e+00> : vector<8xf32>
    %278 = vector.multi_reduction <add>, %277, %cst_114 [1] : vector<8x32xf32> to vector<8xf32>
    %279 = vector.shape_cast %278 : vector<8xf32> to vector<8x1xf32>
    %cst_115 = arith.constant 3.200000e+01 : f32
    %280 = vector.broadcast %cst_115 : f32 to vector<8x1xf32>
    %281 = arith.divf %279, %280 : vector<8x1xf32>
    %282 = vector.broadcast %274 : vector<8x1xf32> to vector<8x32xf32>
    %283 = arith.subf %268, %282 : vector<8x32xf32>
    %cst_116 = arith.constant 9.99999974E-6 : f32
    %284 = vector.broadcast %cst_116 : f32 to vector<8x1xf32>
    %285 = arith.addf %281, %284 : vector<8x1xf32>
    %286 = math.rsqrt %285 : vector<8x1xf32>
    %287 = vector.broadcast %286 : vector<8x1xf32> to vector<8x32xf32>
    %288 = arith.mulf %283, %287 : vector<8x32xf32>
    %289 = vector.broadcast %269 : vector<1x32xf32> to vector<8x32xf32>
    %290 = arith.mulf %288, %289 : vector<8x32xf32>
    %291 = vector.broadcast %270 : vector<1x32xf32> to vector<8x32xf32>
    %292 = arith.addf %290, %291 : vector<8x32xf32>
    %c0_117 = arith.constant 0 : index
    %c0_118 = arith.constant 0 : index
    %c0_119 = arith.constant 0 : index
    %293 = vector.load %arg11[%c0_117, %c0_118, %c0_119] : memref<2x9x32xf32, #tpu.memory_space<vmem>>, vector<1x9x32xf32>
    %294 = vector.shape_cast %293 : vector<1x9x32xf32> to vector<9x32xf32>
    %295 = vector.extract_strided_slice %294 {offsets = [0, 0], sizes = [1, 32], strides = [1, 1]} : vector<9x32xf32> to vector<1x32xf32>
    %296 = vector.extract_strided_slice %294 {offsets = [1, 0], sizes = [1, 32], strides = [1, 1]} : vector<9x32xf32> to vector<1x32xf32>
    %cst_120 = arith.constant dense<0.000000e+00> : vector<8xf32>
    %297 = vector.multi_reduction <add>, %3, %cst_120 [1] : vector<8x32xf32> to vector<8xf32>
    %298 = vector.shape_cast %297 : vector<8xf32> to vector<8x1xf32>
    %cst_121 = arith.constant 3.200000e+01 : f32
    %299 = vector.broadcast %cst_121 : f32 to vector<8x1xf32>
    %300 = arith.divf %298, %299 : vector<8x1xf32>
    %301 = vector.broadcast %300 : vector<8x1xf32> to vector<8x32xf32>
    %302 = arith.subf %3, %301 : vector<8x32xf32>
    %303 = arith.mulf %302, %302 : vector<8x32xf32>
    %cst_122 = arith.constant dense<0.000000e+00> : vector<8xf32>
    %304 = vector.multi_reduction <add>, %303, %cst_122 [1] : vector<8x32xf32> to vector<8xf32>
    %305 = vector.shape_cast %304 : vector<8xf32> to vector<8x1xf32>
    %cst_123 = arith.constant 3.200000e+01 : f32
    %306 = vector.broadcast %cst_123 : f32 to vector<8x1xf32>
    %307 = arith.divf %305, %306 : vector<8x1xf32>
    %308 = vector.broadcast %300 : vector<8x1xf32> to vector<8x32xf32>
    %309 = arith.subf %3, %308 : vector<8x32xf32>
    %cst_124 = arith.constant 9.99999974E-6 : f32
    %310 = vector.broadcast %cst_124 : f32 to vector<8x1xf32>
    %311 = arith.addf %307, %310 : vector<8x1xf32>
    %312 = math.rsqrt %311 : vector<8x1xf32>
    %313 = vector.broadcast %312 : vector<8x1xf32> to vector<8x32xf32>
    %314 = arith.mulf %309, %313 : vector<8x32xf32>
    %315 = vector.broadcast %295 : vector<1x32xf32> to vector<8x32xf32>
    %316 = arith.mulf %314, %315 : vector<8x32xf32>
    %317 = vector.broadcast %296 : vector<1x32xf32> to vector<8x32xf32>
    %318 = arith.addf %316, %317 : vector<8x32xf32>
    %c2 = arith.constant 2 : index
    %c0_125 = arith.constant 0 : index
    %c0_126 = arith.constant 0 : index
    %c0_127 = arith.constant 0 : index
    %319 = vector.load %arg4[%c2, %c0_125, %c0_126, %c0_127] : memref<6x4x32x24xf32, #tpu.memory_space<vmem>>, vector<1x4x32x24xf32>
    %320 = vector.shape_cast %319 : vector<1x4x32x24xf32> to vector<4x32x24xf32>
    %c2_128 = arith.constant 2 : index
    %c0_129 = arith.constant 0 : index
    %c0_130 = arith.constant 0 : index
    %c0_131 = arith.constant 0 : index
    %321 = vector.load %arg6[%c2_128, %c0_129, %c0_130, %c0_131] : memref<6x4x1x24xf32, #tpu.memory_space<vmem>>, vector<1x4x1x24xf32>
    %322 = vector.shape_cast %321 : vector<1x4x1x24xf32> to vector<4x1x24xf32>
    %c2_132 = arith.constant 2 : index
    %c0_133 = arith.constant 0 : index
    %c0_134 = arith.constant 0 : index
    %c0_135 = arith.constant 0 : index
    %323 = vector.load %arg5[%c2_132, %c0_133, %c0_134, %c0_135] : memref<6x4x8x32xf32, #tpu.memory_space<vmem>>, vector<1x4x8x32xf32>
    %324 = vector.shape_cast %323 : vector<1x4x8x32xf32> to vector<4x8x32xf32>
    %325 = vector.extract_strided_slice %294 {offsets = [6, 0], sizes = [1, 32], strides = [1, 1]} : vector<9x32xf32> to vector<1x32xf32>
    %326 = vector.shape_cast %318 : vector<8x32xf32> to vector<1x8x32xf32>
    %327 = vector.broadcast %326 : vector<1x8x32xf32> to vector<4x8x32xf32>
    %328 = arith.truncf %327 : vector<4x8x32xf32> to vector<4x8x32xbf16>
    %329 = arith.truncf %320 : vector<4x32x24xf32> to vector<4x32x24xbf16>
    "tpu.trace_start"() <{level = 10 : i32, message = "hte,hek->htk"}> : () -> ()
    %cst_136 = arith.constant dense<0.000000e+00> : vector<4x8x24xf32>
    %330 = tpu.matmul %328, %329, %cst_136 {dimension_numbers = #tpu.dot_dimension_numbers<[2], [1], [1], [2], [0, 0, 0, 1, 1, 2], [0], [0]>} : vector<4x8x32xbf16>, vector<4x32x24xbf16>, vector<4x8x24xf32> -> vector<4x8x24xf32>
    "tpu.trace_stop"() : () -> ()
    %331 = vector.broadcast %322 : vector<4x1x24xf32> to vector<4x8x24xf32>
    %332 = arith.addf %330, %331 : vector<4x8x24xf32>
    %333 = vector.extract_strided_slice %332 {offsets = [0, 0, 0], sizes = [4, 8, 8], strides = [1, 1, 1]} : vector<4x8x24xf32> to vector<4x8x8xf32>
    %334 = vector.extract_strided_slice %332 {offsets = [0, 0, 8], sizes = [4, 8, 8], strides = [1, 1, 1]} : vector<4x8x24xf32> to vector<4x8x8xf32>
    %335 = vector.extract_strided_slice %332 {offsets = [0, 0, 16], sizes = [4, 8, 8], strides = [1, 1, 1]} : vector<4x8x24xf32> to vector<4x8x8xf32>
    %336 = arith.truncf %333 : vector<4x8x8xf32> to vector<4x8x8xbf16>
    %337 = arith.truncf %334 : vector<4x8x8xf32> to vector<4x8x8xbf16>
    "tpu.trace_start"() <{level = 10 : i32, message = "hqd,hkd->hqk"}> : () -> ()
    %cst_137 = arith.constant dense<0.000000e+00> : vector<4x8x8xf32>
    %338 = tpu.matmul %336, %337, %cst_137 {dimension_numbers = #tpu.dot_dimension_numbers<[2], [2], [1], [1], [0, 0, 0, 1, 1, 1], [0], [0]>} : vector<4x8x8xbf16>, vector<4x8x8xbf16>, vector<4x8x8xf32> -> vector<4x8x8xf32>
    "tpu.trace_stop"() : () -> ()
    %cst_138 = arith.constant 0.353553385 : f32
    %339 = vector.broadcast %cst_138 : f32 to vector<4x8x8xf32>
    %340 = arith.mulf %338, %339 : vector<4x8x8xf32>
    %341 = vector.shape_cast %16 : vector<8x8xf32> to vector<1x8x8xf32>
    %342 = vector.broadcast %341 : vector<1x8x8xf32> to vector<4x8x8xf32>
    %343 = arith.addf %340, %342 : vector<4x8x8xf32>
    %cst_139 = arith.constant dense<0xFF800000> : vector<4x8xf32>
    %344 = vector.multi_reduction <maximumf>, %343, %cst_139 [2] : vector<4x8x8xf32> to vector<4x8xf32>
    %345 = vector.shape_cast %344 : vector<4x8xf32> to vector<4x8x1xf32>
    %346 = vector.broadcast %345 : vector<4x8x1xf32> to vector<4x8x8xf32>
    %347 = arith.subf %343, %346 : vector<4x8x8xf32>
    %348 = math.exp %347 : vector<4x8x8xf32>
    %cst_140 = arith.constant dense<0.000000e+00> : vector<4x8xf32>
    %349 = vector.multi_reduction <add>, %348, %cst_140 [2] : vector<4x8x8xf32> to vector<4x8xf32>
    %350 = vector.shape_cast %349 : vector<4x8xf32> to vector<4x8x1xf32>
    %351 = tpu.reciprocal %350 {approx = true} : vector<4x8x1xf32> -> vector<4x8x1xf32>
    %352 = vector.broadcast %351 : vector<4x8x1xf32> to vector<4x8x8xf32>
    %353 = arith.mulf %348, %352 : vector<4x8x8xf32>
    %354 = arith.truncf %353 : vector<4x8x8xf32> to vector<4x8x8xbf16>
    %355 = arith.truncf %335 : vector<4x8x8xf32> to vector<4x8x8xbf16>
    "tpu.trace_start"() <{level = 10 : i32, message = "hqk,hkd->hqd"}> : () -> ()
    %cst_141 = arith.constant dense<0.000000e+00> : vector<4x8x8xf32>
    %356 = tpu.matmul %354, %355, %cst_141 {dimension_numbers = #tpu.dot_dimension_numbers<[2], [1], [1], [2], [0, 0, 0, 1, 1, 2], [0], [0]>} : vector<4x8x8xbf16>, vector<4x8x8xbf16>, vector<4x8x8xf32> -> vector<4x8x8xf32>
    "tpu.trace_stop"() : () -> ()
    %357 = arith.truncf %356 : vector<4x8x8xf32> to vector<4x8x8xbf16>
    %358 = arith.truncf %324 : vector<4x8x32xf32> to vector<4x8x32xbf16>
    "tpu.trace_start"() <{level = 10 : i32, message = "htd,hde->hte"}> : () -> ()
    %cst_142 = arith.constant dense<0.000000e+00> : vector<4x8x32xf32>
    %359 = tpu.matmul %357, %358, %cst_142 {dimension_numbers = #tpu.dot_dimension_numbers<[2], [1], [1], [2], [0, 0, 0, 1, 1, 2], [0], [0]>} : vector<4x8x8xbf16>, vector<4x8x32xbf16>, vector<4x8x32xf32> -> vector<4x8x32xf32>
    "tpu.trace_stop"() : () -> ()
    %cst_143 = arith.constant dense<0.000000e+00> : vector<8x32xf32>
    %360 = vector.multi_reduction <add>, %359, %cst_143 [0] : vector<4x8x32xf32> to vector<8x32xf32>
    %361 = vector.broadcast %325 : vector<1x32xf32> to vector<8x32xf32>
    %362 = arith.addf %360, %361 : vector<8x32xf32>
    %363 = arith.addf %3, %362 : vector<8x32xf32>
    %364 = vector.extract_strided_slice %294 {offsets = [2, 0], sizes = [1, 32], strides = [1, 1]} : vector<9x32xf32> to vector<1x32xf32>
    %365 = vector.extract_strided_slice %294 {offsets = [3, 0], sizes = [1, 32], strides = [1, 1]} : vector<9x32xf32> to vector<1x32xf32>
    %cst_144 = arith.constant dense<0.000000e+00> : vector<8xf32>
    %366 = vector.multi_reduction <add>, %363, %cst_144 [1] : vector<8x32xf32> to vector<8xf32>
    %367 = vector.shape_cast %366 : vector<8xf32> to vector<8x1xf32>
    %cst_145 = arith.constant 3.200000e+01 : f32
    %368 = vector.broadcast %cst_145 : f32 to vector<8x1xf32>
    %369 = arith.divf %367, %368 : vector<8x1xf32>
    %370 = vector.broadcast %369 : vector<8x1xf32> to vector<8x32xf32>
    %371 = arith.subf %363, %370 : vector<8x32xf32>
    %372 = arith.mulf %371, %371 : vector<8x32xf32>
    %cst_146 = arith.constant dense<0.000000e+00> : vector<8xf32>
    %373 = vector.multi_reduction <add>, %372, %cst_146 [1] : vector<8x32xf32> to vector<8xf32>
    %374 = vector.shape_cast %373 : vector<8xf32> to vector<8x1xf32>
    %cst_147 = arith.constant 3.200000e+01 : f32
    %375 = vector.broadcast %cst_147 : f32 to vector<8x1xf32>
    %376 = arith.divf %374, %375 : vector<8x1xf32>
    %377 = vector.broadcast %369 : vector<8x1xf32> to vector<8x32xf32>
    %378 = arith.subf %363, %377 : vector<8x32xf32>
    %cst_148 = arith.constant 9.99999974E-6 : f32
    %379 = vector.broadcast %cst_148 : f32 to vector<8x1xf32>
    %380 = arith.addf %376, %379 : vector<8x1xf32>
    %381 = math.rsqrt %380 : vector<8x1xf32>
    %382 = vector.broadcast %381 : vector<8x1xf32> to vector<8x32xf32>
    %383 = arith.mulf %378, %382 : vector<8x32xf32>
    %384 = vector.broadcast %364 : vector<1x32xf32> to vector<8x32xf32>
    %385 = arith.mulf %383, %384 : vector<8x32xf32>
    %386 = vector.broadcast %365 : vector<1x32xf32> to vector<8x32xf32>
    %387 = arith.addf %385, %386 : vector<8x32xf32>
    %c4 = arith.constant 4 : index
    %c0_149 = arith.constant 0 : index
    %c0_150 = arith.constant 0 : index
    %c0_151 = arith.constant 0 : index
    %388 = vector.load %arg4[%c4, %c0_149, %c0_150, %c0_151] : memref<6x4x32x24xf32, #tpu.memory_space<vmem>>, vector<1x4x32x24xf32>
    %389 = vector.shape_cast %388 : vector<1x4x32x24xf32> to vector<4x32x24xf32>
    %c4_152 = arith.constant 4 : index
    %c0_153 = arith.constant 0 : index
    %c0_154 = arith.constant 0 : index
    %c0_155 = arith.constant 0 : index
    %390 = vector.load %arg6[%c4_152, %c0_153, %c0_154, %c0_155] : memref<6x4x1x24xf32, #tpu.memory_space<vmem>>, vector<1x4x1x24xf32>
    %391 = vector.shape_cast %390 : vector<1x4x1x24xf32> to vector<4x1x24xf32>
    %c4_156 = arith.constant 4 : index
    %c0_157 = arith.constant 0 : index
    %c0_158 = arith.constant 0 : index
    %c0_159 = arith.constant 0 : index
    %392 = vector.load %arg5[%c4_156, %c0_157, %c0_158, %c0_159] : memref<6x4x8x32xf32, #tpu.memory_space<vmem>>, vector<1x4x8x32xf32>
    %393 = vector.shape_cast %392 : vector<1x4x8x32xf32> to vector<4x8x32xf32>
    %394 = vector.extract_strided_slice %294 {offsets = [7, 0], sizes = [1, 32], strides = [1, 1]} : vector<9x32xf32> to vector<1x32xf32>
    %395 = vector.shape_cast %387 : vector<8x32xf32> to vector<1x8x32xf32>
    %396 = vector.broadcast %395 : vector<1x8x32xf32> to vector<4x8x32xf32>
    %397 = vector.shape_cast %292 : vector<8x32xf32> to vector<1x8x32xf32>
    %398 = vector.broadcast %397 : vector<1x8x32xf32> to vector<4x8x32xf32>
    %399 = arith.truncf %396 : vector<4x8x32xf32> to vector<4x8x32xbf16>
    %400 = vector.extract_strided_slice %389 {offsets = [0, 0, 0], sizes = [4, 32, 8], strides = [1, 1, 1]} : vector<4x32x24xf32> to vector<4x32x8xf32>
    %401 = arith.truncf %400 : vector<4x32x8xf32> to vector<4x32x8xbf16>
    "tpu.trace_start"() <{level = 10 : i32, message = "hte,hed->htd"}> : () -> ()
    %cst_160 = arith.constant dense<0.000000e+00> : vector<4x8x8xf32>
    %402 = tpu.matmul %399, %401, %cst_160 {dimension_numbers = #tpu.dot_dimension_numbers<[2], [1], [1], [2], [0, 0, 0, 1, 1, 2], [0], [0]>} : vector<4x8x32xbf16>, vector<4x32x8xbf16>, vector<4x8x8xf32> -> vector<4x8x8xf32>
    "tpu.trace_stop"() : () -> ()
    %403 = vector.extract_strided_slice %391 {offsets = [0, 0, 0], sizes = [4, 1, 8], strides = [1, 1, 1]} : vector<4x1x24xf32> to vector<4x1x8xf32>
    %404 = vector.broadcast %403 : vector<4x1x8xf32> to vector<4x8x8xf32>
    %405 = arith.addf %402, %404 : vector<4x8x8xf32>
    %406 = arith.truncf %398 : vector<4x8x32xf32> to vector<4x8x32xbf16>
    %407 = vector.extract_strided_slice %389 {offsets = [0, 0, 8], sizes = [4, 32, 16], strides = [1, 1, 1]} : vector<4x32x24xf32> to vector<4x32x16xf32>
    %408 = arith.truncf %407 : vector<4x32x16xf32> to vector<4x32x16xbf16>
    "tpu.trace_start"() <{level = 10 : i32, message = "hse,hek->hsk"}> : () -> ()
    %cst_161 = arith.constant dense<0.000000e+00> : vector<4x8x16xf32>
    %409 = tpu.matmul %406, %408, %cst_161 {dimension_numbers = #tpu.dot_dimension_numbers<[2], [1], [1], [2], [0, 0, 0, 1, 1, 2], [0], [0]>} : vector<4x8x32xbf16>, vector<4x32x16xbf16>, vector<4x8x16xf32> -> vector<4x8x16xf32>
    "tpu.trace_stop"() : () -> ()
    %410 = vector.extract_strided_slice %391 {offsets = [0, 0, 8], sizes = [4, 1, 16], strides = [1, 1, 1]} : vector<4x1x24xf32> to vector<4x1x16xf32>
    %411 = vector.broadcast %410 : vector<4x1x16xf32> to vector<4x8x16xf32>
    %412 = arith.addf %409, %411 : vector<4x8x16xf32>
    %413 = vector.extract_strided_slice %412 {offsets = [0, 0, 0], sizes = [4, 8, 8], strides = [1, 1, 1]} : vector<4x8x16xf32> to vector<4x8x8xf32>
    %414 = vector.extract_strided_slice %412 {offsets = [0, 0, 8], sizes = [4, 8, 8], strides = [1, 1, 1]} : vector<4x8x16xf32> to vector<4x8x8xf32>
    %415 = arith.truncf %405 : vector<4x8x8xf32> to vector<4x8x8xbf16>
    %416 = arith.truncf %413 : vector<4x8x8xf32> to vector<4x8x8xbf16>
    "tpu.trace_start"() <{level = 10 : i32, message = "hqd,hkd->hqk"}> : () -> ()
    %cst_162 = arith.constant dense<0.000000e+00> : vector<4x8x8xf32>
    %417 = tpu.matmul %415, %416, %cst_162 {dimension_numbers = #tpu.dot_dimension_numbers<[2], [2], [1], [1], [0, 0, 0, 1, 1, 1], [0], [0]>} : vector<4x8x8xbf16>, vector<4x8x8xbf16>, vector<4x8x8xf32> -> vector<4x8x8xf32>
    "tpu.trace_stop"() : () -> ()
    %cst_163 = arith.constant 0.353553385 : f32
    %418 = vector.broadcast %cst_163 : f32 to vector<4x8x8xf32>
    %419 = arith.mulf %417, %418 : vector<4x8x8xf32>
    %cst_164 = arith.constant dense<0xFF800000> : vector<4x8xf32>
    %420 = vector.multi_reduction <maximumf>, %419, %cst_164 [2] : vector<4x8x8xf32> to vector<4x8xf32>
    %421 = vector.shape_cast %420 : vector<4x8xf32> to vector<4x8x1xf32>
    %422 = vector.broadcast %421 : vector<4x8x1xf32> to vector<4x8x8xf32>
    %423 = arith.subf %419, %422 : vector<4x8x8xf32>
    %424 = math.exp %423 : vector<4x8x8xf32>
    %cst_165 = arith.constant dense<0.000000e+00> : vector<4x8xf32>
    %425 = vector.multi_reduction <add>, %424, %cst_165 [2] : vector<4x8x8xf32> to vector<4x8xf32>
    %426 = vector.shape_cast %425 : vector<4x8xf32> to vector<4x8x1xf32>
    %427 = tpu.reciprocal %426 {approx = true} : vector<4x8x1xf32> -> vector<4x8x1xf32>
    %428 = vector.broadcast %427 : vector<4x8x1xf32> to vector<4x8x8xf32>
    %429 = arith.mulf %424, %428 : vector<4x8x8xf32>
    %430 = arith.truncf %429 : vector<4x8x8xf32> to vector<4x8x8xbf16>
    %431 = arith.truncf %414 : vector<4x8x8xf32> to vector<4x8x8xbf16>
    "tpu.trace_start"() <{level = 10 : i32, message = "hqk,hkd->hqd"}> : () -> ()
    %cst_166 = arith.constant dense<0.000000e+00> : vector<4x8x8xf32>
    %432 = tpu.matmul %430, %431, %cst_166 {dimension_numbers = #tpu.dot_dimension_numbers<[2], [1], [1], [2], [0, 0, 0, 1, 1, 2], [0], [0]>} : vector<4x8x8xbf16>, vector<4x8x8xbf16>, vector<4x8x8xf32> -> vector<4x8x8xf32>
    "tpu.trace_stop"() : () -> ()
    %433 = arith.truncf %432 : vector<4x8x8xf32> to vector<4x8x8xbf16>
    %434 = arith.truncf %393 : vector<4x8x32xf32> to vector<4x8x32xbf16>
    "tpu.trace_start"() <{level = 10 : i32, message = "htd,hde->hte"}> : () -> ()
    %cst_167 = arith.constant dense<0.000000e+00> : vector<4x8x32xf32>
    %435 = tpu.matmul %433, %434, %cst_167 {dimension_numbers = #tpu.dot_dimension_numbers<[2], [1], [1], [2], [0, 0, 0, 1, 1, 2], [0], [0]>} : vector<4x8x8xbf16>, vector<4x8x32xbf16>, vector<4x8x32xf32> -> vector<4x8x32xf32>
    "tpu.trace_stop"() : () -> ()
    %cst_168 = arith.constant dense<0.000000e+00> : vector<8x32xf32>
    %436 = vector.multi_reduction <add>, %435, %cst_168 [0] : vector<4x8x32xf32> to vector<8x32xf32>
    %437 = vector.broadcast %394 : vector<1x32xf32> to vector<8x32xf32>
    %438 = arith.addf %436, %437 : vector<8x32xf32>
    %439 = arith.addf %363, %438 : vector<8x32xf32>
    %440 = vector.extract_strided_slice %294 {offsets = [4, 0], sizes = [1, 32], strides = [1, 1]} : vector<9x32xf32> to vector<1x32xf32>
    %441 = vector.extract_strided_slice %294 {offsets = [5, 0], sizes = [1, 32], strides = [1, 1]} : vector<9x32xf32> to vector<1x32xf32>
    %cst_169 = arith.constant dense<0.000000e+00> : vector<8xf32>
    %442 = vector.multi_reduction <add>, %439, %cst_169 [1] : vector<8x32xf32> to vector<8xf32>
    %443 = vector.shape_cast %442 : vector<8xf32> to vector<8x1xf32>
    %cst_170 = arith.constant 3.200000e+01 : f32
    %444 = vector.broadcast %cst_170 : f32 to vector<8x1xf32>
    %445 = arith.divf %443, %444 : vector<8x1xf32>
    %446 = vector.broadcast %445 : vector<8x1xf32> to vector<8x32xf32>
    %447 = arith.subf %439, %446 : vector<8x32xf32>
    %448 = arith.mulf %447, %447 : vector<8x32xf32>
    %cst_171 = arith.constant dense<0.000000e+00> : vector<8xf32>
    %449 = vector.multi_reduction <add>, %448, %cst_171 [1] : vector<8x32xf32> to vector<8xf32>
    %450 = vector.shape_cast %449 : vector<8xf32> to vector<8x1xf32>
    %cst_172 = arith.constant 3.200000e+01 : f32
    %451 = vector.broadcast %cst_172 : f32 to vector<8x1xf32>
    %452 = arith.divf %450, %451 : vector<8x1xf32>
    %453 = vector.broadcast %445 : vector<8x1xf32> to vector<8x32xf32>
    %454 = arith.subf %439, %453 : vector<8x32xf32>
    %cst_173 = arith.constant 9.99999974E-6 : f32
    %455 = vector.broadcast %cst_173 : f32 to vector<8x1xf32>
    %456 = arith.addf %452, %455 : vector<8x1xf32>
    %457 = math.rsqrt %456 : vector<8x1xf32>
    %458 = vector.broadcast %457 : vector<8x1xf32> to vector<8x32xf32>
    %459 = arith.mulf %454, %458 : vector<8x32xf32>
    %460 = vector.broadcast %440 : vector<1x32xf32> to vector<8x32xf32>
    %461 = arith.mulf %459, %460 : vector<8x32xf32>
    %462 = vector.broadcast %441 : vector<1x32xf32> to vector<8x32xf32>
    %463 = arith.addf %461, %462 : vector<8x32xf32>
    %c2_174 = arith.constant 2 : index
    %c0_175 = arith.constant 0 : index
    %c0_176 = arith.constant 0 : index
    %464 = vector.load %arg7[%c2_174, %c0_175, %c0_176] : memref<4x32x128xf32, #tpu.memory_space<vmem>>, vector<1x32x128xf32>
    %465 = vector.shape_cast %464 : vector<1x32x128xf32> to vector<32x128xf32>
    %c2_177 = arith.constant 2 : index
    %c0_178 = arith.constant 0 : index
    %c0_179 = arith.constant 0 : index
    %466 = vector.load %arg8[%c2_177, %c0_178, %c0_179] : memref<4x1x128xf32, #tpu.memory_space<vmem>>, vector<1x1x128xf32>
    %467 = vector.shape_cast %466 : vector<1x1x128xf32> to vector<1x128xf32>
    %c2_180 = arith.constant 2 : index
    %c0_181 = arith.constant 0 : index
    %c0_182 = arith.constant 0 : index
    %468 = vector.load %arg9[%c2_180, %c0_181, %c0_182] : memref<4x128x32xf32, #tpu.memory_space<vmem>>, vector<1x128x32xf32>
    %469 = vector.shape_cast %468 : vector<1x128x32xf32> to vector<128x32xf32>
    %470 = vector.extract_strided_slice %294 {offsets = [8, 0], sizes = [1, 32], strides = [1, 1]} : vector<9x32xf32> to vector<1x32xf32>
    %471 = arith.truncf %463 : vector<8x32xf32> to vector<8x32xbf16>
    %472 = arith.truncf %465 : vector<32x128xf32> to vector<32x128xbf16>
    %cst_183 = arith.constant dense<0.000000e+00> : vector<8x128xf32>
    %473 = tpu.matmul %471, %472, %cst_183 {dimension_numbers = #tpu.dot_dimension_numbers<[1], [0], [0], [1], [0, 0, 1, 1], [], []>} : vector<8x32xbf16>, vector<32x128xbf16>, vector<8x128xf32> -> vector<8x128xf32>
    %474 = vector.broadcast %467 : vector<1x128xf32> to vector<8x128xf32>
    %475 = arith.addf %473, %474 : vector<8x128xf32>
    %cst_184 = arith.constant 5.000000e-01 : f32
    %476 = vector.broadcast %cst_184 : f32 to vector<8x128xf32>
    %477 = arith.mulf %476, %475 : vector<8x128xf32>
    %cst_185 = arith.constant 4.471500e-02 : f32
    %478 = vector.broadcast %cst_185 : f32 to vector<8x128xf32>
    %479 = arith.mulf %478, %475 : vector<8x128xf32>
    %480 = arith.mulf %479, %475 : vector<8x128xf32>
    %481 = arith.mulf %480, %475 : vector<8x128xf32>
    %482 = arith.addf %475, %481 : vector<8x128xf32>
    %cst_186 = arith.constant 0.797884583 : f32
    %483 = vector.broadcast %cst_186 : f32 to vector<8x128xf32>
    %484 = arith.mulf %483, %482 : vector<8x128xf32>
    %485 = math.tanh %484 : vector<8x128xf32>
    %cst_187 = arith.constant 1.000000e+00 : f32
    %486 = vector.broadcast %cst_187 : f32 to vector<8x128xf32>
    %487 = arith.addf %486, %485 : vector<8x128xf32>
    %488 = arith.mulf %477, %487 : vector<8x128xf32>
    %489 = arith.truncf %488 : vector<8x128xf32> to vector<8x128xbf16>
    %490 = arith.truncf %469 : vector<128x32xf32> to vector<128x32xbf16>
    %cst_188 = arith.constant dense<0.000000e+00> : vector<8x32xf32>
    %491 = tpu.matmul %489, %490, %cst_188 {dimension_numbers = #tpu.dot_dimension_numbers<[1], [0], [0], [1], [0, 0, 1, 1], [], []>} : vector<8x128xbf16>, vector<128x32xbf16>, vector<8x32xf32> -> vector<8x32xf32>
    %492 = vector.broadcast %470 : vector<1x32xf32> to vector<8x32xf32>
    %493 = arith.addf %491, %492 : vector<8x32xf32>
    %494 = arith.addf %439, %493 : vector<8x32xf32>
    %c1_189 = arith.constant 1 : index
    %c0_190 = arith.constant 0 : index
    %c0_191 = arith.constant 0 : index
    %495 = vector.load %arg11[%c1_189, %c0_190, %c0_191] : memref<2x9x32xf32, #tpu.memory_space<vmem>>, vector<1x9x32xf32>
    %496 = vector.shape_cast %495 : vector<1x9x32xf32> to vector<9x32xf32>
    %497 = vector.extract_strided_slice %496 {offsets = [0, 0], sizes = [1, 32], strides = [1, 1]} : vector<9x32xf32> to vector<1x32xf32>
    %498 = vector.extract_strided_slice %496 {offsets = [1, 0], sizes = [1, 32], strides = [1, 1]} : vector<9x32xf32> to vector<1x32xf32>
    %cst_192 = arith.constant dense<0.000000e+00> : vector<8xf32>
    %499 = vector.multi_reduction <add>, %494, %cst_192 [1] : vector<8x32xf32> to vector<8xf32>
    %500 = vector.shape_cast %499 : vector<8xf32> to vector<8x1xf32>
    %cst_193 = arith.constant 3.200000e+01 : f32
    %501 = vector.broadcast %cst_193 : f32 to vector<8x1xf32>
    %502 = arith.divf %500, %501 : vector<8x1xf32>
    %503 = vector.broadcast %502 : vector<8x1xf32> to vector<8x32xf32>
    %504 = arith.subf %494, %503 : vector<8x32xf32>
    %505 = arith.mulf %504, %504 : vector<8x32xf32>
    %cst_194 = arith.constant dense<0.000000e+00> : vector<8xf32>
    %506 = vector.multi_reduction <add>, %505, %cst_194 [1] : vector<8x32xf32> to vector<8xf32>
    %507 = vector.shape_cast %506 : vector<8xf32> to vector<8x1xf32>
    %cst_195 = arith.constant 3.200000e+01 : f32
    %508 = vector.broadcast %cst_195 : f32 to vector<8x1xf32>
    %509 = arith.divf %507, %508 : vector<8x1xf32>
    %510 = vector.broadcast %502 : vector<8x1xf32> to vector<8x32xf32>
    %511 = arith.subf %494, %510 : vector<8x32xf32>
    %cst_196 = arith.constant 9.99999974E-6 : f32
    %512 = vector.broadcast %cst_196 : f32 to vector<8x1xf32>
    %513 = arith.addf %509, %512 : vector<8x1xf32>
    %514 = math.rsqrt %513 : vector<8x1xf32>
    %515 = vector.broadcast %514 : vector<8x1xf32> to vector<8x32xf32>
    %516 = arith.mulf %511, %515 : vector<8x32xf32>
    %517 = vector.broadcast %497 : vector<1x32xf32> to vector<8x32xf32>
    %518 = arith.mulf %516, %517 : vector<8x32xf32>
    %519 = vector.broadcast %498 : vector<1x32xf32> to vector<8x32xf32>
    %520 = arith.addf %518, %519 : vector<8x32xf32>
    %c3 = arith.constant 3 : index
    %c0_197 = arith.constant 0 : index
    %c0_198 = arith.constant 0 : index
    %c0_199 = arith.constant 0 : index
    %521 = vector.load %arg4[%c3, %c0_197, %c0_198, %c0_199] : memref<6x4x32x24xf32, #tpu.memory_space<vmem>>, vector<1x4x32x24xf32>
    %522 = vector.shape_cast %521 : vector<1x4x32x24xf32> to vector<4x32x24xf32>
    %c3_200 = arith.constant 3 : index
    %c0_201 = arith.constant 0 : index
    %c0_202 = arith.constant 0 : index
    %c0_203 = arith.constant 0 : index
    %523 = vector.load %arg6[%c3_200, %c0_201, %c0_202, %c0_203] : memref<6x4x1x24xf32, #tpu.memory_space<vmem>>, vector<1x4x1x24xf32>
    %524 = vector.shape_cast %523 : vector<1x4x1x24xf32> to vector<4x1x24xf32>
    %c3_204 = arith.constant 3 : index
    %c0_205 = arith.constant 0 : index
    %c0_206 = arith.constant 0 : index
    %c0_207 = arith.constant 0 : index
    %525 = vector.load %arg5[%c3_204, %c0_205, %c0_206, %c0_207] : memref<6x4x8x32xf32, #tpu.memory_space<vmem>>, vector<1x4x8x32xf32>
    %526 = vector.shape_cast %525 : vector<1x4x8x32xf32> to vector<4x8x32xf32>
    %527 = vector.extract_strided_slice %496 {offsets = [6, 0], sizes = [1, 32], strides = [1, 1]} : vector<9x32xf32> to vector<1x32xf32>
    %528 = vector.shape_cast %520 : vector<8x32xf32> to vector<1x8x32xf32>
    %529 = vector.broadcast %528 : vector<1x8x32xf32> to vector<4x8x32xf32>
    %530 = arith.truncf %529 : vector<4x8x32xf32> to vector<4x8x32xbf16>
    %531 = arith.truncf %522 : vector<4x32x24xf32> to vector<4x32x24xbf16>
    "tpu.trace_start"() <{level = 10 : i32, message = "hte,hek->htk"}> : () -> ()
    %cst_208 = arith.constant dense<0.000000e+00> : vector<4x8x24xf32>
    %532 = tpu.matmul %530, %531, %cst_208 {dimension_numbers = #tpu.dot_dimension_numbers<[2], [1], [1], [2], [0, 0, 0, 1, 1, 2], [0], [0]>} : vector<4x8x32xbf16>, vector<4x32x24xbf16>, vector<4x8x24xf32> -> vector<4x8x24xf32>
    "tpu.trace_stop"() : () -> ()
    %533 = vector.broadcast %524 : vector<4x1x24xf32> to vector<4x8x24xf32>
    %534 = arith.addf %532, %533 : vector<4x8x24xf32>
    %535 = vector.extract_strided_slice %534 {offsets = [0, 0, 0], sizes = [4, 8, 8], strides = [1, 1, 1]} : vector<4x8x24xf32> to vector<4x8x8xf32>
    %536 = vector.extract_strided_slice %534 {offsets = [0, 0, 8], sizes = [4, 8, 8], strides = [1, 1, 1]} : vector<4x8x24xf32> to vector<4x8x8xf32>
    %537 = vector.extract_strided_slice %534 {offsets = [0, 0, 16], sizes = [4, 8, 8], strides = [1, 1, 1]} : vector<4x8x24xf32> to vector<4x8x8xf32>
    %538 = arith.truncf %535 : vector<4x8x8xf32> to vector<4x8x8xbf16>
    %539 = arith.truncf %536 : vector<4x8x8xf32> to vector<4x8x8xbf16>
    "tpu.trace_start"() <{level = 10 : i32, message = "hqd,hkd->hqk"}> : () -> ()
    %cst_209 = arith.constant dense<0.000000e+00> : vector<4x8x8xf32>
    %540 = tpu.matmul %538, %539, %cst_209 {dimension_numbers = #tpu.dot_dimension_numbers<[2], [2], [1], [1], [0, 0, 0, 1, 1, 1], [0], [0]>} : vector<4x8x8xbf16>, vector<4x8x8xbf16>, vector<4x8x8xf32> -> vector<4x8x8xf32>
    "tpu.trace_stop"() : () -> ()
    %cst_210 = arith.constant 0.353553385 : f32
    %541 = vector.broadcast %cst_210 : f32 to vector<4x8x8xf32>
    %542 = arith.mulf %540, %541 : vector<4x8x8xf32>
    %543 = vector.shape_cast %16 : vector<8x8xf32> to vector<1x8x8xf32>
    %544 = vector.broadcast %543 : vector<1x8x8xf32> to vector<4x8x8xf32>
    %545 = arith.addf %542, %544 : vector<4x8x8xf32>
    %cst_211 = arith.constant dense<0xFF800000> : vector<4x8xf32>
    %546 = vector.multi_reduction <maximumf>, %545, %cst_211 [2] : vector<4x8x8xf32> to vector<4x8xf32>
    %547 = vector.shape_cast %546 : vector<4x8xf32> to vector<4x8x1xf32>
    %548 = vector.broadcast %547 : vector<4x8x1xf32> to vector<4x8x8xf32>
    %549 = arith.subf %545, %548 : vector<4x8x8xf32>
    %550 = math.exp %549 : vector<4x8x8xf32>
    %cst_212 = arith.constant dense<0.000000e+00> : vector<4x8xf32>
    %551 = vector.multi_reduction <add>, %550, %cst_212 [2] : vector<4x8x8xf32> to vector<4x8xf32>
    %552 = vector.shape_cast %551 : vector<4x8xf32> to vector<4x8x1xf32>
    %553 = tpu.reciprocal %552 {approx = true} : vector<4x8x1xf32> -> vector<4x8x1xf32>
    %554 = vector.broadcast %553 : vector<4x8x1xf32> to vector<4x8x8xf32>
    %555 = arith.mulf %550, %554 : vector<4x8x8xf32>
    %556 = arith.truncf %555 : vector<4x8x8xf32> to vector<4x8x8xbf16>
    %557 = arith.truncf %537 : vector<4x8x8xf32> to vector<4x8x8xbf16>
    "tpu.trace_start"() <{level = 10 : i32, message = "hqk,hkd->hqd"}> : () -> ()
    %cst_213 = arith.constant dense<0.000000e+00> : vector<4x8x8xf32>
    %558 = tpu.matmul %556, %557, %cst_213 {dimension_numbers = #tpu.dot_dimension_numbers<[2], [1], [1], [2], [0, 0, 0, 1, 1, 2], [0], [0]>} : vector<4x8x8xbf16>, vector<4x8x8xbf16>, vector<4x8x8xf32> -> vector<4x8x8xf32>
    "tpu.trace_stop"() : () -> ()
    %559 = arith.truncf %558 : vector<4x8x8xf32> to vector<4x8x8xbf16>
    %560 = arith.truncf %526 : vector<4x8x32xf32> to vector<4x8x32xbf16>
    "tpu.trace_start"() <{level = 10 : i32, message = "htd,hde->hte"}> : () -> ()
    %cst_214 = arith.constant dense<0.000000e+00> : vector<4x8x32xf32>
    %561 = tpu.matmul %559, %560, %cst_214 {dimension_numbers = #tpu.dot_dimension_numbers<[2], [1], [1], [2], [0, 0, 0, 1, 1, 2], [0], [0]>} : vector<4x8x8xbf16>, vector<4x8x32xbf16>, vector<4x8x32xf32> -> vector<4x8x32xf32>
    "tpu.trace_stop"() : () -> ()
    %cst_215 = arith.constant dense<0.000000e+00> : vector<8x32xf32>
    %562 = vector.multi_reduction <add>, %561, %cst_215 [0] : vector<4x8x32xf32> to vector<8x32xf32>
    %563 = vector.broadcast %527 : vector<1x32xf32> to vector<8x32xf32>
    %564 = arith.addf %562, %563 : vector<8x32xf32>
    %565 = arith.addf %494, %564 : vector<8x32xf32>
    %566 = vector.extract_strided_slice %496 {offsets = [2, 0], sizes = [1, 32], strides = [1, 1]} : vector<9x32xf32> to vector<1x32xf32>
    %567 = vector.extract_strided_slice %496 {offsets = [3, 0], sizes = [1, 32], strides = [1, 1]} : vector<9x32xf32> to vector<1x32xf32>
    %cst_216 = arith.constant dense<0.000000e+00> : vector<8xf32>
    %568 = vector.multi_reduction <add>, %565, %cst_216 [1] : vector<8x32xf32> to vector<8xf32>
    %569 = vector.shape_cast %568 : vector<8xf32> to vector<8x1xf32>
    %cst_217 = arith.constant 3.200000e+01 : f32
    %570 = vector.broadcast %cst_217 : f32 to vector<8x1xf32>
    %571 = arith.divf %569, %570 : vector<8x1xf32>
    %572 = vector.broadcast %571 : vector<8x1xf32> to vector<8x32xf32>
    %573 = arith.subf %565, %572 : vector<8x32xf32>
    %574 = arith.mulf %573, %573 : vector<8x32xf32>
    %cst_218 = arith.constant dense<0.000000e+00> : vector<8xf32>
    %575 = vector.multi_reduction <add>, %574, %cst_218 [1] : vector<8x32xf32> to vector<8xf32>
    %576 = vector.shape_cast %575 : vector<8xf32> to vector<8x1xf32>
    %cst_219 = arith.constant 3.200000e+01 : f32
    %577 = vector.broadcast %cst_219 : f32 to vector<8x1xf32>
    %578 = arith.divf %576, %577 : vector<8x1xf32>
    %579 = vector.broadcast %571 : vector<8x1xf32> to vector<8x32xf32>
    %580 = arith.subf %565, %579 : vector<8x32xf32>
    %cst_220 = arith.constant 9.99999974E-6 : f32
    %581 = vector.broadcast %cst_220 : f32 to vector<8x1xf32>
    %582 = arith.addf %578, %581 : vector<8x1xf32>
    %583 = math.rsqrt %582 : vector<8x1xf32>
    %584 = vector.broadcast %583 : vector<8x1xf32> to vector<8x32xf32>
    %585 = arith.mulf %580, %584 : vector<8x32xf32>
    %586 = vector.broadcast %566 : vector<1x32xf32> to vector<8x32xf32>
    %587 = arith.mulf %585, %586 : vector<8x32xf32>
    %588 = vector.broadcast %567 : vector<1x32xf32> to vector<8x32xf32>
    %589 = arith.addf %587, %588 : vector<8x32xf32>
    %c5 = arith.constant 5 : index
    %c0_221 = arith.constant 0 : index
    %c0_222 = arith.constant 0 : index
    %c0_223 = arith.constant 0 : index
    %590 = vector.load %arg4[%c5, %c0_221, %c0_222, %c0_223] : memref<6x4x32x24xf32, #tpu.memory_space<vmem>>, vector<1x4x32x24xf32>
    %591 = vector.shape_cast %590 : vector<1x4x32x24xf32> to vector<4x32x24xf32>
    %c5_224 = arith.constant 5 : index
    %c0_225 = arith.constant 0 : index
    %c0_226 = arith.constant 0 : index
    %c0_227 = arith.constant 0 : index
    %592 = vector.load %arg6[%c5_224, %c0_225, %c0_226, %c0_227] : memref<6x4x1x24xf32, #tpu.memory_space<vmem>>, vector<1x4x1x24xf32>
    %593 = vector.shape_cast %592 : vector<1x4x1x24xf32> to vector<4x1x24xf32>
    %c5_228 = arith.constant 5 : index
    %c0_229 = arith.constant 0 : index
    %c0_230 = arith.constant 0 : index
    %c0_231 = arith.constant 0 : index
    %594 = vector.load %arg5[%c5_228, %c0_229, %c0_230, %c0_231] : memref<6x4x8x32xf32, #tpu.memory_space<vmem>>, vector<1x4x8x32xf32>
    %595 = vector.shape_cast %594 : vector<1x4x8x32xf32> to vector<4x8x32xf32>
    %596 = vector.extract_strided_slice %496 {offsets = [7, 0], sizes = [1, 32], strides = [1, 1]} : vector<9x32xf32> to vector<1x32xf32>
    %597 = vector.shape_cast %589 : vector<8x32xf32> to vector<1x8x32xf32>
    %598 = vector.broadcast %597 : vector<1x8x32xf32> to vector<4x8x32xf32>
    %599 = vector.shape_cast %292 : vector<8x32xf32> to vector<1x8x32xf32>
    %600 = vector.broadcast %599 : vector<1x8x32xf32> to vector<4x8x32xf32>
    %601 = arith.truncf %598 : vector<4x8x32xf32> to vector<4x8x32xbf16>
    %602 = vector.extract_strided_slice %591 {offsets = [0, 0, 0], sizes = [4, 32, 8], strides = [1, 1, 1]} : vector<4x32x24xf32> to vector<4x32x8xf32>
    %603 = arith.truncf %602 : vector<4x32x8xf32> to vector<4x32x8xbf16>
    "tpu.trace_start"() <{level = 10 : i32, message = "hte,hed->htd"}> : () -> ()
    %cst_232 = arith.constant dense<0.000000e+00> : vector<4x8x8xf32>
    %604 = tpu.matmul %601, %603, %cst_232 {dimension_numbers = #tpu.dot_dimension_numbers<[2], [1], [1], [2], [0, 0, 0, 1, 1, 2], [0], [0]>} : vector<4x8x32xbf16>, vector<4x32x8xbf16>, vector<4x8x8xf32> -> vector<4x8x8xf32>
    "tpu.trace_stop"() : () -> ()
    %605 = vector.extract_strided_slice %593 {offsets = [0, 0, 0], sizes = [4, 1, 8], strides = [1, 1, 1]} : vector<4x1x24xf32> to vector<4x1x8xf32>
    %606 = vector.broadcast %605 : vector<4x1x8xf32> to vector<4x8x8xf32>
    %607 = arith.addf %604, %606 : vector<4x8x8xf32>
    %608 = arith.truncf %600 : vector<4x8x32xf32> to vector<4x8x32xbf16>
    %609 = vector.extract_strided_slice %591 {offsets = [0, 0, 8], sizes = [4, 32, 16], strides = [1, 1, 1]} : vector<4x32x24xf32> to vector<4x32x16xf32>
    %610 = arith.truncf %609 : vector<4x32x16xf32> to vector<4x32x16xbf16>
    "tpu.trace_start"() <{level = 10 : i32, message = "hse,hek->hsk"}> : () -> ()
    %cst_233 = arith.constant dense<0.000000e+00> : vector<4x8x16xf32>
    %611 = tpu.matmul %608, %610, %cst_233 {dimension_numbers = #tpu.dot_dimension_numbers<[2], [1], [1], [2], [0, 0, 0, 1, 1, 2], [0], [0]>} : vector<4x8x32xbf16>, vector<4x32x16xbf16>, vector<4x8x16xf32> -> vector<4x8x16xf32>
    "tpu.trace_stop"() : () -> ()
    %612 = vector.extract_strided_slice %593 {offsets = [0, 0, 8], sizes = [4, 1, 16], strides = [1, 1, 1]} : vector<4x1x24xf32> to vector<4x1x16xf32>
    %613 = vector.broadcast %612 : vector<4x1x16xf32> to vector<4x8x16xf32>
    %614 = arith.addf %611, %613 : vector<4x8x16xf32>
    %615 = vector.extract_strided_slice %614 {offsets = [0, 0, 0], sizes = [4, 8, 8], strides = [1, 1, 1]} : vector<4x8x16xf32> to vector<4x8x8xf32>
    %616 = vector.extract_strided_slice %614 {offsets = [0, 0, 8], sizes = [4, 8, 8], strides = [1, 1, 1]} : vector<4x8x16xf32> to vector<4x8x8xf32>
    %617 = arith.truncf %607 : vector<4x8x8xf32> to vector<4x8x8xbf16>
    %618 = arith.truncf %615 : vector<4x8x8xf32> to vector<4x8x8xbf16>
    "tpu.trace_start"() <{level = 10 : i32, message = "hqd,hkd->hqk"}> : () -> ()
    %cst_234 = arith.constant dense<0.000000e+00> : vector<4x8x8xf32>
    %619 = tpu.matmul %617, %618, %cst_234 {dimension_numbers = #tpu.dot_dimension_numbers<[2], [2], [1], [1], [0, 0, 0, 1, 1, 1], [0], [0]>} : vector<4x8x8xbf16>, vector<4x8x8xbf16>, vector<4x8x8xf32> -> vector<4x8x8xf32>
    "tpu.trace_stop"() : () -> ()
    %cst_235 = arith.constant 0.353553385 : f32
    %620 = vector.broadcast %cst_235 : f32 to vector<4x8x8xf32>
    %621 = arith.mulf %619, %620 : vector<4x8x8xf32>
    %cst_236 = arith.constant dense<0xFF800000> : vector<4x8xf32>
    %622 = vector.multi_reduction <maximumf>, %621, %cst_236 [2] : vector<4x8x8xf32> to vector<4x8xf32>
    %623 = vector.shape_cast %622 : vector<4x8xf32> to vector<4x8x1xf32>
    %624 = vector.broadcast %623 : vector<4x8x1xf32> to vector<4x8x8xf32>
    %625 = arith.subf %621, %624 : vector<4x8x8xf32>
    %626 = math.exp %625 : vector<4x8x8xf32>
    %cst_237 = arith.constant dense<0.000000e+00> : vector<4x8xf32>
    %627 = vector.multi_reduction <add>, %626, %cst_237 [2] : vector<4x8x8xf32> to vector<4x8xf32>
    %628 = vector.shape_cast %627 : vector<4x8xf32> to vector<4x8x1xf32>
    %629 = tpu.reciprocal %628 {approx = true} : vector<4x8x1xf32> -> vector<4x8x1xf32>
    %630 = vector.broadcast %629 : vector<4x8x1xf32> to vector<4x8x8xf32>
    %631 = arith.mulf %626, %630 : vector<4x8x8xf32>
    %632 = arith.truncf %631 : vector<4x8x8xf32> to vector<4x8x8xbf16>
    %633 = arith.truncf %616 : vector<4x8x8xf32> to vector<4x8x8xbf16>
    "tpu.trace_start"() <{level = 10 : i32, message = "hqk,hkd->hqd"}> : () -> ()
    %cst_238 = arith.constant dense<0.000000e+00> : vector<4x8x8xf32>
    %634 = tpu.matmul %632, %633, %cst_238 {dimension_numbers = #tpu.dot_dimension_numbers<[2], [1], [1], [2], [0, 0, 0, 1, 1, 2], [0], [0]>} : vector<4x8x8xbf16>, vector<4x8x8xbf16>, vector<4x8x8xf32> -> vector<4x8x8xf32>
    "tpu.trace_stop"() : () -> ()
    %635 = arith.truncf %634 : vector<4x8x8xf32> to vector<4x8x8xbf16>
    %636 = arith.truncf %595 : vector<4x8x32xf32> to vector<4x8x32xbf16>
    "tpu.trace_start"() <{level = 10 : i32, message = "htd,hde->hte"}> : () -> ()
    %cst_239 = arith.constant dense<0.000000e+00> : vector<4x8x32xf32>
    %637 = tpu.matmul %635, %636, %cst_239 {dimension_numbers = #tpu.dot_dimension_numbers<[2], [1], [1], [2], [0, 0, 0, 1, 1, 2], [0], [0]>} : vector<4x8x8xbf16>, vector<4x8x32xbf16>, vector<4x8x32xf32> -> vector<4x8x32xf32>
    "tpu.trace_stop"() : () -> ()
    %cst_240 = arith.constant dense<0.000000e+00> : vector<8x32xf32>
    %638 = vector.multi_reduction <add>, %637, %cst_240 [0] : vector<4x8x32xf32> to vector<8x32xf32>
    %639 = vector.broadcast %596 : vector<1x32xf32> to vector<8x32xf32>
    %640 = arith.addf %638, %639 : vector<8x32xf32>
    %641 = arith.addf %565, %640 : vector<8x32xf32>
    %642 = vector.extract_strided_slice %496 {offsets = [4, 0], sizes = [1, 32], strides = [1, 1]} : vector<9x32xf32> to vector<1x32xf32>
    %643 = vector.extract_strided_slice %496 {offsets = [5, 0], sizes = [1, 32], strides = [1, 1]} : vector<9x32xf32> to vector<1x32xf32>
    %cst_241 = arith.constant dense<0.000000e+00> : vector<8xf32>
    %644 = vector.multi_reduction <add>, %641, %cst_241 [1] : vector<8x32xf32> to vector<8xf32>
    %645 = vector.shape_cast %644 : vector<8xf32> to vector<8x1xf32>
    %cst_242 = arith.constant 3.200000e+01 : f32
    %646 = vector.broadcast %cst_242 : f32 to vector<8x1xf32>
    %647 = arith.divf %645, %646 : vector<8x1xf32>
    %648 = vector.broadcast %647 : vector<8x1xf32> to vector<8x32xf32>
    %649 = arith.subf %641, %648 : vector<8x32xf32>
    %650 = arith.mulf %649, %649 : vector<8x32xf32>
    %cst_243 = arith.constant dense<0.000000e+00> : vector<8xf32>
    %651 = vector.multi_reduction <add>, %650, %cst_243 [1] : vector<8x32xf32> to vector<8xf32>
    %652 = vector.shape_cast %651 : vector<8xf32> to vector<8x1xf32>
    %cst_244 = arith.constant 3.200000e+01 : f32
    %653 = vector.broadcast %cst_244 : f32 to vector<8x1xf32>
    %654 = arith.divf %652, %653 : vector<8x1xf32>
    %655 = vector.broadcast %647 : vector<8x1xf32> to vector<8x32xf32>
    %656 = arith.subf %641, %655 : vector<8x32xf32>
    %cst_245 = arith.constant 9.99999974E-6 : f32
    %657 = vector.broadcast %cst_245 : f32 to vector<8x1xf32>
    %658 = arith.addf %654, %657 : vector<8x1xf32>
    %659 = math.rsqrt %658 : vector<8x1xf32>
    %660 = vector.broadcast %659 : vector<8x1xf32> to vector<8x32xf32>
    %661 = arith.mulf %656, %660 : vector<8x32xf32>
    %662 = vector.broadcast %642 : vector<1x32xf32> to vector<8x32xf32>
    %663 = arith.mulf %661, %662 : vector<8x32xf32>
    %664 = vector.broadcast %643 : vector<1x32xf32> to vector<8x32xf32>
    %665 = arith.addf %663, %664 : vector<8x32xf32>
    %c3_246 = arith.constant 3 : index
    %c0_247 = arith.constant 0 : index
    %c0_248 = arith.constant 0 : index
    %666 = vector.load %arg7[%c3_246, %c0_247, %c0_248] : memref<4x32x128xf32, #tpu.memory_space<vmem>>, vector<1x32x128xf32>
    %667 = vector.shape_cast %666 : vector<1x32x128xf32> to vector<32x128xf32>
    %c3_249 = arith.constant 3 : index
    %c0_250 = arith.constant 0 : index
    %c0_251 = arith.constant 0 : index
    %668 = vector.load %arg8[%c3_249, %c0_250, %c0_251] : memref<4x1x128xf32, #tpu.memory_space<vmem>>, vector<1x1x128xf32>
    %669 = vector.shape_cast %668 : vector<1x1x128xf32> to vector<1x128xf32>
    %c3_252 = arith.constant 3 : index
    %c0_253 = arith.constant 0 : index
    %c0_254 = arith.constant 0 : index
    %670 = vector.load %arg9[%c3_252, %c0_253, %c0_254] : memref<4x128x32xf32, #tpu.memory_space<vmem>>, vector<1x128x32xf32>
    %671 = vector.shape_cast %670 : vector<1x128x32xf32> to vector<128x32xf32>
    %672 = vector.extract_strided_slice %496 {offsets = [8, 0], sizes = [1, 32], strides = [1, 1]} : vector<9x32xf32> to vector<1x32xf32>
    %673 = arith.truncf %665 : vector<8x32xf32> to vector<8x32xbf16>
    %674 = arith.truncf %667 : vector<32x128xf32> to vector<32x128xbf16>
    %cst_255 = arith.constant dense<0.000000e+00> : vector<8x128xf32>
    %675 = tpu.matmul %673, %674, %cst_255 {dimension_numbers = #tpu.dot_dimension_numbers<[1], [0], [0], [1], [0, 0, 1, 1], [], []>} : vector<8x32xbf16>, vector<32x128xbf16>, vector<8x128xf32> -> vector<8x128xf32>
    %676 = vector.broadcast %669 : vector<1x128xf32> to vector<8x128xf32>
    %677 = arith.addf %675, %676 : vector<8x128xf32>
    %cst_256 = arith.constant 5.000000e-01 : f32
    %678 = vector.broadcast %cst_256 : f32 to vector<8x128xf32>
    %679 = arith.mulf %678, %677 : vector<8x128xf32>
    %cst_257 = arith.constant 4.471500e-02 : f32
    %680 = vector.broadcast %cst_257 : f32 to vector<8x128xf32>
    %681 = arith.mulf %680, %677 : vector<8x128xf32>
    %682 = arith.mulf %681, %677 : vector<8x128xf32>
    %683 = arith.mulf %682, %677 : vector<8x128xf32>
    %684 = arith.addf %677, %683 : vector<8x128xf32>
    %cst_258 = arith.constant 0.797884583 : f32
    %685 = vector.broadcast %cst_258 : f32 to vector<8x128xf32>
    %686 = arith.mulf %685, %684 : vector<8x128xf32>
    %687 = math.tanh %686 : vector<8x128xf32>
    %cst_259 = arith.constant 1.000000e+00 : f32
    %688 = vector.broadcast %cst_259 : f32 to vector<8x128xf32>
    %689 = arith.addf %688, %687 : vector<8x128xf32>
    %690 = arith.mulf %679, %689 : vector<8x128xf32>
    %691 = arith.truncf %690 : vector<8x128xf32> to vector<8x128xbf16>
    %692 = arith.truncf %671 : vector<128x32xf32> to vector<128x32xbf16>
    %cst_260 = arith.constant dense<0.000000e+00> : vector<8x32xf32>
    %693 = tpu.matmul %691, %692, %cst_260 {dimension_numbers = #tpu.dot_dimension_numbers<[1], [0], [0], [1], [0, 0, 1, 1], [], []>} : vector<8x128xbf16>, vector<128x32xbf16>, vector<8x32xf32> -> vector<8x32xf32>
    %694 = vector.broadcast %672 : vector<1x32xf32> to vector<8x32xf32>
    %695 = arith.addf %693, %694 : vector<8x32xf32>
    %696 = arith.addf %641, %695 : vector<8x32xf32>
    %c2_261 = arith.constant 2 : index
    %c0_262 = arith.constant 0 : index
    %697 = vector.load %arg12[%c2_261, %c0_262] : memref<4x32xf32, #tpu.memory_space<vmem>>, vector<1x32xf32>
    %c3_263 = arith.constant 3 : index
    %c0_264 = arith.constant 0 : index
    %698 = vector.load %arg12[%c3_263, %c0_264] : memref<4x32xf32, #tpu.memory_space<vmem>>, vector<1x32xf32>
    %cst_265 = arith.constant dense<0.000000e+00> : vector<8xf32>
    %699 = vector.multi_reduction <add>, %696, %cst_265 [1] : vector<8x32xf32> to vector<8xf32>
    %700 = vector.shape_cast %699 : vector<8xf32> to vector<8x1xf32>
    %cst_266 = arith.constant 3.200000e+01 : f32
    %701 = vector.broadcast %cst_266 : f32 to vector<8x1xf32>
    %702 = arith.divf %700, %701 : vector<8x1xf32>
    %703 = vector.broadcast %702 : vector<8x1xf32> to vector<8x32xf32>
    %704 = arith.subf %696, %703 : vector<8x32xf32>
    %705 = arith.mulf %704, %704 : vector<8x32xf32>
    %cst_267 = arith.constant dense<0.000000e+00> : vector<8xf32>
    %706 = vector.multi_reduction <add>, %705, %cst_267 [1] : vector<8x32xf32> to vector<8xf32>
    %707 = vector.shape_cast %706 : vector<8xf32> to vector<8x1xf32>
    %cst_268 = arith.constant 3.200000e+01 : f32
    %708 = vector.broadcast %cst_268 : f32 to vector<8x1xf32>
    %709 = arith.divf %707, %708 : vector<8x1xf32>
    %710 = vector.broadcast %702 : vector<8x1xf32> to vector<8x32xf32>
    %711 = arith.subf %696, %710 : vector<8x32xf32>
    %cst_269 = arith.constant 9.99999974E-6 : f32
    %712 = vector.broadcast %cst_269 : f32 to vector<8x1xf32>
    %713 = arith.addf %709, %712 : vector<8x1xf32>
    %714 = math.rsqrt %713 : vector<8x1xf32>
    %715 = vector.broadcast %714 : vector<8x1xf32> to vector<8x32xf32>
    %716 = arith.mulf %711, %715 : vector<8x32xf32>
    %717 = vector.broadcast %697 : vector<1x32xf32> to vector<8x32xf32>
    %718 = arith.mulf %716, %717 : vector<8x32xf32>
    %719 = vector.broadcast %698 : vector<1x32xf32> to vector<8x32xf32>
    %720 = arith.addf %718, %719 : vector<8x32xf32>
    %721 = arith.truncf %720 : vector<8x32xf32> to vector<8x32xbf16>
    %c0_270 = arith.constant 0 : index
    %c0_271 = arith.constant 0 : index
    %722 = vector.load %arg13[%c0_270, %c0_271] : memref<32x64xf32, #tpu.memory_space<vmem>>, vector<32x64xf32>
    %723 = arith.truncf %722 : vector<32x64xf32> to vector<32x64xbf16>
    %cst_272 = arith.constant dense<0.000000e+00> : vector<8x64xf32>
    %724 = tpu.matmul %721, %723, %cst_272 {dimension_numbers = #tpu.dot_dimension_numbers<[1], [0], [0], [1], [0, 0, 1, 1], [], []>} : vector<8x32xbf16>, vector<32x64xbf16>, vector<8x64xf32> -> vector<8x64xf32>
    %c0_273 = arith.constant 0 : index
    %c0_274 = arith.constant 0 : index
    %c0_275 = arith.constant 0 : index
    %725 = vector.load %arg14[%c0_273, %c0_274, %c0_275] : memref<1x8x64xf32, #tpu.memory_space<vmem>>, vector<1x8x64xf32>
    %726 = vector.shape_cast %725 : vector<1x8x64xf32> to vector<8x64xf32>
    %727 = vector.shape_cast %724 : vector<8x64xf32> to vector<1x8x64xf32>
    tpu.vector_store %arg14[%c0_273, %c0_274, %c0_275], %727 {strides = array<i32>} : memref<1x8x64xf32, #tpu.memory_space<vmem>>, vector<1x8x64xf32>,
    %c0_276 = arith.constant 0 : index
    %c0_277 = arith.constant 0 : index
    %c0_278 = arith.constant 0 : index
    %728 = vector.load %arg3[%c0_276, %c0_277, %c0_278] : memref<1x8x1xi32, #tpu.memory_space<vmem>>, vector<1x8x1xi32>
    %729 = vector.shape_cast %728 : vector<1x8x1xi32> to vector<8x1xi32>
    %cst_279 = arith.constant dense<0xFF800000> : vector<8xf32>
    %730 = vector.multi_reduction <maximumf>, %724, %cst_279 [1] : vector<8x64xf32> to vector<8xf32>
    %731 = vector.shape_cast %730 : vector<8xf32> to vector<8x1xf32>
    %732 = vector.broadcast %731 : vector<8x1xf32> to vector<8x64xf32>
    %733 = arith.subf %724, %732 : vector<8x64xf32>
    %734 = math.exp %733 : vector<8x64xf32>
    %cst_280 = arith.constant dense<0.000000e+00> : vector<8xf32>
    %735 = vector.multi_reduction <add>, %734, %cst_280 [1] : vector<8x64xf32> to vector<8xf32>
    %736 = vector.shape_cast %735 : vector<8xf32> to vector<8x1xf32>
    %737 = math.log %736 : vector<8x1xf32>
    %738 = arith.addf %731, %737 : vector<8x1xf32>
    %739 = tpu.iota {dimensions = array<i32: 1>} : vector<8x64xi32>
    %740 = vector.broadcast %729 : vector<8x1xi32> to vector<8x64xi32>
    %741 = arith.cmpi eq, %739, %740 : vector<8x64xi32>
    %cst_281 = arith.constant 0.000000e+00 : f32
    %742 = vector.broadcast %cst_281 : f32 to vector<8x64xf32>
    %743 = arith.select %741, %724, %742 : vector<8x64xi1>, vector<8x64xf32>
    %cst_282 = arith.constant dense<0.000000e+00> : vector<8xf32>
    %744 = vector.multi_reduction <add>, %743, %cst_282 [1] : vector<8x64xf32> to vector<8xf32>
    %745 = vector.shape_cast %744 : vector<8xf32> to vector<8x1xf32>
    %c0_i32_283 = arith.constant 0 : i32
    %746 = vector.broadcast %c0_i32_283 : i32 to vector<8x1xi32>
    %747 = arith.cmpi ne, %729, %746 : vector<8x1xi32>
    %748 = arith.extui %747 : vector<8x1xi1> to vector<8x1xi32>
    %749 = arith.sitofp %748 : vector<8x1xi32> to vector<8x1xf32>
    %750 = arith.subf %738, %745 : vector<8x1xf32>
    %751 = arith.mulf %750, %749 : vector<8x1xf32>
    %cst_284 = arith.constant dense<0.000000e+00> : vector<1xf32>
    %752 = vector.multi_reduction <add>, %751, %cst_284 [0] : vector<8x1xf32> to vector<1xf32>
    %753 = vector.shape_cast %752 : vector<1xf32> to vector<1x1xf32>
    %c0_285 = arith.constant 0 : index
    %c0_286 = arith.constant 0 : index
    %c0_287 = arith.constant 0 : index
    %754 = vector.load %arg15[%c0_285, %c0_286, %c0_287] : memref<1x1x1xf32, #tpu.memory_space<vmem>>, vector<1x1x1xf32>
    %755 = vector.shape_cast %754 : vector<1x1x1xf32> to vector<1x1xf32>
    %756 = vector.shape_cast %753 : vector<1x1xf32> to vector<1x1x1xf32>
    tpu.vector_store %arg15[%c0_285, %c0_286, %c0_287], %756 {strides = array<i32>} : memref<1x1x1xf32, #tpu.memory_space<vmem>>, vector<1x1x1xf32>,
    %cst_288 = arith.constant dense<0.000000e+00> : vector<1xf32>
    %757 = vector.multi_reduction <add>, %749, %cst_288 [0] : vector<8x1xf32> to vector<1xf32>
    %758 = vector.shape_cast %757 : vector<1xf32> to vector<1x1xf32>
    %c0_289 = arith.constant 0 : index
    %c0_290 = arith.constant 0 : index
    %c0_291 = arith.constant 0 : index
    %759 = vector.load %arg16[%c0_289, %c0_290, %c0_291] : memref<1x1x1xf32, #tpu.memory_space<vmem>>, vector<1x1x1xf32>
    %760 = vector.shape_cast %759 : vector<1x1x1xf32> to vector<1x1xf32>
    %761 = vector.shape_cast %758 : vector<1x1xf32> to vector<1x1x1xf32>
    tpu.vector_store %arg16[%c0_289, %c0_290, %c0_291], %761 {strides = array<i32>} : memref<1x1x1xf32, #tpu.memory_space<vmem>>, vector<1x1x1xf32>,
    return
  }
  func.func @transform_0(%arg0: i32) -> (i32, i32, i32, i32) {
    %c0_i32 = arith.constant 0 : i32
    %c0_i32_0 = arith.constant 0 : i32
    %c0_i32_1 = arith.constant 0 : i32
    %c0_i32_2 = arith.constant 0 : i32
    return %arg0, %c0_i32, %c0_i32_0, %c0_i32_1 : i32, i32, i32, i32
  }
  func.func @transform_1(%arg0: i32) -> (i32, i32, i32) {
    %c0_i32 = arith.constant 0 : i32
    %c0_i32_0 = arith.constant 0 : i32
    %c0_i32_1 = arith.constant 0 : i32
    return %arg0, %c0_i32, %c0_i32_0 : i32, i32, i32
  }
  func.func @transform_2(%arg0: i32) -> (i32, i32, i32) {
    %c0_i32 = arith.constant 0 : i32
    %c0_i32_0 = arith.constant 0 : i32
    %c0_i32_1 = arith.constant 0 : i32
    return %arg0, %c0_i32, %c0_i32_0 : i32, i32, i32
  }
  func.func @transform_3(%arg0: i32) -> (i32, i32, i32, i32) {
    %c0_i32 = arith.constant 0 : i32
    %c0_i32_0 = arith.constant 0 : i32
    %c0_i32_1 = arith.constant 0 : i32
    %c0_i32_2 = arith.constant 0 : i32
    %c0_i32_3 = arith.constant 0 : i32
    return %c0_i32, %c0_i32_0, %c0_i32_1, %c0_i32_2 : i32, i32, i32, i32
  }
  func.func @transform_4(%arg0: i32) -> (i32, i32, i32, i32) {
    %c0_i32 = arith.constant 0 : i32
    %c0_i32_0 = arith.constant 0 : i32
    %c0_i32_1 = arith.constant 0 : i32
    %c0_i32_2 = arith.constant 0 : i32
    %c0_i32_3 = arith.constant 0 : i32
    return %c0_i32, %c0_i32_0, %c0_i32_1, %c0_i32_2 : i32, i32, i32, i32
  }
  func.func @transform_5(%arg0: i32) -> (i32, i32, i32, i32) {
    %c0_i32 = arith.constant 0 : i32
    %c0_i32_0 = arith.constant 0 : i32
    %c0_i32_1 = arith.constant 0 : i32
    %c0_i32_2 = arith.constant 0 : i32
    %c0_i32_3 = arith.constant 0 : i32
    return %c0_i32, %c0_i32_0, %c0_i32_1, %c0_i32_2 : i32, i32, i32, i32
  }
  func.func @transform_6(%arg0: i32) -> (i32, i32, i32) {
    %c0_i32 = arith.constant 0 : i32
    %c0_i32_0 = arith.constant 0 : i32
    %c0_i32_1 = arith.constant 0 : i32
    %c0_i32_2 = arith.constant 0 : i32
    return %c0_i32, %c0_i32_0, %c0_i32_1 : i32, i32, i32
  }
  func.func @transform_7(%arg0: i32) -> (i32, i32, i32) {
    %c0_i32 = arith.constant 0 : i32
    %c0_i32_0 = arith.constant 0 : i32
    %c0_i32_1 = arith.constant 0 : i32
    %c0_i32_2 = arith.constant 0 : i32
    return %c0_i32, %c0_i32_0, %c0_i32_1 : i32, i32, i32
  }
  func.func @transform_8(%arg0: i32) -> (i32, i32, i32) {
    %c0_i32 = arith.constant 0 : i32
    %c0_i32_0 = arith.constant 0 : i32
    %c0_i32_1 = arith.constant 0 : i32
    %c0_i32_2 = arith.constant 0 : i32
    return %c0_i32, %c0_i32_0, %c0_i32_1 : i32, i32, i32
  }
  func.func @transform_9(%arg0: i32) -> (i32, i32, i32) {
    %c0_i32 = arith.constant 0 : i32
    %c0_i32_0 = arith.constant 0 : i32
    %c0_i32_1 = arith.constant 0 : i32
    %c0_i32_2 = arith.constant 0 : i32
    return %c0_i32, %c0_i32_0, %c0_i32_1 : i32, i32, i32
  }
  func.func @transform_10(%arg0: i32) -> (i32, i32, i32) {
    %c0_i32 = arith.constant 0 : i32
    %c0_i32_0 = arith.constant 0 : i32
    %c0_i32_1 = arith.constant 0 : i32
    %c0_i32_2 = arith.constant 0 : i32
    return %c0_i32, %c0_i32_0, %c0_i32_1 : i32, i32, i32
  }
  func.func @transform_11(%arg0: i32) -> (i32, i32) {
    %c0_i32 = arith.constant 0 : i32
    %c0_i32_0 = arith.constant 0 : i32
    %c0_i32_1 = arith.constant 0 : i32
    return %c0_i32, %c0_i32_0 : i32, i32
  }
  func.func @transform_12(%arg0: i32) -> (i32, i32) {
    %c0_i32 = arith.constant 0 : i32
    %c0_i32_0 = arith.constant 0 : i32
    %c0_i32_1 = arith.constant 0 : i32
    return %c0_i32, %c0_i32_0 : i32, i32
  }
  func.func @transform_13(%arg0: i32) -> (i32, i32, i32) {
    %c0_i32 = arith.constant 0 : i32
    %c0_i32_0 = arith.constant 0 : i32
    %c0_i32_1 = arith.constant 0 : i32
    return %arg0, %c0_i32, %c0_i32_0 : i32, i32, i32
  }
  func.func @transform_14(%arg0: i32) -> (i32, i32, i32) {
    %c0_i32 = arith.constant 0 : i32
    %c0_i32_0 = arith.constant 0 : i32
    %c0_i32_1 = arith.constant 0 : i32
    return %arg0, %c0_i32, %c0_i32_0 : i32, i32, i32
  }
  func.func @transform_15(%arg0: i32) -> (i32, i32, i32) {
    %c0_i32 = arith.constant 0 : i32
    %c0_i32_0 = arith.constant 0 : i32
    %c0_i32_1 = arith.constant 0 : i32
    return %arg0, %c0_i32, %c0_i32_0 : i32, i32, i32
  }
}

</mosaic_0001>

<llo_original>
// kernel: _lambda_.1
$region0: #{_lambda_.1}
  #allocation0 [shape = 'u32[]', space=smem, size = 0x4, offset = 0x4, fixed_abs, tag = 'smem constant byte address 0x4 - core index']
  #allocation1 [shape = 'u32[72,128]{1,0:T(1,128)}', space=vmem, size = 0x9000, scoped, tag = 'internal scratch']
  %s0 = inlined_call_operand.vmem [shape: f32[2,2,8,32], index: 0, kind: input, shape index: {}]
  %s1 = inlined_call_operand.vmem [shape: s32[2,1,8], index: 1, kind: input, shape index: {}]
  %s2 = inlined_call_operand.vmem [shape: s32[2,8,1], index: 2, kind: input, shape index: {}]
  %s3 = inlined_call_operand.vmem [shape: f32[6,4,32,24], index: 3, kind: input, shape index: {}]
  %s4 = inlined_call_operand.vmem [shape: f32[6,4,8,32], index: 4, kind: input, shape index: {}]
  %s5 = inlined_call_operand.vmem [shape: f32[6,4,1,24], index: 5, kind: input, shape index: {}]
  %s6 = inlined_call_operand.vmem [shape: f32[4,32,128], index: 6, kind: input, shape index: {}]
  %s7 = inlined_call_operand.vmem [shape: f32[4,1,128], index: 7, kind: input, shape index: {}]
  %s8 = inlined_call_operand.vmem [shape: f32[4,128,32], index: 8, kind: input, shape index: {}]
  %s9 = inlined_call_operand.vmem [shape: f32[2,6,32], index: 9, kind: input, shape index: {}]
  %s10 = inlined_call_operand.vmem [shape: f32[2,9,32], index: 10, kind: input, shape index: {}]
  %s11 = inlined_call_operand.vmem [shape: f32[4,32], index: 11, kind: input, shape index: {}]
  %s12 = inlined_call_operand.vmem [shape: f32[32,64], index: 12, kind: input, shape index: {}]
  %s13 = inlined_call_operand.hbm [shape: f32[2,8,64], index: 13, kind: output, shape index: {0}]
  %s14 = inlined_call_operand.vmem [shape: f32[2,1,1], index: 14, kind: output, shape index: {1}]
  %s15 = inlined_call_operand.vmem [shape: f32[2,1,1], index: 15, kind: output, shape index: {2}]
  %16 = xla_tuple %s13, %s14, %s15
  %s17 = sld [smem:[#allocation0]]
  $region101: #{_lambda_.1} parent=0
    _
  %s19 = ssub.s32 1, %s17
  %s20 = scalar_select 0, %s19, %s17
  $region1: #{_lambda_.1} parent=0
    #allocation2 [shape = 'u8[8192]{0}', space=vmem, size = 0x2000, scoped, tag = 'output window, operand 0']
    #allocation3 [shape = 's32[2]{0}', space=sflag, size = 0x8, scoped, tag = 'scoped memory for _lambda_.1']
    %21 = vsyncpa [#allocation3], 0
    %s22 = scalar_lea.sflag [#allocation3], 1
    %23 = vsyncpa %s22, 0
    loop: start=0, step=1, limit=4
    $region2: #{_lambda_.1} parent=1 // loop_pre_header
      _
    $region3: #{_lambda_.1} parent=1 // loop_header
      %s25 = sphi 0, %s29
      %p26 = scmp.ge.s32.totalorder %s25, 4
      %s35 = sphi 0, %s37
      %s38 = sphi 0, %s35
      %s39 = sphi 0, %s38
      %s55 = sphi 0, %s39
      %s61 = sphi 0, %s63
      %s64 = sphi 0, %s61
      %s65 = sphi 0, %s64
      %s81 = sphi 0, %s65
      %s87 = sphi 0, %s89
      %s90 = sphi 0, %s87
      %s91 = sphi 0, %s90
      %s107 = sphi 0, %s91
      %s111 = sphi 0, %s111
      %s113 = sphi 0, %s111
      %s114 = sphi 0, %s113
      %s128 = sphi 0, %s114
      %s132 = sphi 0, %s132
      %s134 = sphi 0, %s132
      %s135 = sphi 0, %s134
      %s149 = sphi 0, %s135
      %s153 = sphi 0, %s153
      %s155 = sphi 0, %s153
      %s156 = sphi 0, %s155
      %s170 = sphi 0, %s156
      %s174 = sphi 0, %s174
      %s176 = sphi 0, %s174
      %s177 = sphi 0, %s176
      %s191 = sphi 0, %s177
      %s195 = sphi 0, %s195
      %s197 = sphi 0, %s195
      %s198 = sphi 0, %s197
      %s212 = sphi 0, %s198
      %s216 = sphi 0, %s216
      %s218 = sphi 0, %s216
      %s219 = sphi 0, %s218
      %s233 = sphi 0, %s219
      %s237 = sphi 0, %s237
      %s239 = sphi 0, %s237
      %s240 = sphi 0, %s239
      %s254 = sphi 0, %s240
      %s258 = sphi 0, %s258
      %s260 = sphi 0, %s258
      %s261 = sphi 0, %s260
      %s275 = sphi 0, %s261
      %s279 = sphi 0, %s279
      %s281 = sphi 0, %s279
      %s282 = sphi 0, %s281
      %s296 = sphi 0, %s282
      %s300 = sphi 0, %s300
      %s302 = sphi 0, %s300
      %s303 = sphi 0, %s302
      %s317 = sphi 0, %s303
      %s323 = sphi 0, %s325
      %s326 = sphi 0, %s323
      %s327 = sphi 0, %s326
      %s343 = sphi 0, %s327
      %s349 = sphi 0, %s351
      %s352 = sphi 0, %s349
      %s353 = sphi 0, %s352
      %s369 = sphi 0, %s353
      %s375 = sphi 0, %s377
      %s378 = sphi 0, %s375
      %s379 = sphi 0, %s378
      %s395 = sphi 0, %s379
    $region4: #{_lambda_.1} parent=1 // loop_header_branch
      %28 = sbr.rel (%p26) target = $region8
    $region5: #{_lambda_.1} parent=1 // loop_body
      %s30 = ssub.s32 %s25, 1
      %s31 = ssub.s32 %s25, 2
      %s32 = sadd.s32 %s25, 1
      %s33 = ssub.s32 %s25, %s32
      %p34 = scmp.eq.s32.totalorder %s33, 0
      %s36 = sadd.s32 %s35, 1
      %s37 = scalar_select %p34, %s35, %s36
      %p40 = pneg %p34
      %p41 = scmp.eq.s32.totalorder %s25, 1
      %p42 = por %p40, %p41
      %p43 = scmp.ne.s32.totalorder %s35, %s38
      %p44 = scmp.eq.s32.totalorder %s25, 0
      %p45 = por %p43, %p44
      %p46 = scmp.ne.s32.totalorder %s35, %s38
      %p47 = scmp.eq.s32.totalorder %s30, 1
      %p48 = por %p46, %p47
      %p49 = scmp.ne.s32.totalorder %s38, %s39
      %p50 = scmp.eq.s32.totalorder %s30, 0
      %p51 = por %p49, %p50
      %p52 = scmp.ne.s32.totalorder %s38, %s39
      %p53 = scmp.eq.s32.totalorder %s31, 1
      %p54 = por %p52, %p53
      %p56 = scmp.ne.s32.totalorder %s39, %s55
      %p57 = scmp.eq.s32.totalorder %s31, 0
      %p58 = por %p56, %p57
      %s59 = ssub.s32 %s25, %s32
      %p60 = scmp.eq.s32.totalorder %s59, 0
      %s62 = sadd.s32 %s61, 1
      %s63 = scalar_select %p60, %s61, %s62
      %p66 = pneg %p60
      %p67 = scmp.eq.s32.totalorder %s25, 1
      %p68 = por %p66, %p67
      %p69 = scmp.ne.s32.totalorder %s61, %s64
      %p70 = scmp.eq.s32.totalorder %s25, 0
      %p71 = por %p69, %p70
      %p72 = scmp.ne.s32.totalorder %s61, %s64
      %p73 = scmp.eq.s32.totalorder %s30, 1
      %p74 = por %p72, %p73
      %p75 = scmp.ne.s32.totalorder %s64, %s65
      %p76 = scmp.eq.s32.totalorder %s30, 0
      %p77 = por %p75, %p76
      %p78 = scmp.ne.s32.totalorder %s64, %s65
      %p79 = scmp.eq.s32.totalorder %s31, 1
      %p80 = por %p78, %p79
      %p82 = scmp.ne.s32.totalorder %s65, %s81
      %p83 = scmp.eq.s32.totalorder %s31, 0
      %p84 = por %p82, %p83
      %s85 = ssub.s32 %s25, %s32
      %p86 = scmp.eq.s32.totalorder %s85, 0
      %s88 = sadd.s32 %s87, 1
      %s89 = scalar_select %p86, %s87, %s88
      %p92 = pneg %p86
      %p93 = scmp.eq.s32.totalorder %s25, 1
      %p94 = por %p92, %p93
      %p95 = scmp.ne.s32.totalorder %s87, %s90
      %p96 = scmp.eq.s32.totalorder %s25, 0
      %p97 = por %p95, %p96
      %p98 = scmp.ne.s32.totalorder %s87, %s90
      %p99 = scmp.eq.s32.totalorder %s30, 1
      %p100 = por %p98, %p99
      %p101 = scmp.ne.s32.totalorder %s90, %s91
      %p102 = scmp.eq.s32.totalorder %s30, 0
      %p103 = por %p101, %p102
      %p104 = scmp.ne.s32.totalorder %s90, %s91
      %p105 = scmp.eq.s32.totalorder %s31, 1
      %p106 = por %p104, %p105
      %p108 = scmp.ne.s32.totalorder %s91, %s107
      %p109 = scmp.eq.s32.totalorder %s31, 0
      %p110 = por %p108, %p109
      %s112 = sadd.s32 %s111, 1
      %p115 = scmp.eq.s32.totalorder %s25, 1
      %p116 = scmp.ne.s32.totalorder %s111, %s113
      %p117 = scmp.eq.s32.totalorder %s25, 0
      %p118 = por %p116, %p117
      %p119 = scmp.ne.s32.totalorder %s111, %s113
      %p120 = scmp.eq.s32.totalorder %s30, 1
      %p121 = por %p119, %p120
      %p122 = scmp.ne.s32.totalorder %s113, %s114
      %p123 = scmp.eq.s32.totalorder %s30, 0
      %p124 = por %p122, %p123
      %p125 = scmp.ne.s32.totalorder %s113, %s114
      %p126 = scmp.eq.s32.totalorder %s31, 1
      %p127 = por %p125, %p126
      %p129 = scmp.ne.s32.totalorder %s114, %s128
      %p130 = scmp.eq.s32.totalorder %s31, 0
      %p131 = por %p129, %p130
      %s133 = sadd.s32 %s132, 1
      %p136 = scmp.eq.s32.totalorder %s25, 1
      %p137 = scmp.ne.s32.totalorder %s132, %s134
      %p138 = scmp.eq.s32.totalorder %s25, 0
      %p139 = por %p137, %p138
      %p140 = scmp.ne.s32.totalorder %s132, %s134
      %p141 = scmp.eq.s32.totalorder %s30, 1
      %p142 = por %p140, %p141
      %p143 = scmp.ne.s32.totalorder %s134, %s135
      %p144 = scmp.eq.s32.totalorder %s30, 0
      %p145 = por %p143, %p144
      %p146 = scmp.ne.s32.totalorder %s134, %s135
      %p147 = scmp.eq.s32.totalorder %s31, 1
      %p148 = por %p146, %p147
      %p150 = scmp.ne.s32.totalorder %s135, %s149
      %p151 = scmp.eq.s32.totalorder %s31, 0
      %p152 = por %p150, %p151
      %s154 = sadd.s32 %s153, 1
      %p157 = scmp.eq.s32.totalorder %s25, 1
      %p158 = scmp.ne.s32.totalorder %s153, %s155
      %p159 = scmp.eq.s32.totalorder %s25, 0
      %p160 = por %p158, %p159
      %p161 = scmp.ne.s32.totalorder %s153, %s155
      %p162 = scmp.eq.s32.totalorder %s30, 1
      %p163 = por %p161, %p162
      %p164 = scmp.ne.s32.totalorder %s155, %s156
      %p165 = scmp.eq.s32.totalorder %s30, 0
      %p166 = por %p164, %p165
      %p167 = scmp.ne.s32.totalorder %s155, %s156
      %p168 = scmp.eq.s32.totalorder %s31, 1
      %p169 = por %p167, %p168
      %p171 = scmp.ne.s32.totalorder %s156, %s170
      %p172 = scmp.eq.s32.totalorder %s31, 0
      %p173 = por %p171, %p172
      %s175 = sadd.s32 %s174, 1
      %p178 = scmp.eq.s32.totalorder %s25, 1
      %p179 = scmp.ne.s32.totalorder %s174, %s176
      %p180 = scmp.eq.s32.totalorder %s25, 0
      %p181 = por %p179, %p180
      %p182 = scmp.ne.s32.totalorder %s174, %s176
      %p183 = scmp.eq.s32.totalorder %s30, 1
      %p184 = por %p182, %p183
      %p185 = scmp.ne.s32.totalorder %s176, %s177
      %p186 = scmp.eq.s32.totalorder %s30, 0
      %p187 = por %p185, %p186
      %p188 = scmp.ne.s32.totalorder %s176, %s177
      %p189 = scmp.eq.s32.totalorder %s31, 1
      %p190 = por %p188, %p189
      %p192 = scmp.ne.s32.totalorder %s177, %s191
      %p193 = scmp.eq.s32.totalorder %s31, 0
      %p194 = por %p192, %p193
      %s196 = sadd.s32 %s195, 1
      %p199 = scmp.eq.s32.totalorder %s25, 1
      %p200 = scmp.ne.s32.totalorder %s195, %s197
      %p201 = scmp.eq.s32.totalorder %s25, 0
      %p202 = por %p200, %p201
      %p203 = scmp.ne.s32.totalorder %s195, %s197
      %p204 = scmp.eq.s32.totalorder %s30, 1
      %p205 = por %p203, %p204
      %p206 = scmp.ne.s32.totalorder %s197, %s198
      %p207 = scmp.eq.s32.totalorder %s30, 0
      %p208 = por %p206, %p207
      %p209 = scmp.ne.s32.totalorder %s197, %s198
      %p210 = scmp.eq.s32.totalorder %s31, 1
      %p211 = por %p209, %p210
      %p213 = scmp.ne.s32.totalorder %s198, %s212
      %p214 = scmp.eq.s32.totalorder %s31, 0
      %p215 = por %p213, %p214
      %s217 = sadd.s32 %s216, 1
      %p220 = scmp.eq.s32.totalorder %s25, 1
      %p221 = scmp.ne.s32.totalorder %s216, %s218
      %p222 = scmp.eq.s32.totalorder %s25, 0
      %p223 = por %p221, %p222
      %p224 = scmp.ne.s32.totalorder %s216, %s218
      %p225 = scmp.eq.s32.totalorder %s30, 1
      %p226 = por %p224, %p225
      %p227 = scmp.ne.s32.totalorder %s218, %s219
      %p228 = scmp.eq.s32.totalorder %s30, 0
      %p229 = por %p227, %p228
      %p230 = scmp.ne.s32.totalorder %s218, %s219
      %p231 = scmp.eq.s32.totalorder %s31, 1
      %p232 = por %p230, %p231
      %p234 = scmp.ne.s32.totalorder %s219, %s233
      %p235 = scmp.eq.s32.totalorder %s31, 0
      %p236 = por %p234, %p235
      %s238 = sadd.s32 %s237, 1
      %p241 = scmp.eq.s32.totalorder %s25, 1
      %p242 = scmp.ne.s32.totalorder %s237, %s239
      %p243 = scmp.eq.s32.totalorder %s25, 0
      %p244 = por %p242, %p243
      %p245 = scmp.ne.s32.totalorder %s237, %s239
      %p246 = scmp.eq.s32.totalorder %s30, 1
      %p247 = por %p245, %p246
      %p248 = scmp.ne.s32.totalorder %s239, %s240
      %p249 = scmp.eq.s32.totalorder %s30, 0
      %p250 = por %p248, %p249
      %p251 = scmp.ne.s32.totalorder %s239, %s240
      %p252 = scmp.eq.s32.totalorder %s31, 1
      %p253 = por %p251, %p252
      %p255 = scmp.ne.s32.totalorder %s240, %s254
      %p256 = scmp.eq.s32.totalorder %s31, 0
      %p257 = por %p255, %p256
      %s259 = sadd.s32 %s258, 1
      %p262 = scmp.eq.s32.totalorder %s25, 1
      %p263 = scmp.ne.s32.totalorder %s258, %s260
      %p264 = scmp.eq.s32.totalorder %s25, 0
      %p265 = por %p263, %p264
      %p266 = scmp.ne.s32.totalorder %s258, %s260
      %p267 = scmp.eq.s32.totalorder %s30, 1
      %p268 = por %p266, %p267
      %p269 = scmp.ne.s32.totalorder %s260, %s261
      %p270 = scmp.eq.s32.totalorder %s30, 0
      %p271 = por %p269, %p270
      %p272 = scmp.ne.s32.totalorder %s260, %s261
      %p273 = scmp.eq.s32.totalorder %s31, 1
      %p274 = por %p272, %p273
      %p276 = scmp.ne.s32.totalorder %s261, %s275
      %p277 = scmp.eq.s32.totalorder %s31, 0
      %p278 = por %p276, %p277
      %s280 = sadd.s32 %s279, 1
      %p283 = scmp.eq.s32.totalorder %s25, 1
      %p284 = scmp.ne.s32.totalorder %s279, %s281
      %p285 = scmp.eq.s32.totalorder %s25, 0
      %p286 = por %p284, %p285
      %p287 = scmp.ne.s32.totalorder %s279, %s281
      %p288 = scmp.eq.s32.totalorder %s30, 1
      %p289 = por %p287, %p288
      %p290 = scmp.ne.s32.totalorder %s281, %s282
      %p291 = scmp.eq.s32.totalorder %s30, 0
      %p292 = por %p290, %p291
      %p293 = scmp.ne.s32.totalorder %s281, %s282
      %p294 = scmp.eq.s32.totalorder %s31, 1
      %p295 = por %p293, %p294
      %p297 = scmp.ne.s32.totalorder %s282, %s296
      %p298 = scmp.eq.s32.totalorder %s31, 0
      %p299 = por %p297, %p298
      %s301 = sadd.s32 %s300, 1
      %p304 = scmp.eq.s32.totalorder %s25, 1
      %p305 = scmp.ne.s32.totalorder %s300, %s302
      %p306 = scmp.eq.s32.totalorder %s25, 0
      %p307 = por %p305, %p306
      %p308 = scmp.ne.s32.totalorder %s300, %s302
      %p309 = scmp.eq.s32.totalorder %s30, 1
      %p310 = por %p308, %p309
      %p311 = scmp.ne.s32.totalorder %s302, %s303
      %p312 = scmp.eq.s32.totalorder %s30, 0
      %p313 = por %p311, %p312
      %p314 = scmp.ne.s32.totalorder %s302, %s303
      %p315 = scmp.eq.s32.totalorder %s31, 1
      %p316 = por %p314, %p315
      %p318 = scmp.ne.s32.totalorder %s303, %s317
      %p319 = scmp.eq.s32.totalorder %s31, 0
      %p320 = por %p318, %p319
      %s321 = ssub.s32 %s25, %s32
      %p322 = scmp.eq.s32.totalorder %s321, 0
      %s324 = sadd.s32 %s323, 1
      %s325 = scalar_select %p322, %s323, %s324
      %p328 = pneg %p322
      %p329 = scmp.eq.s32.totalorder %s25, 1
      %p330 = por %p328, %p329
      %p331 = scmp.ne.s32.totalorder %s323, %s326
      %p332 = scmp.eq.s32.totalorder %s25, 0
      %p333 = por %p331, %p332
      %p334 = scmp.ne.s32.totalorder %s323, %s326
      %p335 = scmp.eq.s32.totalorder %s30, 1
      %p336 = por %p334, %p335
      %p337 = scmp.ne.s32.totalorder %s326, %s327
      %p338 = scmp.eq.s32.totalorder %s30, 0
      %p339 = por %p337, %p338
      %p340 = scmp.ne.s32.totalorder %s326, %s327
      %p341 = scmp.eq.s32.totalorder %s31, 1
      %p342 = por %p340, %p341
      %p344 = scmp.ne.s32.totalorder %s327, %s343
      %p345 = scmp.eq.s32.totalorder %s31, 0
      %p346 = por %p344, %p345
      %s347 = ssub.s32 %s25, %s32
      %p348 = scmp.eq.s32.totalorder %s347, 0
      %s350 = sadd.s32 %s349, 1
      %s351 = scalar_select %p348, %s349, %s350
      %p354 = pneg %p348
      %p355 = scmp.eq.s32.totalorder %s25, 1
      %p356 = por %p354, %p355
      %p357 = scmp.ne.s32.totalorder %s349, %s352
      %p358 = scmp.eq.s32.totalorder %s25, 0
      %p359 = por %p357, %p358
      %p360 = scmp.ne.s32.totalorder %s349, %s352
      %p361 = scmp.eq.s32.totalorder %s30, 1
      %p362 = por %p360, %p361
      %p363 = scmp.ne.s32.totalorder %s352, %s353
      %p364 = scmp.eq.s32.totalorder %s30, 0
      %p365 = por %p363, %p364
      %p366 = scmp.ne.s32.totalorder %s352, %s353
      %p367 = scmp.eq.s32.totalorder %s31, 1
      %p368 = por %p366, %p367
      %p370 = scmp.ne.s32.totalorder %s353, %s369
      %p371 = scmp.eq.s32.totalorder %s31, 0
      %p372 = por %p370, %p371
      %s373 = ssub.s32 %s25, %s32
      %p374 = scmp.eq.s32.totalorder %s373, 0
      %s376 = sadd.s32 %s375, 1
      %s377 = scalar_select %p374, %s375, %s376
      %p380 = pneg %p374
      %p381 = scmp.eq.s32.totalorder %s25, 1
      %p382 = por %p380, %p381
      %p383 = scmp.ne.s32.totalorder %s375, %s378
      %p384 = scmp.eq.s32.totalorder %s25, 0
      %p385 = por %p383, %p384
      %p386 = scmp.ne.s32.totalorder %s375, %s378
      %p387 = scmp.eq.s32.totalorder %s30, 1
      %p388 = por %p386, %p387
      %p389 = scmp.ne.s32.totalorder %s378, %s379
      %p390 = scmp.eq.s32.totalorder %s30, 0
      %p391 = por %p389, %p390
      %p392 = scmp.ne.s32.totalorder %s378, %s379
      %p393 = scmp.eq.s32.totalorder %s31, 1
      %p394 = por %p392, %p393
      %p396 = scmp.ne.s32.totalorder %s379, %s395
      %p397 = scmp.eq.s32.totalorder %s31, 0
      %p398 = por %p396, %p397
      %p399 = scmp.le.s32.totalorder 1, %s25
      %p400 = scmp.lt.s32.totalorder %s25, 3
      %p401 = pnand %p399, %p400
      %p402 = pneg %p401
      // Predicated region
      $region9: #{_lambda_.1} parent=5 // pred_check
        _
      $region10: #{_lambda_.1} parent=5 // pred_check_branch
        %404 = sbr.rel (%p401) target = $region12
      $region11: #{_lambda_.1} parent=5 // pred_region
        %s405 = ssub.s32 %s25, 1
        // Predicated region
        $region13: #{_lambda_.1} parent=11 // pred_check
          %p406 = pneg %p124
        $region14: #{_lambda_.1} parent=11 // pred_check_branch
          %408 = sbr.rel (%p406) target = $region16
        $region15: #{_lambda_.1} parent=11 // pred_region
          _
        $region16: #{_lambda_.1} parent=11 // pred_fallthru
          _
        // Predicated region
        $region17: #{_lambda_.1} parent=11 // pred_check
          %p409 = pneg %p145
        $region18: #{_lambda_.1} parent=11 // pred_check_branch
          %411 = sbr.rel (%p409) target = $region20
        $region19: #{_lambda_.1} parent=11 // pred_region
          _
        $region20: #{_lambda_.1} parent=11 // pred_fallthru
          _
        // Predicated region
        $region21: #{_lambda_.1} parent=11 // pred_check
          %p412 = pneg %p166
        $region22: #{_lambda_.1} parent=11 // pred_check_branch
          %414 = sbr.rel (%p412) target = $region24
        $region23: #{_lambda_.1} parent=11 // pred_region
          _
        $region24: #{_lambda_.1} parent=11 // pred_fallthru
          _
        // Predicated region
        $region25: #{_lambda_.1} parent=11 // pred_check
          %p415 = pneg %p187
        $region26: #{_lambda_.1} parent=11 // pred_check_branch
          %417 = sbr.rel (%p415) target = $region28
        $region27: #{_lambda_.1} parent=11 // pred_region
          _
        $region28: #{_lambda_.1} parent=11 // pred_fallthru
          _
        // Predicated region
        $region29: #{_lambda_.1} parent=11 // pred_check
          %p418 = pneg %p208
        $region30: #{_lambda_.1} parent=11 // pred_check_branch
          %420 = sbr.rel (%p418) target = $region32
        $region31: #{_lambda_.1} parent=11 // pred_region
          _
        $region32: #{_lambda_.1} parent=11 // pred_fallthru
          _
        // Predicated region
        $region33: #{_lambda_.1} parent=11 // pred_check
          %p421 = pneg %p229
        $region34: #{_lambda_.1} parent=11 // pred_check_branch
          %423 = sbr.rel (%p421) target = $region36
        $region35: #{_lambda_.1} parent=11 // pred_region
          _
        $region36: #{_lambda_.1} parent=11 // pred_fallthru
          _
        // Predicated region
        $region37: #{_lambda_.1} parent=11 // pred_check
          %p424 = pneg %p250
        $region38: #{_lambda_.1} parent=11 // pred_check_branch
          %426 = sbr.rel (%p424) target = $region40
        $region39: #{_lambda_.1} parent=11 // pred_region
          _
        $region40: #{_lambda_.1} parent=11 // pred_fallthru
          _
        // Predicated region
        $region41: #{_lambda_.1} parent=11 // pred_check
          %p427 = pneg %p271
        $region42: #{_lambda_.1} parent=11 // pred_check_branch
          %429 = sbr.rel (%p427) target = $region44
        $region43: #{_lambda_.1} parent=11 // pred_region
          _
        $region44: #{_lambda_.1} parent=11 // pred_fallthru
          _
        // Predicated region
        $region45: #{_lambda_.1} parent=11 // pred_check
          %p430 = pneg %p292
        $region46: #{_lambda_.1} parent=11 // pred_check_branch
          %432 = sbr.rel (%p430) target = $region48
        $region47: #{_lambda_.1} parent=11 // pred_region
          _
        $region48: #{_lambda_.1} parent=11 // pred_fallthru
          _
        // Predicated region
        $region49: #{_lambda_.1} parent=11 // pred_check
          %p433 = pneg %p313
        $region50: #{_lambda_.1} parent=11 // pred_check_branch
          %435 = sbr.rel (%p433) target = $region52
        $region51: #{_lambda_.1} parent=11 // pred_region
          _
        $region52: #{_lambda_.1} parent=11 // pred_fallthru
          _
      $region12: #{_lambda_.1} parent=5 // pred_fallthru
        _
      %p436 = scmp.lt.s32.totalorder %s25, 2
      // Predicated region
      $region53: #{_lambda_.1} parent=5 // pred_check
        %p437 = pneg %p436
      $region54: #{_lambda_.1} parent=5 // pred_check_branch
        %439 = sbr.rel (%p437) target = $region56
      $region55: #{_lambda_.1} parent=5 // pred_region
        // Predicated region
        $region57: #{_lambda_.1} parent=55 // pred_check
          %p440 = pneg %p45
        $region58: #{_lambda_.1} parent=55 // pred_check_branch
          %442 = sbr.rel (%p440) target = $region60
        $region59: #{_lambda_.1} parent=55 // pred_region
          %p443 = scmp.lt.s32.totalorder %s25, 1
          %s444 = scalar_select %p443, %s25, 1
          %s445 = smul.addr %s444, 2
          %s446 = smul.addr %s445, 8
          %s447 = scalar_lea.vmem %s0, %s446
        $region60: #{_lambda_.1} parent=55 // pred_fallthru
          _
        // Predicated region
        $region61: #{_lambda_.1} parent=55 // pred_check
          %p448 = pneg %p71
        $region62: #{_lambda_.1} parent=55 // pred_check_branch
          %450 = sbr.rel (%p448) target = $region64
        $region63: #{_lambda_.1} parent=55 // pred_region
          %p451 = scmp.lt.s32.totalorder %s25, 1
          %s452 = scalar_select %p451, %s25, 1
          %s453 = scalar_lea.vmem %s1, %s452
        $region64: #{_lambda_.1} parent=55 // pred_fallthru
          _
        // Predicated region
        $region65: #{_lambda_.1} parent=55 // pred_check
          %p454 = pneg %p97
        $region66: #{_lambda_.1} parent=55 // pred_check_branch
          %456 = sbr.rel (%p454) target = $region68
        $region67: #{_lambda_.1} parent=55 // pred_region
          %p457 = scmp.lt.s32.totalorder %s25, 1
          %s458 = scalar_select %p457, %s25, 1
          %s459 = smul.addr %s458, 8
          %s460 = scalar_lea.vmem %s2, %s459
        $region68: #{_lambda_.1} parent=55 // pred_fallthru
          _
      $region56: #{_lambda_.1} parent=5 // pred_fallthru
        _
      %p461 = scmp.le.s32.totalorder 1, %s25
      %p462 = scmp.lt.s32.totalorder %s25, 3
      %p463 = pnand %p461, %p462
      %p464 = pneg %p463
      // Predicated region
      $region69: #{_lambda_.1} parent=5 // pred_check
        _
      $region70: #{_lambda_.1} parent=5 // pred_check_branch
        %466 = sbr.rel (%p463) target = $region72
      $region71: #{_lambda_.1} parent=5 // pred_region
        %s467 = ssub.s32 %s25, 1
        %p468 = scmp.lt.s32.totalorder %s30, 1
        %s469 = scalar_select %p468, %s30, 1
        %s470 = smul.addr %s469, 2
        %s471 = smul.addr %s470, 8
        %s472 = scalar_lea.vmem %s0, %s471
        %p473 = pneg %p51
        %p474 = pneg %p48
        %p475 = scmp.lt.s32.totalorder %s30, 1
        %s476 = scalar_select %p475, %s30, 1
        %s477 = scalar_lea.vmem %s1, %s476
        %p478 = pneg %p77
        %p479 = pneg %p74
        %p480 = scmp.lt.s32.totalorder %s30, 1
        %s481 = scalar_select %p480, %s30, 1
        %s482 = smul.addr %s481, 8
        %s483 = scalar_lea.vmem %s2, %s482
        %p484 = pneg %p103
        %p485 = pneg %p100
        %p486 = pneg %p124
        %p487 = pneg %p121
        %p488 = pneg %p145
        %p489 = pneg %p142
        %p490 = pneg %p166
        %p491 = pneg %p163
        %p492 = pneg %p187
        %p493 = pneg %p184
        %p494 = pneg %p208
        %p495 = pneg %p205
        %p496 = pneg %p229
        %p497 = pneg %p226
        %p498 = pneg %p250
        %p499 = pneg %p247
        %p500 = pneg %p271
        %p501 = pneg %p268
        %p502 = pneg %p292
        %p503 = pneg %p289
        %p504 = pneg %p313
        %p505 = pneg %p310
        %p506 = pneg %p339
        %p507 = pneg %p336
        %s508 = sand.u32 %s326, 1
        %s509 = scalar_lea.sflag [#allocation3], %s508
        %s510 = sand.u32 %s326, 1
        %s511 = smul.addr %s510, 8
        %s512 = scalar_lea.vmem [#allocation2], %s511
        %p513 = pneg %p365
        %p514 = pneg %p362
        %p515 = scmp.lt.s32.totalorder %s30, 1
        %s516 = scalar_select %p515, %s30, 1
        %s517 = scalar_lea.vmem %s14, %s516
        %p518 = pneg %p391
        %p519 = pneg %p388
        %p520 = scmp.lt.s32.totalorder %s30, 1
        %s521 = scalar_select %p520, %s30, 1
        %s522 = scalar_lea.vmem %s15, %s521
        %p523 = scmp.lt.s32.totalorder %s30, 1
        %s524 = scalar_select %p523, %s30, 1
        %s525 = smul.addr %s524, 2
        %s526 = smul.addr %s525, 8
        %s527 = scalar_lea.vmem %s0, %s526
        %p528 = scmp.lt.s32.totalorder %s30, 1
        %s529 = scalar_select %p528, %s30, 1
        %s530 = scalar_lea.vmem %s1, %s529
        %p531 = scmp.lt.s32.totalorder %s30, 1
        %s532 = scalar_select %p531, %s30, 1
        %s533 = smul.addr %s532, 8
        %s534 = scalar_lea.vmem %s2, %s533
        %p535 = scmp.lt.s32.totalorder %s30, 1
        %s536 = scalar_select %p535, %s30, 1
        %s537 = scalar_lea.vmem %s14, %s536
        %p538 = scmp.lt.s32.totalorder %s30, 1
        %s539 = scalar_select %p538, %s30, 1
        %s540 = scalar_lea.vmem %s15, %s539
        %v542 = vld [vmem:[%s527] sm:$0xff]
        %s543 = scalar_lea.vmem %s527, 8
        %v544 = vld [vmem:[%s543] sm:$0xff]
        %v545 = vld [vmem:[%s530] sm:$0x1]
        %vm546 = vcmp.gt.s32.totalorder %v545, 0
        %v547 = vsel %vm546, 0.0, -1e+30
        %v548 = vlaneseq
        %v549 = vshrl.u32 %v548, 7
        %v550 = vlaneseq
        %v551 = vand.u32 %v550, 127
        %vm552 = vcmp.le.s32.totalorder %v551, %v549
        %v553 = vsel %vm552, 0.0, -1e+30
        %v554 = vld [vmem:[%s9] sm:$0x3f]
        %vm555 = vcmask 261120
        %v556 = vsel %vm555, %v542, 0.0
        %557 = vadd.xlane.f32.xlu0 %v556
        %v558 = vpop.xlane.xlu0 %557
        %v559 = vrcp.pop 32.0
        %v560 = vmul.f32 32.0, %v559
        %v561 = vsub.f32 1.0, %v560
        %v562 = vmul.f32 %v559, %v561
        %v563 = vadd.f32 %v559, %v562
        %vm564 = vweird.f32 %v559
        %v565 = vsel %vm564, %v559, %v563
        %v566 = vmul.f32 %v558, %v565
        %v567 = vsub.f32 %v542, %v566
        %v568 = vmul.f32 %v567, %v567
        %v569 = vsel %vm555, %v568, 0.0
        %570 = vadd.xlane.f32.xlu0 %v569
        %v571 = vpop.xlane.xlu0 %570
        %v572 = vmul.f32 %v571, %v565
        %v573 = vadd.f32 %v572, 1e-05
        %v574 = vrsqrt.pop %v573
        %v575 = vmul.f32 %v574, %v573
        %v576 = vmul.f32 %v575, %v574
        %v577 = vmul.f32 0.5, %v576
        %v578 = vsub.f32 1.5, %v577
        %v579 = vmul.f32 %v574, %v578
        %vm580 = vweird.f32 %v573
        %vm581 = vweird.f32 %v574
        %vm582 = vmor %vm580, %vm581
        %v583 = vsel %vm582, %v574, %v579
        %v584 = vmul.f32 %v567, %v583
        %v585 = vperm.slane %v554, 0
        %v586 = vmul.f32 %v584, %v585
        %v587 = vperm.slane %v554, 1
        %v588 = vadd.f32 %v586, %v587
        %v589 = vld [vmem:[%s3] sm:$0xff]
        %v590 = vld [vmem:[%s3 + $0x8] sm:$0xff]
        %v591 = vld [vmem:[%s3 + $0x10] sm:$0xff]
        %v592 = vld [vmem:[%s3 + $0x18] sm:$0xff]
        %v593 = vld [vmem:[%s3 + $0x20] sm:$0xff]
        %v594 = vld [vmem:[%s3 + $0x28] sm:$0xff]
        %v595 = vld [vmem:[%s3 + $0x30] sm:$0xff]
        %v596 = vld [vmem:[%s3 + $0x38] sm:$0xff]
        %v597 = vld [vmem:[%s3 + $0x40] sm:$0xff]
        %v598 = vld [vmem:[%s3 + $0x48] sm:$0xff]
        %v599 = vld [vmem:[%s3 + $0x50] sm:$0xff]
        %v600 = vld [vmem:[%s3 + $0x58] sm:$0xff]
        %v601 = vld [vmem:[%s3 + $0x60] sm:$0xff]
        %v602 = vld [vmem:[%s3 + $0x68] sm:$0xff]
        %v603 = vld [vmem:[%s3 + $0x70] sm:$0xff]
        %v604 = vld [vmem:[%s3 + $0x78] sm:$0xff]
        %v605 = vld [vmem:[%s5] sm:$0x1]
        %v606 = vld [vmem:[%s5 + $0x1] sm:$0x1]
        %v607 = vld [vmem:[%s5 + $0x2] sm:$0x1]
        %v608 = vld [vmem:[%s5 + $0x3] sm:$0x1]
        %v609 = vld [vmem:[%s4] sm:$0xff]
        %v610 = vld [vmem:[%s4 + $0x8] sm:$0xff]
        %v611 = vld [vmem:[%s4 + $0x10] sm:$0xff]
        %v612 = vld [vmem:[%s4 + $0x18] sm:$0xff]
        %v613 = vpack.c.bf16 %v588, %v588
        %v614 = vpack.c.bf16 %v589, %v589
        %v615 = vpack.c.bf16 %v590, %v590
        %v616 = vpack.c.bf16 %v591, %v591
        %v617 = vpack.c.bf16 %v592, %v592
        %v618 = vpack.c.bf16 %v593, %v593
        %v619 = vpack.c.bf16 %v594, %v594
        %v620 = vpack.c.bf16 %v595, %v595
        %v621 = vpack.c.bf16 %v596, %v596
        %v622 = vpack.c.bf16 %v597, %v597
        %v623 = vpack.c.bf16 %v598, %v598
        %v624 = vpack.c.bf16 %v599, %v599
        %v625 = vpack.c.bf16 %v600, %v600
        %v626 = vpack.c.bf16 %v601, %v601
        %v627 = vpack.c.bf16 %v602, %v602
        %v628 = vpack.c.bf16 %v603, %v603
        %v629 = vpack.c.bf16 %v604, %v604
        %v634 = vperm.slane %v605, 0
        %v635 = vperm.slane %v606, 0
        %v636 = vperm.slane %v607, 0
        %v637 = vperm.slane %v608, 0
        %v646 = vunpack.c.l.b16 %v614
        %v647 = vunpack.c.l.b16 %v615
        %v648 = vunpack.c.l.b16 %v616
        %v649 = vunpack.c.l.b16 %v617
        %v650 = vpack.c.b16 %v647, %v646
        %v651 = vpack.c.b16 %v649, %v648
        %v655 = vsel %vm555, %v613, 0
        %657 = vmatpush.bf16.msra.mxu0 0
        %658 = vmatpush.bf16.msra.mxu0 0
        %659 = vmatpush.bf16.msra.mxu0 0
        %660 = vmatpush.bf16.msra.mxu0 0
        %661 = vmatpush.bf16.msra.mxu0 0
        %662 = vmatpush.bf16.msra.mxu0 0
        %663 = vmatpush.bf16.msra.mxu0 %v651
        %664 = vmatpush.bf16.msra.mxu0 %v650
        %665 = vmatmul.bf16.gmra.mxu0 %v655
        %v666 = vpop.f32.mrf.mxu0
        %v667 = vadd.f32 %v634, %v666
        %v668 = vpop.f32.mrf.mxu0
        %669 = vdwg.mxu0
        %v674 = vunpack.c.l.b16 %v618
        %v675 = vunpack.c.l.b16 %v619
        %v676 = vunpack.c.l.b16 %v620
        %v677 = vunpack.c.l.b16 %v621
        %v678 = vpack.c.b16 %v675, %v674
        %v679 = vpack.c.b16 %v677, %v676
        %682 = vmatpush.bf16.msra.mxu0 0
        %683 = vmatpush.bf16.msra.mxu0 0
        %684 = vmatpush.bf16.msra.mxu0 0
        %685 = vmatpush.bf16.msra.mxu0 0
        %686 = vmatpush.bf16.msra.mxu0 0
        %687 = vmatpush.bf16.msra.mxu0 0
        %688 = vmatpush.bf16.msra.mxu0 %v679
        %689 = vmatpush.bf16.msra.mxu0 %v678
        %690 = vmatmul.bf16.gmra.mxu0 %v655
        %v691 = vpop.f32.mrf.mxu0
        %v692 = vadd.f32 %v635, %v691
        %v693 = vpop.f32.mrf.mxu0
        %694 = vdwg.mxu0
        %v699 = vunpack.c.l.b16 %v622
        %v700 = vunpack.c.l.b16 %v623
        %v701 = vunpack.c.l.b16 %v624
        %v702 = vunpack.c.l.b16 %v625
        %v703 = vpack.c.b16 %v700, %v699
        %v704 = vpack.c.b16 %v702, %v701
        %707 = vmatpush.bf16.msra.mxu0 0
        %708 = vmatpush.bf16.msra.mxu0 0
        %709 = vmatpush.bf16.msra.mxu0 0
        %710 = vmatpush.bf16.msra.mxu0 0
        %711 = vmatpush.bf16.msra.mxu0 0
        %712 = vmatpush.bf16.msra.mxu0 0
        %713 = vmatpush.bf16.msra.mxu0 %v704
        %714 = vmatpush.bf16.msra.mxu0 %v703
        %715 = vmatmul.bf16.gmra.mxu0 %v655
        %v716 = vpop.f32.mrf.mxu0
        %v717 = vadd.f32 %v636, %v716
        %v718 = vpop.f32.mrf.mxu0
        %719 = vdwg.mxu0
        %v724 = vunpack.c.l.b16 %v626
        %v725 = vunpack.c.l.b16 %v627
        %v726 = vunpack.c.l.b16 %v628
        %v727 = vunpack.c.l.b16 %v629
        %v728 = vpack.c.b16 %v725, %v724
        %v729 = vpack.c.b16 %v727, %v726
        %732 = vmatpush.bf16.msra.mxu0 0
        %733 = vmatpush.bf16.msra.mxu0 0
        %734 = vmatpush.bf16.msra.mxu0 0
        %735 = vmatpush.bf16.msra.mxu0 0
        %736 = vmatpush.bf16.msra.mxu0 0
        %737 = vmatpush.bf16.msra.mxu0 0
        %738 = vmatpush.bf16.msra.mxu0 %v729
        %739 = vmatpush.bf16.msra.mxu0 %v728
        %740 = vmatmul.bf16.gmra.mxu0 %v655
        %v741 = vpop.f32.mrf.mxu0
        %v742 = vadd.f32 %v637, %v741
        %v743 = vpop.f32.mrf.mxu0
        %744 = vdwg.mxu0
        %v745 = vpack.c.bf16 %v667, %v667
        %v746 = vpack.c.bf16 %v692, %v692
        %v747 = vpack.c.bf16 %v717, %v717
        %v748 = vpack.c.bf16 %v742, %v742
        %v750 = vunpack.c.l.b16 %v745
        %v751 = vpack.c.b16 %v750, %v750
        %752 = vrot.lane.b32.xlu0 %v751, 120
        %v753 = vpop.permute.xlu0 %752
        %vm754 = vcmask 64512
        %v756 = vsel %vm754, %v745, 0
        %v759 = vsel %vm754, %v753, 0
        %761 = vmatpush.bf16.xpose.msra.mxu0 0
        %762 = vmatpush.bf16.xpose.msra.mxu0 0
        %763 = vmatpush.bf16.xpose.msra.mxu0 0
        %764 = vmatpush.bf16.xpose.msra.mxu0 0
        %765 = vmatpush.bf16.xpose.msra.mxu0 0
        %766 = vmatpush.bf16.xpose.msra.mxu0 0
        %767 = vmatpush.bf16.xpose.msra.mxu0 0
        %768 = vmatpush.bf16.xpose.msra.mxu0 %v759
        %769 = vmatmul.bf16.gmra.mxu0 %v756
        %v770 = vpop.f32.mrf.mxu0
        %v771 = vadd.f32 0.0, %v770
        %v772 = vpop.f32.mrf.mxu0
        %773 = vdwg.mxu0
        %v775 = vunpack.c.l.b16 %v746
        %v776 = vpack.c.b16 %v775, %v775
        %777 = vrot.lane.b32.xlu0 %v776, 120
        %v778 = vpop.permute.xlu0 %777
        %v780 = vsel %vm754, %v746, 0
        %v783 = vsel %vm754, %v778, 0
        %785 = vmatpush.bf16.xpose.msra.mxu0 0
        %786 = vmatpush.bf16.xpose.msra.mxu0 0
        %787 = vmatpush.bf16.xpose.msra.mxu0 0
        %788 = vmatpush.bf16.xpose.msra.mxu0 0
        %789 = vmatpush.bf16.xpose.msra.mxu0 0
        %790 = vmatpush.bf16.xpose.msra.mxu0 0
        %791 = vmatpush.bf16.xpose.msra.mxu0 0
        %792 = vmatpush.bf16.xpose.msra.mxu0 %v783
        %793 = vmatmul.bf16.gmra.mxu0 %v780
        %v794 = vpop.f32.mrf.mxu0
        %v795 = vadd.f32 0.0, %v794
        %v796 = vpop.f32.mrf.mxu0
        %797 = vdwg.mxu0
        %v799 = vunpack.c.l.b16 %v747
        %v800 = vpack.c.b16 %v799, %v799
        %801 = vrot.lane.b32.xlu0 %v800, 120
        %v802 = vpop.permute.xlu0 %801
        %v804 = vsel %vm754, %v747, 0
        %v807 = vsel %vm754, %v802, 0
        %809 = vmatpush.bf16.xpose.msra.mxu0 0
        %810 = vmatpush.bf16.xpose.msra.mxu0 0
        %811 = vmatpush.bf16.xpose.msra.mxu0 0
        %812 = vmatpush.bf16.xpose.msra.mxu0 0
        %813 = vmatpush.bf16.xpose.msra.mxu0 0
        %814 = vmatpush.bf16.xpose.msra.mxu0 0
        %815 = vmatpush.bf16.xpose.msra.mxu0 0
        %816 = vmatpush.bf16.xpose.msra.mxu0 %v807
        %817 = vmatmul.bf16.gmra.mxu0 %v804
        %v818 = vpop.f32.mrf.mxu0
        %v819 = vadd.f32 0.0, %v818
        %v820 = vpop.f32.mrf.mxu0
        %821 = vdwg.mxu0
        %v823 = vunpack.c.l.b16 %v748
        %v824 = vpack.c.b16 %v823, %v823
        %825 = vrot.lane.b32.xlu0 %v824, 120
        %v826 = vpop.permute.xlu0 %825
        %v828 = vsel %vm754, %v748, 0
        %v831 = vsel %vm754, %v826, 0
        %833 = vmatpush.bf16.xpose.msra.mxu0 0
        %834 = vmatpush.bf16.xpose.msra.mxu0 0
        %835 = vmatpush.bf16.xpose.msra.mxu0 0
        %836 = vmatpush.bf16.xpose.msra.mxu0 0
        %837 = vmatpush.bf16.xpose.msra.mxu0 0
        %838 = vmatpush.bf16.xpose.msra.mxu0 0
        %839 = vmatpush.bf16.xpose.msra.mxu0 0
        %840 = vmatpush.bf16.xpose.msra.mxu0 %v831
        %841 = vmatmul.bf16.gmra.mxu0 %v828
        %v842 = vpop.f32.mrf.mxu0
        %v843 = vadd.f32 0.0, %v842
        %v844 = vpop.f32.mrf.mxu0
        %845 = vdwg.mxu0
        %v846 = vmul.f32 %v771, 0.35355338
        %v847 = vmul.f32 %v795, 0.35355338
        %v848 = vmul.f32 %v819, 0.35355338
        %v849 = vmul.f32 %v843, 0.35355338
        %v851 = vperm.slane %v547, 0
        %v853 = vadd.f32 %v846, %v851
        %v854 = vadd.f32 %v847, %v851
        %v855 = vadd.f32 %v848, %v851
        %v856 = vadd.f32 %v849, %v851
        %v857 = vsel %vm754, %v853, -inf
        %858 = vmax.xlane.f32.xlu0 %v857
        %v859 = vpop.xlane.xlu0 %858
        %v860 = vsel %vm754, %v854, -inf
        %861 = vmax.xlane.f32.xlu0 %v860
        %v862 = vpop.xlane.xlu0 %861
        %v863 = vsel %vm754, %v855, -inf
        %864 = vmax.xlane.f32.xlu0 %v863
        %v865 = vpop.xlane.xlu0 %864
        %v866 = vsel %vm754, %v856, -inf
        %867 = vmax.xlane.f32.xlu0 %v866
        %v868 = vpop.xlane.xlu0 %867
        %v869 = vsub.f32 %v853, %v859
        %v870 = vsub.f32 %v854, %v862
        %v871 = vsub.f32 %v855, %v865
        %v872 = vsub.f32 %v856, %v868
        %v873 = vmul.f32 %v869, 1.442695
        %v874 = vpow.pop %v873
        %v875 = vmul.f32 %v870, 1.442695
        %v876 = vpow.pop %v875
        %v877 = vmul.f32 %v871, 1.442695
        %v878 = vpow.pop %v877
        %v879 = vmul.f32 %v872, 1.442695
        %v880 = vpow.pop %v879
        %v881 = vsel %vm754, %v874, 0.0
        %882 = vadd.xlane.f32.xlu0 %v881
        %v883 = vpop.xlane.xlu0 %882
        %v884 = vsel %vm754, %v876, 0.0
        %885 = vadd.xlane.f32.xlu0 %v884
        %v886 = vpop.xlane.xlu0 %885
        %v887 = vsel %vm754, %v878, 0.0
        %888 = vadd.xlane.f32.xlu0 %v887
        %v889 = vpop.xlane.xlu0 %888
        %v890 = vsel %vm754, %v880, 0.0
        %891 = vadd.xlane.f32.xlu0 %v890
        %v892 = vpop.xlane.xlu0 %891
        %v893 = vrcp.pop %v883
        %v894 = vrcp.pop %v886
        %v895 = vrcp.pop %v889
        %v896 = vrcp.pop %v892
        %v897 = vmul.f32 %v874, %v893
        %v898 = vmul.f32 %v876, %v894
        %v899 = vmul.f32 %v878, %v895
        %v900 = vmul.f32 %v880, %v896
        %v901 = vpack.c.bf16 %v897, %v897
        %v902 = vpack.c.bf16 %v898, %v898
        %v903 = vpack.c.bf16 %v899, %v899
        %v904 = vpack.c.bf16 %v900, %v900
        %905 = vrot.lane.b32.xlu0 %v751, 112
        %v906 = vpop.permute.xlu0 %905
        %v908 = vsel %vm754, %v901, 0
        %vm910 = vcmask 1043456
        %v912 = vsel %vm910, %v906, 0
        %914 = vmatpush.bf16.msra.mxu0 0
        %915 = vmatpush.bf16.msra.mxu0 0
        %916 = vmatpush.bf16.msra.mxu0 0
        %917 = vmatpush.bf16.msra.mxu0 0
        %918 = vmatpush.bf16.msra.mxu0 0
        %919 = vmatpush.bf16.msra.mxu0 0
        %920 = vmatpush.bf16.msra.mxu0 0
        %921 = vmatpush.bf16.msra.mxu0 %v912
        %922 = vmatmul.bf16.gmra.mxu0 %v908
        %v923 = vpop.f32.mrf.mxu0
        %v924 = vadd.f32 0.0, %v923
        %v925 = vpop.f32.mrf.mxu0
        %926 = vdwg.mxu0
        %927 = vrot.lane.b32.xlu0 %v776, 112
        %v928 = vpop.permute.xlu0 %927
        %v930 = vsel %vm754, %v902, 0
        %v933 = vsel %vm910, %v928, 0
        %935 = vmatpush.bf16.msra.mxu0 0
        %936 = vmatpush.bf16.msra.mxu0 0
        %937 = vmatpush.bf16.msra.mxu0 0
        %938 = vmatpush.bf16.msra.mxu0 0
        %939 = vmatpush.bf16.msra.mxu0 0
        %940 = vmatpush.bf16.msra.mxu0 0
        %941 = vmatpush.bf16.msra.mxu0 0
        %942 = vmatpush.bf16.msra.mxu0 %v933
        %943 = vmatmul.bf16.gmra.mxu0 %v930
        %v944 = vpop.f32.mrf.mxu0
        %v945 = vadd.f32 0.0, %v944
        %v946 = vpop.f32.mrf.mxu0
        %947 = vdwg.mxu0
        %948 = vrot.lane.b32.xlu0 %v800, 112
        %v949 = vpop.permute.xlu0 %948
        %v951 = vsel %vm754, %v903, 0
        %v954 = vsel %vm910, %v949, 0
        %956 = vmatpush.bf16.msra.mxu0 0
        %957 = vmatpush.bf16.msra.mxu0 0
        %958 = vmatpush.bf16.msra.mxu0 0
        %959 = vmatpush.bf16.msra.mxu0 0
        %960 = vmatpush.bf16.msra.mxu0 0
        %961 = vmatpush.bf16.msra.mxu0 0
        %962 = vmatpush.bf16.msra.mxu0 0
        %963 = vmatpush.bf16.msra.mxu0 %v954
        %964 = vmatmul.bf16.gmra.mxu0 %v951
        %v965 = vpop.f32.mrf.mxu0
        %v966 = vadd.f32 0.0, %v965
        %v967 = vpop.f32.mrf.mxu0
        %968 = vdwg.mxu0
        %969 = vrot.lane.b32.xlu0 %v824, 112
        %v970 = vpop.permute.xlu0 %969
        %v972 = vsel %vm754, %v904, 0
        %v975 = vsel %vm910, %v970, 0
        %977 = vmatpush.bf16.msra.mxu0 0
        %978 = vmatpush.bf16.msra.mxu0 0
        %979 = vmatpush.bf16.msra.mxu0 0
        %980 = vmatpush.bf16.msra.mxu0 0
        %981 = vmatpush.bf16.msra.mxu0 0
        %982 = vmatpush.bf16.msra.mxu0 0
        %983 = vmatpush.bf16.msra.mxu0 0
        %984 = vmatpush.bf16.msra.mxu0 %v975
        %985 = vmatmul.bf16.gmra.mxu0 %v972
        %v986 = vpop.f32.mrf.mxu0
        %v987 = vadd.f32 0.0, %v986
        %v988 = vpop.f32.mrf.mxu0
        %989 = vdwg.mxu0
        %v990 = vpack.c.bf16 %v924, %v924
        %v991 = vpack.c.bf16 %v945, %v945
        %v992 = vpack.c.bf16 %v966, %v966
        %v993 = vpack.c.bf16 %v987, %v987
        %v994 = vpack.c.bf16 %v609, %v609
        %v995 = vpack.c.bf16 %v610, %v610
        %v996 = vpack.c.bf16 %v611, %v611
        %v997 = vpack.c.bf16 %v612, %v612
        %v999 = vsel %vm754, %v990, 0
        %v1002 = vsel %vm910, %v994, 0
        %1004 = vmatpush.bf16.msra.mxu0 0
        %1005 = vmatpush.bf16.msra.mxu0 0
        %1006 = vmatpush.bf16.msra.mxu0 0
        %1007 = vmatpush.bf16.msra.mxu0 0
        %1008 = vmatpush.bf16.msra.mxu0 0
        %1009 = vmatpush.bf16.msra.mxu0 0
        %1010 = vmatpush.bf16.msra.mxu0 0
        %1011 = vmatpush.bf16.msra.mxu0 %v1002
        %1012 = vmatmul.bf16.gmra.mxu0 %v999
        %v1013 = vpop.f32.mrf.mxu0
        %v1014 = vadd.f32 0.0, %v1013
        %v1015 = vpop.f32.mrf.mxu0
        %1016 = vdwg.mxu0
        %v1018 = vsel %vm754, %v991, 0
        %v1021 = vsel %vm910, %v995, 0
        %1023 = vmatpush.bf16.msra.mxu0 0
        %1024 = vmatpush.bf16.msra.mxu0 0
        %1025 = vmatpush.bf16.msra.mxu0 0
        %1026 = vmatpush.bf16.msra.mxu0 0
        %1027 = vmatpush.bf16.msra.mxu0 0
        %1028 = vmatpush.bf16.msra.mxu0 0
        %1029 = vmatpush.bf16.msra.mxu0 0
        %1030 = vmatpush.bf16.msra.mxu0 %v1021
        %1031 = vmatmul.bf16.gmra.mxu0 %v1018
        %v1032 = vpop.f32.mrf.mxu0
        %v1033 = vadd.f32 0.0, %v1032
        %v1034 = vpop.f32.mrf.mxu0
        %1035 = vdwg.mxu0
        %v1037 = vsel %vm754, %v992, 0
        %v1040 = vsel %vm910, %v996, 0
        %1042 = vmatpush.bf16.msra.mxu0 0
        %1043 = vmatpush.bf16.msra.mxu0 0
        %1044 = vmatpush.bf16.msra.mxu0 0
        %1045 = vmatpush.bf16.msra.mxu0 0
        %1046 = vmatpush.bf16.msra.mxu0 0
        %1047 = vmatpush.bf16.msra.mxu0 0
        %1048 = vmatpush.bf16.msra.mxu0 0
        %1049 = vmatpush.bf16.msra.mxu0 %v1040
        %1050 = vmatmul.bf16.gmra.mxu0 %v1037
        %v1051 = vpop.f32.mrf.mxu0
        %v1052 = vadd.f32 0.0, %v1051
        %v1053 = vpop.f32.mrf.mxu0
        %1054 = vdwg.mxu0
        %v1056 = vsel %vm754, %v993, 0
        %v1059 = vsel %vm910, %v997, 0
        %1061 = vmatpush.bf16.msra.mxu0 0
        %1062 = vmatpush.bf16.msra.mxu0 0
        %1063 = vmatpush.bf16.msra.mxu0 0
        %1064 = vmatpush.bf16.msra.mxu0 0
        %1065 = vmatpush.bf16.msra.mxu0 0
        %1066 = vmatpush.bf16.msra.mxu0 0
        %1067 = vmatpush.bf16.msra.mxu0 0
        %1068 = vmatpush.bf16.msra.mxu0 %v1059
        %1069 = vmatmul.bf16.gmra.mxu0 %v1056
        %v1070 = vpop.f32.mrf.mxu0
        %v1071 = vadd.f32 0.0, %v1070
        %v1072 = vpop.f32.mrf.mxu0
        %1073 = vdwg.mxu0
        %v1074 = vsel %vm555, %v1014, 0.0
        %v1075 = vsel %vm555, %v1033, 0.0
        %v1076 = vadd.f32 %v1074, %v1075
        %v1077 = vsel %vm555, %v1052, 0.0
        %v1078 = vadd.f32 %v1076, %v1077
        %v1079 = vsel %vm555, %v1071, 0.0
        %v1080 = vadd.f32 %v1078, %v1079
        %v1081 = vperm.slane %v554, 4
        %v1082 = vadd.f32 %v1080, %v1081
        %v1083 = vadd.f32 %v542, %v1082
        %v1084 = vsel %vm555, %v1083, 0.0
        %1085 = vadd.xlane.f32.xlu0 %v1084
        %v1086 = vpop.xlane.xlu0 %1085
        %v1087 = vmul.f32 %v1086, %v565
        %v1088 = vsub.f32 %v1083, %v1087
        %v1089 = vmul.f32 %v1088, %v1088
        %v1090 = vsel %vm555, %v1089, 0.0
        %1091 = vadd.xlane.f32.xlu0 %v1090
        %v1092 = vpop.xlane.xlu0 %1091
        %v1093 = vmul.f32 %v1092, %v565
        %v1094 = vadd.f32 %v1093, 1e-05
        %v1095 = vrsqrt.pop %v1094
        %v1096 = vmul.f32 %v1095, %v1094
        %v1097 = vmul.f32 %v1096, %v1095
        %v1098 = vmul.f32 0.5, %v1097
        %v1099 = vsub.f32 1.5, %v1098
        %v1100 = vmul.f32 %v1095, %v1099
        %vm1101 = vweird.f32 %v1094
        %vm1102 = vweird.f32 %v1095
        %vm1103 = vmor %vm1101, %vm1102
        %v1104 = vsel %vm1103, %v1095, %v1100
        %v1105 = vmul.f32 %v1088, %v1104
        %v1106 = vperm.slane %v554, 2
        %v1107 = vmul.f32 %v1105, %v1106
        %v1108 = vperm.slane %v554, 3
        %v1109 = vadd.f32 %v1107, %v1108
        %v1110 = vld [vmem:[%s6] sm:$0xff]
        %v1111 = vld [vmem:[%s6 + $0x8] sm:$0xff]
        %v1112 = vld [vmem:[%s6 + $0x10] sm:$0xff]
        %v1113 = vld [vmem:[%s6 + $0x18] sm:$0xff]
        %v1114 = vld [vmem:[%s7] sm:$0x1]
        %v1115 = vld [vmem:[%s8] sm:$0xff]
        %v1116 = vld [vmem:[%s8 + $0x8] sm:$0xff]
        %v1117 = vld [vmem:[%s8 + $0x10] sm:$0xff]
        %v1118 = vld [vmem:[%s8 + $0x18] sm:$0xff]
        %v1119 = vld [vmem:[%s8 + $0x20] sm:$0xff]
        %v1120 = vld [vmem:[%s8 + $0x28] sm:$0xff]
        %v1121 = vld [vmem:[%s8 + $0x30] sm:$0xff]
        %v1122 = vld [vmem:[%s8 + $0x38] sm:$0xff]
        %v1123 = vld [vmem:[%s8 + $0x40] sm:$0xff]
        %v1124 = vld [vmem:[%s8 + $0x48] sm:$0xff]
        %v1125 = vld [vmem:[%s8 + $0x50] sm:$0xff]
        %v1126 = vld [vmem:[%s8 + $0x58] sm:$0xff]
        %v1127 = vld [vmem:[%s8 + $0x60] sm:$0xff]
        %v1128 = vld [vmem:[%s8 + $0x68] sm:$0xff]
        %v1129 = vld [vmem:[%s8 + $0x70] sm:$0xff]
        %v1130 = vld [vmem:[%s8 + $0x78] sm:$0xff]
        %v1131 = vpack.c.bf16 %v1109, %v1109
        %v1132 = vpack.c.bf16 %v1111, %v1110
        %v1133 = vpack.c.bf16 %v1113, %v1112
        %v1135 = vperm.slane %v1114, 0
        %v1138 = vsel %vm555, %v1131, 0
        %1140 = vmatpush.bf16.msra.mxu0 0
        %1141 = vmatpush.bf16.msra.mxu0 0
        %1142 = vmatpush.bf16.msra.mxu0 0
        %1143 = vmatpush.bf16.msra.mxu0 0
        %1144 = vmatpush.bf16.msra.mxu0 0
        %1145 = vmatpush.bf16.msra.mxu0 0
        %1146 = vmatpush.bf16.msra.mxu0 %v1133
        %1147 = vmatpush.bf16.msra.mxu0 %v1132
        %1148 = vmatmul.bf16.gmra.mxu0 %v1138
        %v1149 = vpop.f32.mrf.mxu0
        %v1150 = vadd.f32 %v1135, %v1149
        %v1151 = vpop.f32.mrf.mxu0
        %1152 = vdwg.mxu0
        %v1153 = vmul.f32 %v1150, 0.5
        %v1154 = vmul.f32 %v1150, 0.044715
        %v1155 = vmul.f32 %v1154, %v1150
        %v1156 = vmul.f32 %v1155, %v1150
        %v1157 = vadd.f32 %v1150, %v1156
        %v1158 = vmul.f32 %v1157, 0.7978846
        %v1159 = vtanh.pop %v1158
        %v1160 = vadd.f32 %v1159, 1.0
        %v1161 = vmul.f32 %v1153, %v1160
        %v1162 = vpack.c.bf16 %v1161, %v1161
        %v1163 = vpack.c.bf16 %v1116, %v1115
        %v1164 = vpack.c.bf16 %v1118, %v1117
        %v1165 = vpack.c.bf16 %v1120, %v1119
        %v1166 = vpack.c.bf16 %v1122, %v1121
        %v1167 = vpack.c.bf16 %v1124, %v1123
        %v1168 = vpack.c.bf16 %v1126, %v1125
        %v1169 = vpack.c.bf16 %v1128, %v1127
        %v1170 = vpack.c.bf16 %v1130, %v1129
        %v1171 = vperm.slane %v554, 5
        %1172 = vmatpush.bf16.msra.mxu0 %v1170
        %1173 = vmatpush.bf16.msra.mxu0 %v1169
        %1174 = vmatpush.bf16.msra.mxu0 %v1168
        %1175 = vmatpush.bf16.msra.mxu0 %v1167
        %1176 = vmatpush.bf16.msra.mxu0 %v1166
        %1177 = vmatpush.bf16.msra.mxu0 %v1165
        %1178 = vmatpush.bf16.msra.mxu0 %v1164
        %1179 = vmatpush.bf16.msra.mxu0 %v1163
        %1180 = vmatmul.bf16.gmra.mxu0 %v1162
        %v1181 = vpop.f32.mrf.mxu0
        %v1182 = vadd.f32 %v1171, %v1181
        %v1183 = vpop.f32.mrf.mxu0
        %1184 = vdwg.mxu0
        %v1185 = vadd.f32 %v1083, %v1182
        %s1186 = scalar_lea.vmem %s9, 8
        %v1187 = vld [vmem:[%s1186] sm:$0x3f]
        %v1188 = vsel %vm555, %v1185, 0.0
        %1189 = vadd.xlane.f32.xlu0 %v1188
        %v1190 = vpop.xlane.xlu0 %1189
        %v1191 = vmul.f32 %v1190, %v565
        %v1192 = vsub.f32 %v1185, %v1191
        %v1193 = vmul.f32 %v1192, %v1192
        %v1194 = vsel %vm555, %v1193, 0.0
        %1195 = vadd.xlane.f32.xlu0 %v1194
        %v1196 = vpop.xlane.xlu0 %1195
        %v1197 = vmul.f32 %v1196, %v565
        %v1198 = vadd.f32 %v1197, 1e-05
        %v1199 = vrsqrt.pop %v1198
        %v1200 = vmul.f32 %v1199, %v1198
        %v1201 = vmul.f32 %v1200, %v1199
        %v1202 = vmul.f32 0.5, %v1201
        %v1203 = vsub.f32 1.5, %v1202
        %v1204 = vmul.f32 %v1199, %v1203
        %vm1205 = vweird.f32 %v1198
        %vm1206 = vweird.f32 %v1199
        %vm1207 = vmor %vm1205, %vm1206
        %v1208 = vsel %vm1207, %v1199, %v1204
        %v1209 = vmul.f32 %v1192, %v1208
        %v1210 = vperm.slane %v1187, 0
        %v1211 = vmul.f32 %v1209, %v1210
        %v1212 = vperm.slane %v1187, 1
        %v1213 = vadd.f32 %v1211, %v1212
        %s1214 = scalar_lea.vmem %s3, 128
        %v1215 = vld [vmem:[%s1214] sm:$0xff]
        %v1216 = vld [vmem:[%s1214 + $0x8] sm:$0xff]
        %v1217 = vld [vmem:[%s1214 + $0x10] sm:$0xff]
        %v1218 = vld [vmem:[%s1214 + $0x18] sm:$0xff]
        %v1219 = vld [vmem:[%s1214 + $0x20] sm:$0xff]
        %v1220 = vld [vmem:[%s1214 + $0x28] sm:$0xff]
        %v1221 = vld [vmem:[%s1214 + $0x30] sm:$0xff]
        %v1222 = vld [vmem:[%s1214 + $0x38] sm:$0xff]
        %v1223 = vld [vmem:[%s1214 + $0x40] sm:$0xff]
        %v1224 = vld [vmem:[%s1214 + $0x48] sm:$0xff]
        %v1225 = vld [vmem:[%s1214 + $0x50] sm:$0xff]
        %v1226 = vld [vmem:[%s1214 + $0x58] sm:$0xff]
        %v1227 = vld [vmem:[%s1214 + $0x60] sm:$0xff]
        %v1228 = vld [vmem:[%s1214 + $0x68] sm:$0xff]
        %v1229 = vld [vmem:[%s1214 + $0x70] sm:$0xff]
        %v1230 = vld [vmem:[%s1214 + $0x78] sm:$0xff]
        %s1231 = scalar_lea.vmem %s5, 4
        %v1232 = vld [vmem:[%s1231] sm:$0x1]
        %v1233 = vld [vmem:[%s1231 + $0x1] sm:$0x1]
        %v1234 = vld [vmem:[%s1231 + $0x2] sm:$0x1]
        %v1235 = vld [vmem:[%s1231 + $0x3] sm:$0x1]
        %s1236 = scalar_lea.vmem %s4, 32
        %v1237 = vld [vmem:[%s1236] sm:$0xff]
        %v1238 = vld [vmem:[%s1236 + $0x8] sm:$0xff]
        %v1239 = vld [vmem:[%s1236 + $0x10] sm:$0xff]
        %v1240 = vld [vmem:[%s1236 + $0x18] sm:$0xff]
        %v1241 = vpack.c.bf16 %v1213, %v1213
        %v1242 = vpack.c.bf16 %v1215, %v1215
        %v1243 = vpack.c.bf16 %v1216, %v1216
        %v1244 = vpack.c.bf16 %v1217, %v1217
        %v1245 = vpack.c.bf16 %v1218, %v1218
        %v1246 = vpack.c.bf16 %v1219, %v1219
        %v1247 = vpack.c.bf16 %v1220, %v1220
        %v1248 = vpack.c.bf16 %v1221, %v1221
        %v1249 = vpack.c.bf16 %v1222, %v1222
        %v1250 = vpack.c.bf16 %v1223, %v1223
        %v1251 = vpack.c.bf16 %v1224, %v1224
        %v1252 = vpack.c.bf16 %v1225, %v1225
        %v1253 = vpack.c.bf16 %v1226, %v1226
        %v1254 = vpack.c.bf16 %v1227, %v1227
        %v1255 = vpack.c.bf16 %v1228, %v1228
        %v1256 = vpack.c.bf16 %v1229, %v1229
        %v1257 = vpack.c.bf16 %v1230, %v1230
        %v1262 = vperm.slane %v1232, 0
        %v1263 = vperm.slane %v1233, 0
        %v1264 = vperm.slane %v1234, 0
        %v1265 = vperm.slane %v1235, 0
        %v1274 = vunpack.c.l.b16 %v1242
        %v1275 = vunpack.c.l.b16 %v1243
        %v1276 = vunpack.c.l.b16 %v1244
        %v1277 = vunpack.c.l.b16 %v1245
        %v1278 = vpack.c.b16 %v1275, %v1274
        %v1279 = vpack.c.b16 %v1277, %v1276
        %v1283 = vsel %vm555, %v1241, 0
        %1285 = vmatpush.bf16.msra.mxu0 0
        %1286 = vmatpush.bf16.msra.mxu0 0
        %1287 = vmatpush.bf16.msra.mxu0 0
        %1288 = vmatpush.bf16.msra.mxu0 0
        %1289 = vmatpush.bf16.msra.mxu0 0
        %1290 = vmatpush.bf16.msra.mxu0 0
        %1291 = vmatpush.bf16.msra.mxu0 %v1279
        %1292 = vmatpush.bf16.msra.mxu0 %v1278
        %1293 = vmatmul.bf16.gmra.mxu0 %v1283
        %v1294 = vpop.f32.mrf.mxu0
        %v1295 = vadd.f32 %v1262, %v1294
        %v1296 = vpop.f32.mrf.mxu0
        %1297 = vdwg.mxu0
        %v1302 = vunpack.c.l.b16 %v1246
        %v1303 = vunpack.c.l.b16 %v1247
        %v1304 = vunpack.c.l.b16 %v1248
        %v1305 = vunpack.c.l.b16 %v1249
        %v1306 = vpack.c.b16 %v1303, %v1302
        %v1307 = vpack.c.b16 %v1305, %v1304
        %1310 = vmatpush.bf16.msra.mxu0 0
        %1311 = vmatpush.bf16.msra.mxu0 0
        %1312 = vmatpush.bf16.msra.mxu0 0
        %1313 = vmatpush.bf16.msra.mxu0 0
        %1314 = vmatpush.bf16.msra.mxu0 0
        %1315 = vmatpush.bf16.msra.mxu0 0
        %1316 = vmatpush.bf16.msra.mxu0 %v1307
        %1317 = vmatpush.bf16.msra.mxu0 %v1306
        %1318 = vmatmul.bf16.gmra.mxu0 %v1283
        %v1319 = vpop.f32.mrf.mxu0
        %v1320 = vadd.f32 %v1263, %v1319
        %v1321 = vpop.f32.mrf.mxu0
        %1322 = vdwg.mxu0
        %v1327 = vunpack.c.l.b16 %v1250
        %v1328 = vunpack.c.l.b16 %v1251
        %v1329 = vunpack.c.l.b16 %v1252
        %v1330 = vunpack.c.l.b16 %v1253
        %v1331 = vpack.c.b16 %v1328, %v1327
        %v1332 = vpack.c.b16 %v1330, %v1329
        %1335 = vmatpush.bf16.msra.mxu0 0
        %1336 = vmatpush.bf16.msra.mxu0 0
        %1337 = vmatpush.bf16.msra.mxu0 0
        %1338 = vmatpush.bf16.msra.mxu0 0
        %1339 = vmatpush.bf16.msra.mxu0 0
        %1340 = vmatpush.bf16.msra.mxu0 0
        %1341 = vmatpush.bf16.msra.mxu0 %v1332
        %1342 = vmatpush.bf16.msra.mxu0 %v1331
        %1343 = vmatmul.bf16.gmra.mxu0 %v1283
        %v1344 = vpop.f32.mrf.mxu0
        %v1345 = vadd.f32 %v1264, %v1344
        %v1346 = vpop.f32.mrf.mxu0
        %1347 = vdwg.mxu0
        %v1352 = vunpack.c.l.b16 %v1254
        %v1353 = vunpack.c.l.b16 %v1255
        %v1354 = vunpack.c.l.b16 %v1256
        %v1355 = vunpack.c.l.b16 %v1257
        %v1356 = vpack.c.b16 %v1353, %v1352
        %v1357 = vpack.c.b16 %v1355, %v1354
        %1360 = vmatpush.bf16.msra.mxu0 0
        %1361 = vmatpush.bf16.msra.mxu0 0
        %1362 = vmatpush.bf16.msra.mxu0 0
        %1363 = vmatpush.bf16.msra.mxu0 0
        %1364 = vmatpush.bf16.msra.mxu0 0
        %1365 = vmatpush.bf16.msra.mxu0 0
        %1366 = vmatpush.bf16.msra.mxu0 %v1357
        %1367 = vmatpush.bf16.msra.mxu0 %v1356
        %1368 = vmatmul.bf16.gmra.mxu0 %v1283
        %v1369 = vpop.f32.mrf.mxu0
        %v1370 = vadd.f32 %v1265, %v1369
        %v1371 = vpop.f32.mrf.mxu0
        %1372 = vdwg.mxu0
        %v1373 = vpack.c.bf16 %v1295, %v1295
        %v1374 = vpack.c.bf16 %v1320, %v1320
        %v1375 = vpack.c.bf16 %v1345, %v1345
        %v1376 = vpack.c.bf16 %v1370, %v1370
        %v1378 = vunpack.c.l.b16 %v1373
        %v1379 = vpack.c.b16 %v1378, %v1378
        %1380 = vrot.lane.b32.xlu0 %v1379, 120
        %v1381 = vpop.permute.xlu0 %1380
        %v1383 = vsel %vm754, %v1373, 0
        %v1386 = vsel %vm754, %v1381, 0
        %1388 = vmatpush.bf16.xpose.msra.mxu0 0
        %1389 = vmatpush.bf16.xpose.msra.mxu0 0
        %1390 = vmatpush.bf16.xpose.msra.mxu0 0
        %1391 = vmatpush.bf16.xpose.msra.mxu0 0
        %1392 = vmatpush.bf16.xpose.msra.mxu0 0
        %1393 = vmatpush.bf16.xpose.msra.mxu0 0
        %1394 = vmatpush.bf16.xpose.msra.mxu0 0
        %1395 = vmatpush.bf16.xpose.msra.mxu0 %v1386
        %1396 = vmatmul.bf16.gmra.mxu0 %v1383
        %v1397 = vpop.f32.mrf.mxu0
        %v1398 = vadd.f32 0.0, %v1397
        %v1399 = vpop.f32.mrf.mxu0
        %1400 = vdwg.mxu0
        %v1402 = vunpack.c.l.b16 %v1374
        %v1403 = vpack.c.b16 %v1402, %v1402
        %1404 = vrot.lane.b32.xlu0 %v1403, 120
        %v1405 = vpop.permute.xlu0 %1404
        %v1407 = vsel %vm754, %v1374, 0
        %v1410 = vsel %vm754, %v1405, 0
        %1412 = vmatpush.bf16.xpose.msra.mxu0 0
        %1413 = vmatpush.bf16.xpose.msra.mxu0 0
        %1414 = vmatpush.bf16.xpose.msra.mxu0 0
        %1415 = vmatpush.bf16.xpose.msra.mxu0 0
        %1416 = vmatpush.bf16.xpose.msra.mxu0 0
        %1417 = vmatpush.bf16.xpose.msra.mxu0 0
        %1418 = vmatpush.bf16.xpose.msra.mxu0 0
        %1419 = vmatpush.bf16.xpose.msra.mxu0 %v1410
        %1420 = vmatmul.bf16.gmra.mxu0 %v1407
        %v1421 = vpop.f32.mrf.mxu0
        %v1422 = vadd.f32 0.0, %v1421
        %v1423 = vpop.f32.mrf.mxu0
        %1424 = vdwg.mxu0
        %v1426 = vunpack.c.l.b16 %v1375
        %v1427 = vpack.c.b16 %v1426, %v1426
        %1428 = vrot.lane.b32.xlu0 %v1427, 120
        %v1429 = vpop.permute.xlu0 %1428
        %v1431 = vsel %vm754, %v1375, 0
        %v1434 = vsel %vm754, %v1429, 0
        %1436 = vmatpush.bf16.xpose.msra.mxu0 0
        %1437 = vmatpush.bf16.xpose.msra.mxu0 0
        %1438 = vmatpush.bf16.xpose.msra.mxu0 0
        %1439 = vmatpush.bf16.xpose.msra.mxu0 0
        %1440 = vmatpush.bf16.xpose.msra.mxu0 0
        %1441 = vmatpush.bf16.xpose.msra.mxu0 0
        %1442 = vmatpush.bf16.xpose.msra.mxu0 0
        %1443 = vmatpush.bf16.xpose.msra.mxu0 %v1434
        %1444 = vmatmul.bf16.gmra.mxu0 %v1431
        %v1445 = vpop.f32.mrf.mxu0
        %v1446 = vadd.f32 0.0, %v1445
        %v1447 = vpop.f32.mrf.mxu0
        %1448 = vdwg.mxu0
        %v1450 = vunpack.c.l.b16 %v1376
        %v1451 = vpack.c.b16 %v1450, %v1450
        %1452 = vrot.lane.b32.xlu0 %v1451, 120
        %v1453 = vpop.permute.xlu0 %1452
        %v1455 = vsel %vm754, %v1376, 0
        %v1458 = vsel %vm754, %v1453, 0
        %1460 = vmatpush.bf16.xpose.msra.mxu0 0
        %1461 = vmatpush.bf16.xpose.msra.mxu0 0
        %1462 = vmatpush.bf16.xpose.msra.mxu0 0
        %1463 = vmatpush.bf16.xpose.msra.mxu0 0
        %1464 = vmatpush.bf16.xpose.msra.mxu0 0
        %1465 = vmatpush.bf16.xpose.msra.mxu0 0
        %1466 = vmatpush.bf16.xpose.msra.mxu0 0
        %1467 = vmatpush.bf16.xpose.msra.mxu0 %v1458
        %1468 = vmatmul.bf16.gmra.mxu0 %v1455
        %v1469 = vpop.f32.mrf.mxu0
        %v1470 = vadd.f32 0.0, %v1469
        %v1471 = vpop.f32.mrf.mxu0
        %1472 = vdwg.mxu0
        %v1473 = vmul.f32 %v1398, 0.35355338
        %v1474 = vmul.f32 %v1422, 0.35355338
        %v1475 = vmul.f32 %v1446, 0.35355338
        %v1476 = vmul.f32 %v1470, 0.35355338
        %v1477 = vadd.f32 %v1473, %v851
        %v1478 = vadd.f32 %v1474, %v851
        %v1479 = vadd.f32 %v1475, %v851
        %v1480 = vadd.f32 %v1476, %v851
        %v1481 = vsel %vm754, %v1477, -inf
        %1482 = vmax.xlane.f32.xlu0 %v1481
        %v1483 = vpop.xlane.xlu0 %1482
        %v1484 = vsel %vm754, %v1478, -inf
        %1485 = vmax.xlane.f32.xlu0 %v1484
        %v1486 = vpop.xlane.xlu0 %1485
        %v1487 = vsel %vm754, %v1479, -inf
        %1488 = vmax.xlane.f32.xlu0 %v1487
        %v1489 = vpop.xlane.xlu0 %1488
        %v1490 = vsel %vm754, %v1480, -inf
        %1491 = vmax.xlane.f32.xlu0 %v1490
        %v1492 = vpop.xlane.xlu0 %1491
        %v1493 = vsub.f32 %v1477, %v1483
        %v1494 = vsub.f32 %v1478, %v1486
        %v1495 = vsub.f32 %v1479, %v1489
        %v1496 = vsub.f32 %v1480, %v1492
        %v1497 = vmul.f32 %v1493, 1.442695
        %v1498 = vpow.pop %v1497
        %v1499 = vmul.f32 %v1494, 1.442695
        %v1500 = vpow.pop %v1499
        %v1501 = vmul.f32 %v1495, 1.442695
        %v1502 = vpow.pop %v1501
        %v1503 = vmul.f32 %v1496, 1.442695
        %v1504 = vpow.pop %v1503
        %v1505 = vsel %vm754, %v1498, 0.0
        %1506 = vadd.xlane.f32.xlu0 %v1505
        %v1507 = vpop.xlane.xlu0 %1506
        %v1508 = vsel %vm754, %v1500, 0.0
        %1509 = vadd.xlane.f32.xlu0 %v1508
        %v1510 = vpop.xlane.xlu0 %1509
        %v1511 = vsel %vm754, %v1502, 0.0
        %1512 = vadd.xlane.f32.xlu0 %v1511
        %v1513 = vpop.xlane.xlu0 %1512
        %v1514 = vsel %vm754, %v1504, 0.0
        %1515 = vadd.xlane.f32.xlu0 %v1514
        %v1516 = vpop.xlane.xlu0 %1515
        %v1517 = vrcp.pop %v1507
        %v1518 = vrcp.pop %v1510
        %v1519 = vrcp.pop %v1513
        %v1520 = vrcp.pop %v1516
        %v1521 = vmul.f32 %v1498, %v1517
        %v1522 = vmul.f32 %v1500, %v1518
        %v1523 = vmul.f32 %v1502, %v1519
        %v1524 = vmul.f32 %v1504, %v1520
        %v1525 = vpack.c.bf16 %v1521, %v1521
        %v1526 = vpack.c.bf16 %v1522, %v1522
        %v1527 = vpack.c.bf16 %v1523, %v1523
        %v1528 = vpack.c.bf16 %v1524, %v1524
        %1529 = vrot.lane.b32.xlu0 %v1379, 112
        %v1530 = vpop.permute.xlu0 %1529
        %v1532 = vsel %vm754, %v1525, 0
        %v1535 = vsel %vm910, %v1530, 0
        %1537 = vmatpush.bf16.msra.mxu0 0
        %1538 = vmatpush.bf16.msra.mxu0 0
        %1539 = vmatpush.bf16.msra.mxu0 0
        %1540 = vmatpush.bf16.msra.mxu0 0
        %1541 = vmatpush.bf16.msra.mxu0 0
        %1542 = vmatpush.bf16.msra.mxu0 0
        %1543 = vmatpush.bf16.msra.mxu0 0
        %1544 = vmatpush.bf16.msra.mxu0 %v1535
        %1545 = vmatmul.bf16.gmra.mxu0 %v1532
        %v1546 = vpop.f32.mrf.mxu0
        %v1547 = vadd.f32 0.0, %v1546
        %v1548 = vpop.f32.mrf.mxu0
        %1549 = vdwg.mxu0
        %1550 = vrot.lane.b32.xlu0 %v1403, 112
        %v1551 = vpop.permute.xlu0 %1550
        %v1553 = vsel %vm754, %v1526, 0
        %v1556 = vsel %vm910, %v1551, 0
        %1558 = vmatpush.bf16.msra.mxu0 0
        %1559 = vmatpush.bf16.msra.mxu0 0
        %1560 = vmatpush.bf16.msra.mxu0 0
        %1561 = vmatpush.bf16.msra.mxu0 0
        %1562 = vmatpush.bf16.msra.mxu0 0
        %1563 = vmatpush.bf16.msra.mxu0 0
        %1564 = vmatpush.bf16.msra.mxu0 0
        %1565 = vmatpush.bf16.msra.mxu0 %v1556
        %1566 = vmatmul.bf16.gmra.mxu0 %v1553
        %v1567 = vpop.f32.mrf.mxu0
        %v1568 = vadd.f32 0.0, %v1567
        %v1569 = vpop.f32.mrf.mxu0
        %1570 = vdwg.mxu0
        %1571 = vrot.lane.b32.xlu0 %v1427, 112
        %v1572 = vpop.permute.xlu0 %1571
        %v1574 = vsel %vm754, %v1527, 0
        %v1577 = vsel %vm910, %v1572, 0
        %1579 = vmatpush.bf16.msra.mxu0 0
        %1580 = vmatpush.bf16.msra.mxu0 0
        %1581 = vmatpush.bf16.msra.mxu0 0
        %1582 = vmatpush.bf16.msra.mxu0 0
        %1583 = vmatpush.bf16.msra.mxu0 0
        %1584 = vmatpush.bf16.msra.mxu0 0
        %1585 = vmatpush.bf16.msra.mxu0 0
        %1586 = vmatpush.bf16.msra.mxu0 %v1577
        %1587 = vmatmul.bf16.gmra.mxu0 %v1574
        %v1588 = vpop.f32.mrf.mxu0
        %v1589 = vadd.f32 0.0, %v1588
        %v1590 = vpop.f32.mrf.mxu0
        %1591 = vdwg.mxu0
        %1592 = vrot.lane.b32.xlu0 %v1451, 112
        %v1593 = vpop.permute.xlu0 %1592
        %v1595 = vsel %vm754, %v1528, 0
        %v1598 = vsel %vm910, %v1593, 0
        %1600 = vmatpush.bf16.msra.mxu0 0
        %1601 = vmatpush.bf16.msra.mxu0 0
        %1602 = vmatpush.bf16.msra.mxu0 0
        %1603 = vmatpush.bf16.msra.mxu0 0
        %1604 = vmatpush.bf16.msra.mxu0 0
        %1605 = vmatpush.bf16.msra.mxu0 0
        %1606 = vmatpush.bf16.msra.mxu0 0
        %1607 = vmatpush.bf16.msra.mxu0 %v1598
        %1608 = vmatmul.bf16.gmra.mxu0 %v1595
        %v1609 = vpop.f32.mrf.mxu0
        %v1610 = vadd.f32 0.0, %v1609
        %v1611 = vpop.f32.mrf.mxu0
        %1612 = vdwg.mxu0
        %v1613 = vpack.c.bf16 %v1547, %v1547
        %v1614 = vpack.c.bf16 %v1568, %v1568
        %v1615 = vpack.c.bf16 %v1589, %v1589
        %v1616 = vpack.c.bf16 %v1610, %v1610
        %v1617 = vpack.c.bf16 %v1237, %v1237
        %v1618 = vpack.c.bf16 %v1238, %v1238
        %v1619 = vpack.c.bf16 %v1239, %v1239
        %v1620 = vpack.c.bf16 %v1240, %v1240
        %v1622 = vsel %vm754, %v1613, 0
        %v1625 = vsel %vm910, %v1617, 0
        %1627 = vmatpush.bf16.msra.mxu0 0
        %1628 = vmatpush.bf16.msra.mxu0 0
        %1629 = vmatpush.bf16.msra.mxu0 0
        %1630 = vmatpush.bf16.msra.mxu0 0
        %1631 = vmatpush.bf16.msra.mxu0 0
        %1632 = vmatpush.bf16.msra.mxu0 0
        %1633 = vmatpush.bf16.msra.mxu0 0
        %1634 = vmatpush.bf16.msra.mxu0 %v1625
        %1635 = vmatmul.bf16.gmra.mxu0 %v1622
        %v1636 = vpop.f32.mrf.mxu0
        %v1637 = vadd.f32 0.0, %v1636
        %v1638 = vpop.f32.mrf.mxu0
        %1639 = vdwg.mxu0
        %v1641 = vsel %vm754, %v1614, 0
        %v1644 = vsel %vm910, %v1618, 0
        %1646 = vmatpush.bf16.msra.mxu0 0
        %1647 = vmatpush.bf16.msra.mxu0 0
        %1648 = vmatpush.bf16.msra.mxu0 0
        %1649 = vmatpush.bf16.msra.mxu0 0
        %1650 = vmatpush.bf16.msra.mxu0 0
        %1651 = vmatpush.bf16.msra.mxu0 0
        %1652 = vmatpush.bf16.msra.mxu0 0
        %1653 = vmatpush.bf16.msra.mxu0 %v1644
        %1654 = vmatmul.bf16.gmra.mxu0 %v1641
        %v1655 = vpop.f32.mrf.mxu0
        %v1656 = vadd.f32 0.0, %v1655
        %v1657 = vpop.f32.mrf.mxu0
        %1658 = vdwg.mxu0
        %v1660 = vsel %vm754, %v1615, 0
        %v1663 = vsel %vm910, %v1619, 0
        %1665 = vmatpush.bf16.msra.mxu0 0
        %1666 = vmatpush.bf16.msra.mxu0 0
        %1667 = vmatpush.bf16.msra.mxu0 0
        %1668 = vmatpush.bf16.msra.mxu0 0
        %1669 = vmatpush.bf16.msra.mxu0 0
        %1670 = vmatpush.bf16.msra.mxu0 0
        %1671 = vmatpush.bf16.msra.mxu0 0
        %1672 = vmatpush.bf16.msra.mxu0 %v1663
        %1673 = vmatmul.bf16.gmra.mxu0 %v1660
        %v1674 = vpop.f32.mrf.mxu0
        %v1675 = vadd.f32 0.0, %v1674
        %v1676 = vpop.f32.mrf.mxu0
        %1677 = vdwg.mxu0
        %v1679 = vsel %vm754, %v1616, 0
        %v1682 = vsel %vm910, %v1620, 0
        %1684 = vmatpush.bf16.msra.mxu0 0
        %1685 = vmatpush.bf16.msra.mxu0 0
        %1686 = vmatpush.bf16.msra.mxu0 0
        %1687 = vmatpush.bf16.msra.mxu0 0
        %1688 = vmatpush.bf16.msra.mxu0 0
        %1689 = vmatpush.bf16.msra.mxu0 0
        %1690 = vmatpush.bf16.msra.mxu0 0
        %1691 = vmatpush.bf16.msra.mxu0 %v1682
        %1692 = vmatmul.bf16.gmra.mxu0 %v1679
        %v1693 = vpop.f32.mrf.mxu0
        %v1694 = vadd.f32 0.0, %v1693
        %v1695 = vpop.f32.mrf.mxu0
        %1696 = vdwg.mxu0
        %v1697 = vsel %vm555, %v1637, 0.0
        %v1698 = vsel %vm555, %v1656, 0.0
        %v1699 = vadd.f32 %v1697, %v1698
        %v1700 = vsel %vm555, %v1675, 0.0
        %v1701 = vadd.f32 %v1699, %v1700
        %v1702 = vsel %vm555, %v1694, 0.0
        %v1703 = vadd.f32 %v1701, %v1702
        %v1704 = vperm.slane %v1187, 4
        %v1705 = vadd.f32 %v1703, %v1704
        %v1706 = vadd.f32 %v1185, %v1705
        %v1707 = vsel %vm555, %v1706, 0.0
        %1708 = vadd.xlane.f32.xlu0 %v1707
        %v1709 = vpop.xlane.xlu0 %1708
        %v1710 = vmul.f32 %v1709, %v565
        %v1711 = vsub.f32 %v1706, %v1710
        %v1712 = vmul.f32 %v1711, %v1711
        %v1713 = vsel %vm555, %v1712, 0.0
        %1714 = vadd.xlane.f32.xlu0 %v1713
        %v1715 = vpop.xlane.xlu0 %1714
        %v1716 = vmul.f32 %v1715, %v565
        %v1717 = vadd.f32 %v1716, 1e-05
        %v1718 = vrsqrt.pop %v1717
        %v1719 = vmul.f32 %v1718, %v1717
        %v1720 = vmul.f32 %v1719, %v1718
        %v1721 = vmul.f32 0.5, %v1720
        %v1722 = vsub.f32 1.5, %v1721
        %v1723 = vmul.f32 %v1718, %v1722
        %vm1724 = vweird.f32 %v1717
        %vm1725 = vweird.f32 %v1718
        %vm1726 = vmor %vm1724, %vm1725
        %v1727 = vsel %vm1726, %v1718, %v1723
        %v1728 = vmul.f32 %v1711, %v1727
        %v1729 = vperm.slane %v1187, 2
        %v1730 = vmul.f32 %v1728, %v1729
        %v1731 = vperm.slane %v1187, 3
        %v1732 = vadd.f32 %v1730, %v1731
        %s1733 = scalar_lea.vmem %s6, 32
        %v1734 = vld [vmem:[%s1733] sm:$0xff]
        %v1735 = vld [vmem:[%s1733 + $0x8] sm:$0xff]
        %v1736 = vld [vmem:[%s1733 + $0x10] sm:$0xff]
        %v1737 = vld [vmem:[%s1733 + $0x18] sm:$0xff]
        %s1738 = scalar_lea.vmem %s7, 1
        %v1739 = vld [vmem:[%s1738] sm:$0x1]
        %s1740 = scalar_lea.vmem %s8, 128
        %v1741 = vld [vmem:[%s1740] sm:$0xff]
        %v1742 = vld [vmem:[%s1740 + $0x8] sm:$0xff]
        %v1743 = vld [vmem:[%s1740 + $0x10] sm:$0xff]
        %v1744 = vld [vmem:[%s1740 + $0x18] sm:$0xff]
        %v1745 = vld [vmem:[%s1740 + $0x20] sm:$0xff]
        %v1746 = vld [vmem:[%s1740 + $0x28] sm:$0xff]
        %v1747 = vld [vmem:[%s1740 + $0x30] sm:$0xff]
        %v1748 = vld [vmem:[%s1740 + $0x38] sm:$0xff]
        %v1749 = vld [vmem:[%s1740 + $0x40] sm:$0xff]
        %v1750 = vld [vmem:[%s1740 + $0x48] sm:$0xff]
        %v1751 = vld [vmem:[%s1740 + $0x50] sm:$0xff]
        %v1752 = vld [vmem:[%s1740 + $0x58] sm:$0xff]
        %v1753 = vld [vmem:[%s1740 + $0x60] sm:$0xff]
        %v1754 = vld [vmem:[%s1740 + $0x68] sm:$0xff]
        %v1755 = vld [vmem:[%s1740 + $0x70] sm:$0xff]
        %v1756 = vld [vmem:[%s1740 + $0x78] sm:$0xff]
        %v1757 = vpack.c.bf16 %v1732, %v1732
        %v1758 = vpack.c.bf16 %v1735, %v1734
        %v1759 = vpack.c.bf16 %v1737, %v1736
        %v1761 = vperm.slane %v1739, 0
        %v1764 = vsel %vm555, %v1757, 0
        %1766 = vmatpush.bf16.msra.mxu0 0
        %1767 = vmatpush.bf16.msra.mxu0 0
        %1768 = vmatpush.bf16.msra.mxu0 0
        %1769 = vmatpush.bf16.msra.mxu0 0
        %1770 = vmatpush.bf16.msra.mxu0 0
        %1771 = vmatpush.bf16.msra.mxu0 0
        %1772 = vmatpush.bf16.msra.mxu0 %v1759
        %1773 = vmatpush.bf16.msra.mxu0 %v1758
        %1774 = vmatmul.bf16.gmra.mxu0 %v1764
        %v1775 = vpop.f32.mrf.mxu0
        %v1776 = vadd.f32 %v1761, %v1775
        %v1777 = vpop.f32.mrf.mxu0
        %1778 = vdwg.mxu0
        %v1779 = vmul.f32 %v1776, 0.5
        %v1780 = vmul.f32 %v1776, 0.044715
        %v1781 = vmul.f32 %v1780, %v1776
        %v1782 = vmul.f32 %v1781, %v1776
        %v1783 = vadd.f32 %v1776, %v1782
        %v1784 = vmul.f32 %v1783, 0.7978846
        %v1785 = vtanh.pop %v1784
        %v1786 = vadd.f32 %v1785, 1.0
        %v1787 = vmul.f32 %v1779, %v1786
        %v1788 = vpack.c.bf16 %v1787, %v1787
        %v1789 = vpack.c.bf16 %v1742, %v1741
        %v1790 = vpack.c.bf16 %v1744, %v1743
        %v1791 = vpack.c.bf16 %v1746, %v1745
        %v1792 = vpack.c.bf16 %v1748, %v1747
        %v1793 = vpack.c.bf16 %v1750, %v1749
        %v1794 = vpack.c.bf16 %v1752, %v1751
        %v1795 = vpack.c.bf16 %v1754, %v1753
        %v1796 = vpack.c.bf16 %v1756, %v1755
        %v1797 = vperm.slane %v1187, 5
        %1798 = vmatpush.bf16.msra.mxu0 %v1796
        %1799 = vmatpush.bf16.msra.mxu0 %v1795
        %1800 = vmatpush.bf16.msra.mxu0 %v1794
        %1801 = vmatpush.bf16.msra.mxu0 %v1793
        %1802 = vmatpush.bf16.msra.mxu0 %v1792
        %1803 = vmatpush.bf16.msra.mxu0 %v1791
        %1804 = vmatpush.bf16.msra.mxu0 %v1790
        %1805 = vmatpush.bf16.msra.mxu0 %v1789
        %1806 = vmatmul.bf16.gmra.mxu0 %v1788
        %v1807 = vpop.f32.mrf.mxu0
        %v1808 = vadd.f32 %v1797, %v1807
        %v1809 = vpop.f32.mrf.mxu0
        %1810 = vdwg.mxu0
        %v1811 = vadd.f32 %v1706, %v1808
        %v1812 = vld [vmem:[%s11] sm:$0x1]
        %v1813 = vld [vmem:[%s11 + $0x1] sm:$0x1]
        %v1814 = vsel %vm555, %v1811, 0.0
        %1815 = vadd.xlane.f32.xlu0 %v1814
        %v1816 = vpop.xlane.xlu0 %1815
        %v1817 = vmul.f32 %v1816, %v565
        %v1818 = vsub.f32 %v1811, %v1817
        %v1819 = vmul.f32 %v1818, %v1818
        %v1820 = vsel %vm555, %v1819, 0.0
        %1821 = vadd.xlane.f32.xlu0 %v1820
        %v1822 = vpop.xlane.xlu0 %1821
        %v1823 = vmul.f32 %v1822, %v565
        %v1824 = vadd.f32 %v1823, 1e-05
        %v1825 = vrsqrt.pop %v1824
        %v1826 = vmul.f32 %v1825, %v1824
        %v1827 = vmul.f32 %v1826, %v1825
        %v1828 = vmul.f32 0.5, %v1827
        %v1829 = vsub.f32 1.5, %v1828
        %v1830 = vmul.f32 %v1825, %v1829
        %vm1831 = vweird.f32 %v1824
        %vm1832 = vweird.f32 %v1825
        %vm1833 = vmor %vm1831, %vm1832
        %v1834 = vsel %vm1833, %v1825, %v1830
        %v1835 = vmul.f32 %v1818, %v1834
        %v1836 = vperm.slane %v1812, 0
        %v1837 = vmul.f32 %v1835, %v1836
        %v1838 = vperm.slane %v1813, 0
        %v1839 = vadd.f32 %v1837, %v1838
        %v1840 = vld [vmem:[%s10] sm:$0xff]
        %v1841 = vld [vmem:[%s10 + $0x8] sm:$0x1]
        %v1842 = vsel %vm555, %v544, 0.0
        %1843 = vadd.xlane.f32.xlu0 %v1842
        %v1844 = vpop.xlane.xlu0 %1843
        %v1845 = vmul.f32 %v1844, %v565
        %v1846 = vsub.f32 %v544, %v1845
        %v1847 = vmul.f32 %v1846, %v1846
        %v1848 = vsel %vm555, %v1847, 0.0
        %1849 = vadd.xlane.f32.xlu0 %v1848
        %v1850 = vpop.xlane.xlu0 %1849
        %v1851 = vmul.f32 %v1850, %v565
        %v1852 = vadd.f32 %v1851, 1e-05
        %v1853 = vrsqrt.pop %v1852
        %v1854 = vmul.f32 %v1853, %v1852
        %v1855 = vmul.f32 %v1854, %v1853
        %v1856 = vmul.f32 0.5, %v1855
        %v1857 = vsub.f32 1.5, %v1856
        %v1858 = vmul.f32 %v1853, %v1857
        %vm1859 = vweird.f32 %v1852
        %vm1860 = vweird.f32 %v1853
        %vm1861 = vmor %vm1859, %vm1860
        %v1862 = vsel %vm1861, %v1853, %v1858
        %v1863 = vmul.f32 %v1846, %v1862
        %v1864 = vperm.slane %v1840, 0
        %v1865 = vmul.f32 %v1863, %v1864
        %v1866 = vperm.slane %v1840, 1
        %v1867 = vadd.f32 %v1865, %v1866
        %s1868 = scalar_lea.vmem %s3, 256
        %v1869 = vld [vmem:[%s1868] sm:$0xff]
        %v1870 = vld [vmem:[%s1868 + $0x8] sm:$0xff]
        %v1871 = vld [vmem:[%s1868 + $0x10] sm:$0xff]
        %v1872 = vld [vmem:[%s1868 + $0x18] sm:$0xff]
        %v1873 = vld [vmem:[%s1868 + $0x20] sm:$0xff]
        %v1874 = vld [vmem:[%s1868 + $0x28] sm:$0xff]
        %v1875 = vld [vmem:[%s1868 + $0x30] sm:$0xff]
        %v1876 = vld [vmem:[%s1868 + $0x38] sm:$0xff]
        %v1877 = vld [vmem:[%s1868 + $0x40] sm:$0xff]
        %v1878 = vld [vmem:[%s1868 + $0x48] sm:$0xff]
        %v1879 = vld [vmem:[%s1868 + $0x50] sm:$0xff]
        %v1880 = vld [vmem:[%s1868 + $0x58] sm:$0xff]
        %v1881 = vld [vmem:[%s1868 + $0x60] sm:$0xff]
        %v1882 = vld [vmem:[%s1868 + $0x68] sm:$0xff]
        %v1883 = vld [vmem:[%s1868 + $0x70] sm:$0xff]
        %v1884 = vld [vmem:[%s1868 + $0x78] sm:$0xff]
        %s1885 = scalar_lea.vmem %s5, 8
        %v1886 = vld [vmem:[%s1885] sm:$0x1]
        %v1887 = vld [vmem:[%s1885 + $0x1] sm:$0x1]
        %v1888 = vld [vmem:[%s1885 + $0x2] sm:$0x1]
        %v1889 = vld [vmem:[%s1885 + $0x3] sm:$0x1]
        %s1890 = scalar_lea.vmem %s4, 64
        %v1891 = vld [vmem:[%s1890] sm:$0xff]
        %v1892 = vld [vmem:[%s1890 + $0x8] sm:$0xff]
        %v1893 = vld [vmem:[%s1890 + $0x10] sm:$0xff]
        %v1894 = vld [vmem:[%s1890 + $0x18] sm:$0xff]
        %v1895 = vpack.c.bf16 %v1867, %v1867
        %v1896 = vpack.c.bf16 %v1869, %v1869
        %v1897 = vpack.c.bf16 %v1870, %v1870
        %v1898 = vpack.c.bf16 %v1871, %v1871
        %v1899 = vpack.c.bf16 %v1872, %v1872
        %v1900 = vpack.c.bf16 %v1873, %v1873
        %v1901 = vpack.c.bf16 %v1874, %v1874
        %v1902 = vpack.c.bf16 %v1875, %v1875
        %v1903 = vpack.c.bf16 %v1876, %v1876
        %v1904 = vpack.c.bf16 %v1877, %v1877
        %v1905 = vpack.c.bf16 %v1878, %v1878
        %v1906 = vpack.c.bf16 %v1879, %v1879
        %v1907 = vpack.c.bf16 %v1880, %v1880
        %v1908 = vpack.c.bf16 %v1881, %v1881
        %v1909 = vpack.c.bf16 %v1882, %v1882
        %v1910 = vpack.c.bf16 %v1883, %v1883
        %v1911 = vpack.c.bf16 %v1884, %v1884
        %v1916 = vperm.slane %v1886, 0
        %v1917 = vperm.slane %v1887, 0
        %v1918 = vperm.slane %v1888, 0
        %v1919 = vperm.slane %v1889, 0
        %v1928 = vunpack.c.l.b16 %v1896
        %v1929 = vunpack.c.l.b16 %v1897
        %v1930 = vunpack.c.l.b16 %v1898
        %v1931 = vunpack.c.l.b16 %v1899
        %v1932 = vpack.c.b16 %v1929, %v1928
        %v1933 = vpack.c.b16 %v1931, %v1930
        %v1937 = vsel %vm555, %v1895, 0
        %1939 = vmatpush.bf16.msra.mxu0 0
        %1940 = vmatpush.bf16.msra.mxu0 0
        %1941 = vmatpush.bf16.msra.mxu0 0
        %1942 = vmatpush.bf16.msra.mxu0 0
        %1943 = vmatpush.bf16.msra.mxu0 0
        %1944 = vmatpush.bf16.msra.mxu0 0
        %1945 = vmatpush.bf16.msra.mxu0 %v1933
        %1946 = vmatpush.bf16.msra.mxu0 %v1932
        %1947 = vmatmul.bf16.gmra.mxu0 %v1937
        %v1948 = vpop.f32.mrf.mxu0
        %v1949 = vadd.f32 %v1916, %v1948
        %v1950 = vpop.f32.mrf.mxu0
        %1951 = vdwg.mxu0
        %v1956 = vunpack.c.l.b16 %v1900
        %v1957 = vunpack.c.l.b16 %v1901
        %v1958 = vunpack.c.l.b16 %v1902
        %v1959 = vunpack.c.l.b16 %v1903
        %v1960 = vpack.c.b16 %v1957, %v1956
        %v1961 = vpack.c.b16 %v1959, %v1958
        %1964 = vmatpush.bf16.msra.mxu0 0
        %1965 = vmatpush.bf16.msra.mxu0 0
        %1966 = vmatpush.bf16.msra.mxu0 0
        %1967 = vmatpush.bf16.msra.mxu0 0
        %1968 = vmatpush.bf16.msra.mxu0 0
        %1969 = vmatpush.bf16.msra.mxu0 0
        %1970 = vmatpush.bf16.msra.mxu0 %v1961
        %1971 = vmatpush.bf16.msra.mxu0 %v1960
        %1972 = vmatmul.bf16.gmra.mxu0 %v1937
        %v1973 = vpop.f32.mrf.mxu0
        %v1974 = vadd.f32 %v1917, %v1973
        %v1975 = vpop.f32.mrf.mxu0
        %1976 = vdwg.mxu0
        %v1981 = vunpack.c.l.b16 %v1904
        %v1982 = vunpack.c.l.b16 %v1905
        %v1983 = vunpack.c.l.b16 %v1906
        %v1984 = vunpack.c.l.b16 %v1907
        %v1985 = vpack.c.b16 %v1982, %v1981
        %v1986 = vpack.c.b16 %v1984, %v1983
        %1989 = vmatpush.bf16.msra.mxu0 0
        %1990 = vmatpush.bf16.msra.mxu0 0
        %1991 = vmatpush.bf16.msra.mxu0 0
        %1992 = vmatpush.bf16.msra.mxu0 0
        %1993 = vmatpush.bf16.msra.mxu0 0
        %1994 = vmatpush.bf16.msra.mxu0 0
        %1995 = vmatpush.bf16.msra.mxu0 %v1986
        %1996 = vmatpush.bf16.msra.mxu0 %v1985
        %1997 = vmatmul.bf16.gmra.mxu0 %v1937
        %v1998 = vpop.f32.mrf.mxu0
        %v1999 = vadd.f32 %v1918, %v1998
        %v2000 = vpop.f32.mrf.mxu0
        %2001 = vdwg.mxu0
        %v2006 = vunpack.c.l.b16 %v1908
        %v2007 = vunpack.c.l.b16 %v1909
        %v2008 = vunpack.c.l.b16 %v1910
        %v2009 = vunpack.c.l.b16 %v1911
        %v2010 = vpack.c.b16 %v2007, %v2006
        %v2011 = vpack.c.b16 %v2009, %v2008
        %2014 = vmatpush.bf16.msra.mxu0 0
        %2015 = vmatpush.bf16.msra.mxu0 0
        %2016 = vmatpush.bf16.msra.mxu0 0
        %2017 = vmatpush.bf16.msra.mxu0 0
        %2018 = vmatpush.bf16.msra.mxu0 0
        %2019 = vmatpush.bf16.msra.mxu0 0
        %2020 = vmatpush.bf16.msra.mxu0 %v2011
        %2021 = vmatpush.bf16.msra.mxu0 %v2010
        %2022 = vmatmul.bf16.gmra.mxu0 %v1937
        %v2023 = vpop.f32.mrf.mxu0
        %v2024 = vadd.f32 %v1919, %v2023
        %v2025 = vpop.f32.mrf.mxu0
        %2026 = vdwg.mxu0
        %v2027 = vpack.c.bf16 %v1949, %v1949
        %v2028 = vpack.c.bf16 %v1974, %v1974
        %v2029 = vpack.c.bf16 %v1999, %v1999
        %v2030 = vpack.c.bf16 %v2024, %v2024
        %v2032 = vunpack.c.l.b16 %v2027
        %v2033 = vpack.c.b16 %v2032, %v2032
        %2034 = vrot.lane.b32.xlu0 %v2033, 120
        %v2035 = vpop.permute.xlu0 %2034
        %v2037 = vsel %vm754, %v2027, 0
        %v2040 = vsel %vm754, %v2035, 0
        %2042 = vmatpush.bf16.xpose.msra.mxu0 0
        %2043 = vmatpush.bf16.xpose.msra.mxu0 0
        %2044 = vmatpush.bf16.xpose.msra.mxu0 0
        %2045 = vmatpush.bf16.xpose.msra.mxu0 0
        %2046 = vmatpush.bf16.xpose.msra.mxu0 0
        %2047 = vmatpush.bf16.xpose.msra.mxu0 0
        %2048 = vmatpush.bf16.xpose.msra.mxu0 0
        %2049 = vmatpush.bf16.xpose.msra.mxu0 %v2040
        %2050 = vmatmul.bf16.gmra.mxu0 %v2037
        %v2051 = vpop.f32.mrf.mxu0
        %v2052 = vadd.f32 0.0, %v2051
        %v2053 = vpop.f32.mrf.mxu0
        %2054 = vdwg.mxu0
        %v2056 = vunpack.c.l.b16 %v2028
        %v2057 = vpack.c.b16 %v2056, %v2056
        %2058 = vrot.lane.b32.xlu0 %v2057, 120
        %v2059 = vpop.permute.xlu0 %2058
        %v2061 = vsel %vm754, %v2028, 0
        %v2064 = vsel %vm754, %v2059, 0
        %2066 = vmatpush.bf16.xpose.msra.mxu0 0
        %2067 = vmatpush.bf16.xpose.msra.mxu0 0
        %2068 = vmatpush.bf16.xpose.msra.mxu0 0
        %2069 = vmatpush.bf16.xpose.msra.mxu0 0
        %2070 = vmatpush.bf16.xpose.msra.mxu0 0
        %2071 = vmatpush.bf16.xpose.msra.mxu0 0
        %2072 = vmatpush.bf16.xpose.msra.mxu0 0
        %2073 = vmatpush.bf16.xpose.msra.mxu0 %v2064
        %2074 = vmatmul.bf16.gmra.mxu0 %v2061
        %v2075 = vpop.f32.mrf.mxu0
        %v2076 = vadd.f32 0.0, %v2075
        %v2077 = vpop.f32.mrf.mxu0
        %2078 = vdwg.mxu0
        %v2080 = vunpack.c.l.b16 %v2029
        %v2081 = vpack.c.b16 %v2080, %v2080
        %2082 = vrot.lane.b32.xlu0 %v2081, 120
        %v2083 = vpop.permute.xlu0 %2082
        %v2085 = vsel %vm754, %v2029, 0
        %v2088 = vsel %vm754, %v2083, 0
        %2090 = vmatpush.bf16.xpose.msra.mxu0 0
        %2091 = vmatpush.bf16.xpose.msra.mxu0 0
        %2092 = vmatpush.bf16.xpose.msra.mxu0 0
        %2093 = vmatpush.bf16.xpose.msra.mxu0 0
        %2094 = vmatpush.bf16.xpose.msra.mxu0 0
        %2095 = vmatpush.bf16.xpose.msra.mxu0 0
        %2096 = vmatpush.bf16.xpose.msra.mxu0 0
        %2097 = vmatpush.bf16.xpose.msra.mxu0 %v2088
        %2098 = vmatmul.bf16.gmra.mxu0 %v2085
        %v2099 = vpop.f32.mrf.mxu0
        %v2100 = vadd.f32 0.0, %v2099
        %v2101 = vpop.f32.mrf.mxu0
        %2102 = vdwg.mxu0
        %v2104 = vunpack.c.l.b16 %v2030
        %v2105 = vpack.c.b16 %v2104, %v2104
        %2106 = vrot.lane.b32.xlu0 %v2105, 120
        %v2107 = vpop.permute.xlu0 %2106
        %v2109 = vsel %vm754, %v2030, 0
        %v2112 = vsel %vm754, %v2107, 0
        %2114 = vmatpush.bf16.xpose.msra.mxu0 0
        %2115 = vmatpush.bf16.xpose.msra.mxu0 0
        %2116 = vmatpush.bf16.xpose.msra.mxu0 0
        %2117 = vmatpush.bf16.xpose.msra.mxu0 0
        %2118 = vmatpush.bf16.xpose.msra.mxu0 0
        %2119 = vmatpush.bf16.xpose.msra.mxu0 0
        %2120 = vmatpush.bf16.xpose.msra.mxu0 0
        %2121 = vmatpush.bf16.xpose.msra.mxu0 %v2112
        %2122 = vmatmul.bf16.gmra.mxu0 %v2109
        %v2123 = vpop.f32.mrf.mxu0
        %v2124 = vadd.f32 0.0, %v2123
        %v2125 = vpop.f32.mrf.mxu0
        %2126 = vdwg.mxu0
        %v2127 = vmul.f32 %v2052, 0.35355338
        %v2128 = vmul.f32 %v2076, 0.35355338
        %v2129 = vmul.f32 %v2100, 0.35355338
        %v2130 = vmul.f32 %v2124, 0.35355338
        %v2131 = vadd.f32 %v2127, %v553
        %v2132 = vadd.f32 %v2128, %v553
        %v2133 = vadd.f32 %v2129, %v553
        %v2134 = vadd.f32 %v2130, %v553
        %v2135 = vsel %vm754, %v2131, -inf
        %2136 = vmax.xlane.f32.xlu0 %v2135
        %v2137 = vpop.xlane.xlu0 %2136
        %v2138 = vsel %vm754, %v2132, -inf
        %2139 = vmax.xlane.f32.xlu0 %v2138
        %v2140 = vpop.xlane.xlu0 %2139
        %v2141 = vsel %vm754, %v2133, -inf
        %2142 = vmax.xlane.f32.xlu0 %v2141
        %v2143 = vpop.xlane.xlu0 %2142
        %v2144 = vsel %vm754, %v2134, -inf
        %2145 = vmax.xlane.f32.xlu0 %v2144
        %v2146 = vpop.xlane.xlu0 %2145
        %v2147 = vsub.f32 %v2131, %v2137
        %v2148 = vsub.f32 %v2132, %v2140
        %v2149 = vsub.f32 %v2133, %v2143
        %v2150 = vsub.f32 %v2134, %v2146
        %v2151 = vmul.f32 %v2147, 1.442695
        %v2152 = vpow.pop %v2151
        %v2153 = vmul.f32 %v2148, 1.442695
        %v2154 = vpow.pop %v2153
        %v2155 = vmul.f32 %v2149, 1.442695
        %v2156 = vpow.pop %v2155
        %v2157 = vmul.f32 %v2150, 1.442695
        %v2158 = vpow.pop %v2157
        %v2159 = vsel %vm754, %v2152, 0.0
        %2160 = vadd.xlane.f32.xlu0 %v2159
        %v2161 = vpop.xlane.xlu0 %2160
        %v2162 = vsel %vm754, %v2154, 0.0
        %2163 = vadd.xlane.f32.xlu0 %v2162
        %v2164 = vpop.xlane.xlu0 %2163
        %v2165 = vsel %vm754, %v2156, 0.0
        %2166 = vadd.xlane.f32.xlu0 %v2165
        %v2167 = vpop.xlane.xlu0 %2166
        %v2168 = vsel %vm754, %v2158, 0.0
        %2169 = vadd.xlane.f32.xlu0 %v2168
        %v2170 = vpop.xlane.xlu0 %2169
        %v2171 = vrcp.pop %v2161
        %v2172 = vrcp.pop %v2164
        %v2173 = vrcp.pop %v2167
        %v2174 = vrcp.pop %v2170
        %v2175 = vmul.f32 %v2152, %v2171
        %v2176 = vmul.f32 %v2154, %v2172
        %v2177 = vmul.f32 %v2156, %v2173
        %v2178 = vmul.f32 %v2158, %v2174
        %v2179 = vpack.c.bf16 %v2175, %v2175
        %v2180 = vpack.c.bf16 %v2176, %v2176
        %v2181 = vpack.c.bf16 %v2177, %v2177
        %v2182 = vpack.c.bf16 %v2178, %v2178
        %2183 = vrot.lane.b32.xlu0 %v2033, 112
        %v2184 = vpop.permute.xlu0 %2183
        %v2186 = vsel %vm754, %v2179, 0
        %v2189 = vsel %vm910, %v2184, 0
        %2191 = vmatpush.bf16.msra.mxu0 0
        %2192 = vmatpush.bf16.msra.mxu0 0
        %2193 = vmatpush.bf16.msra.mxu0 0
        %2194 = vmatpush.bf16.msra.mxu0 0
        %2195 = vmatpush.bf16.msra.mxu0 0
        %2196 = vmatpush.bf16.msra.mxu0 0
        %2197 = vmatpush.bf16.msra.mxu0 0
        %2198 = vmatpush.bf16.msra.mxu0 %v2189
        %2199 = vmatmul.bf16.gmra.mxu0 %v2186
        %v2200 = vpop.f32.mrf.mxu0
        %v2201 = vadd.f32 0.0, %v2200
        %v2202 = vpop.f32.mrf.mxu0
        %2203 = vdwg.mxu0
        %2204 = vrot.lane.b32.xlu0 %v2057, 112
        %v2205 = vpop.permute.xlu0 %2204
        %v2207 = vsel %vm754, %v2180, 0
        %v2210 = vsel %vm910, %v2205, 0
        %2212 = vmatpush.bf16.msra.mxu0 0
        %2213 = vmatpush.bf16.msra.mxu0 0
        %2214 = vmatpush.bf16.msra.mxu0 0
        %2215 = vmatpush.bf16.msra.mxu0 0
        %2216 = vmatpush.bf16.msra.mxu0 0
        %2217 = vmatpush.bf16.msra.mxu0 0
        %2218 = vmatpush.bf16.msra.mxu0 0
        %2219 = vmatpush.bf16.msra.mxu0 %v2210
        %2220 = vmatmul.bf16.gmra.mxu0 %v2207
        %v2221 = vpop.f32.mrf.mxu0
        %v2222 = vadd.f32 0.0, %v2221
        %v2223 = vpop.f32.mrf.mxu0
        %2224 = vdwg.mxu0
        %2225 = vrot.lane.b32.xlu0 %v2081, 112
        %v2226 = vpop.permute.xlu0 %2225
        %v2228 = vsel %vm754, %v2181, 0
        %v2231 = vsel %vm910, %v2226, 0
        %2233 = vmatpush.bf16.msra.mxu0 0
        %2234 = vmatpush.bf16.msra.mxu0 0
        %2235 = vmatpush.bf16.msra.mxu0 0
        %2236 = vmatpush.bf16.msra.mxu0 0
        %2237 = vmatpush.bf16.msra.mxu0 0
        %2238 = vmatpush.bf16.msra.mxu0 0
        %2239 = vmatpush.bf16.msra.mxu0 0
        %2240 = vmatpush.bf16.msra.mxu0 %v2231
        %2241 = vmatmul.bf16.gmra.mxu0 %v2228
        %v2242 = vpop.f32.mrf.mxu0
        %v2243 = vadd.f32 0.0, %v2242
        %v2244 = vpop.f32.mrf.mxu0
        %2245 = vdwg.mxu0
        %2246 = vrot.lane.b32.xlu0 %v2105, 112
        %v2247 = vpop.permute.xlu0 %2246
        %v2249 = vsel %vm754, %v2182, 0
        %v2252 = vsel %vm910, %v2247, 0
        %2254 = vmatpush.bf16.msra.mxu0 0
        %2255 = vmatpush.bf16.msra.mxu0 0
        %2256 = vmatpush.bf16.msra.mxu0 0
        %2257 = vmatpush.bf16.msra.mxu0 0
        %2258 = vmatpush.bf16.msra.mxu0 0
        %2259 = vmatpush.bf16.msra.mxu0 0
        %2260 = vmatpush.bf16.msra.mxu0 0
        %2261 = vmatpush.bf16.msra.mxu0 %v2252
        %2262 = vmatmul.bf16.gmra.mxu0 %v2249
        %v2263 = vpop.f32.mrf.mxu0
        %v2264 = vadd.f32 0.0, %v2263
        %v2265 = vpop.f32.mrf.mxu0
        %2266 = vdwg.mxu0
        %v2267 = vpack.c.bf16 %v2201, %v2201
        %v2268 = vpack.c.bf16 %v2222, %v2222
        %v2269 = vpack.c.bf16 %v2243, %v2243
        %v2270 = vpack.c.bf16 %v2264, %v2264
        %v2271 = vpack.c.bf16 %v1891, %v1891
        %v2272 = vpack.c.bf16 %v1892, %v1892
        %v2273 = vpack.c.bf16 %v1893, %v1893
        %v2274 = vpack.c.bf16 %v1894, %v1894
        %v2276 = vsel %vm754, %v2267, 0
        %v2279 = vsel %vm910, %v2271, 0
        %2281 = vmatpush.bf16.msra.mxu0 0
        %2282 = vmatpush.bf16.msra.mxu0 0
        %2283 = vmatpush.bf16.msra.mxu0 0
        %2284 = vmatpush.bf16.msra.mxu0 0
        %2285 = vmatpush.bf16.msra.mxu0 0
        %2286 = vmatpush.bf16.msra.mxu0 0
        %2287 = vmatpush.bf16.msra.mxu0 0
        %2288 = vmatpush.bf16.msra.mxu0 %v2279
        %2289 = vmatmul.bf16.gmra.mxu0 %v2276
        %v2290 = vpop.f32.mrf.mxu0
        %v2291 = vadd.f32 0.0, %v2290
        %v2292 = vpop.f32.mrf.mxu0
        %2293 = vdwg.mxu0
        %v2295 = vsel %vm754, %v2268, 0
        %v2298 = vsel %vm910, %v2272, 0
        %2300 = vmatpush.bf16.msra.mxu0 0
        %2301 = vmatpush.bf16.msra.mxu0 0
        %2302 = vmatpush.bf16.msra.mxu0 0
        %2303 = vmatpush.bf16.msra.mxu0 0
        %2304 = vmatpush.bf16.msra.mxu0 0
        %2305 = vmatpush.bf16.msra.mxu0 0
        %2306 = vmatpush.bf16.msra.mxu0 0
        %2307 = vmatpush.bf16.msra.mxu0 %v2298
        %2308 = vmatmul.bf16.gmra.mxu0 %v2295
        %v2309 = vpop.f32.mrf.mxu0
        %v2310 = vadd.f32 0.0, %v2309
        %v2311 = vpop.f32.mrf.mxu0
        %2312 = vdwg.mxu0
        %v2314 = vsel %vm754, %v2269, 0
        %v2317 = vsel %vm910, %v2273, 0
        %2319 = vmatpush.bf16.msra.mxu0 0
        %2320 = vmatpush.bf16.msra.mxu0 0
        %2321 = vmatpush.bf16.msra.mxu0 0
        %2322 = vmatpush.bf16.msra.mxu0 0
        %2323 = vmatpush.bf16.msra.mxu0 0
        %2324 = vmatpush.bf16.msra.mxu0 0
        %2325 = vmatpush.bf16.msra.mxu0 0
        %2326 = vmatpush.bf16.msra.mxu0 %v2317
        %2327 = vmatmul.bf16.gmra.mxu0 %v2314
        %v2328 = vpop.f32.mrf.mxu0
        %v2329 = vadd.f32 0.0, %v2328
        %v2330 = vpop.f32.mrf.mxu0
        %2331 = vdwg.mxu0
        %v2333 = vsel %vm754, %v2270, 0
        %v2336 = vsel %vm910, %v2274, 0
        %2338 = vmatpush.bf16.msra.mxu0 0
        %2339 = vmatpush.bf16.msra.mxu0 0
        %2340 = vmatpush.bf16.msra.mxu0 0
        %2341 = vmatpush.bf16.msra.mxu0 0
        %2342 = vmatpush.bf16.msra.mxu0 0
        %2343 = vmatpush.bf16.msra.mxu0 0
        %2344 = vmatpush.bf16.msra.mxu0 0
        %2345 = vmatpush.bf16.msra.mxu0 %v2336
        %2346 = vmatmul.bf16.gmra.mxu0 %v2333
        %v2347 = vpop.f32.mrf.mxu0
        %v2348 = vadd.f32 0.0, %v2347
        %v2349 = vpop.f32.mrf.mxu0
        %2350 = vdwg.mxu0
        %v2351 = vsel %vm555, %v2291, 0.0
        %v2352 = vsel %vm555, %v2310, 0.0
        %v2353 = vadd.f32 %v2351, %v2352
        %v2354 = vsel %vm555, %v2329, 0.0
        %v2355 = vadd.f32 %v2353, %v2354
        %v2356 = vsel %vm555, %v2348, 0.0
        %v2357 = vadd.f32 %v2355, %v2356
        %v2358 = vperm.slane %v1840, 6
        %v2359 = vadd.f32 %v2357, %v2358
        %v2360 = vadd.f32 %v544, %v2359
        %v2361 = vsel %vm555, %v2360, 0.0
        %2362 = vadd.xlane.f32.xlu0 %v2361
        %v2363 = vpop.xlane.xlu0 %2362
        %v2364 = vmul.f32 %v2363, %v565
        %v2365 = vsub.f32 %v2360, %v2364
        %v2366 = vmul.f32 %v2365, %v2365
        %v2367 = vsel %vm555, %v2366, 0.0
        %2368 = vadd.xlane.f32.xlu0 %v2367
        %v2369 = vpop.xlane.xlu0 %2368
        %v2370 = vmul.f32 %v2369, %v565
        %v2371 = vadd.f32 %v2370, 1e-05
        %v2372 = vrsqrt.pop %v2371
        %v2373 = vmul.f32 %v2372, %v2371
        %v2374 = vmul.f32 %v2373, %v2372
        %v2375 = vmul.f32 0.5, %v2374
        %v2376 = vsub.f32 1.5, %v2375
        %v2377 = vmul.f32 %v2372, %v2376
        %vm2378 = vweird.f32 %v2371
        %vm2379 = vweird.f32 %v2372
        %vm2380 = vmor %vm2378, %vm2379
        %v2381 = vsel %vm2380, %v2372, %v2377
        %v2382 = vmul.f32 %v2365, %v2381
        %v2383 = vperm.slane %v1840, 2
        %v2384 = vmul.f32 %v2382, %v2383
        %v2385 = vperm.slane %v1840, 3
        %v2386 = vadd.f32 %v2384, %v2385
        %s2387 = scalar_lea.vmem %s3, 512
        %v2388 = vld [vmem:[%s2387] sm:$0xff]
        %v2389 = vld [vmem:[%s2387 + $0x8] sm:$0xff]
        %v2390 = vld [vmem:[%s2387 + $0x10] sm:$0xff]
        %v2391 = vld [vmem:[%s2387 + $0x18] sm:$0xff]
        %v2392 = vld [vmem:[%s2387 + $0x20] sm:$0xff]
        %v2393 = vld [vmem:[%s2387 + $0x28] sm:$0xff]
        %v2394 = vld [vmem:[%s2387 + $0x30] sm:$0xff]
        %v2395 = vld [vmem:[%s2387 + $0x38] sm:$0xff]
        %v2396 = vld [vmem:[%s2387 + $0x40] sm:$0xff]
        %v2397 = vld [vmem:[%s2387 + $0x48] sm:$0xff]
        %v2398 = vld [vmem:[%s2387 + $0x50] sm:$0xff]
        %v2399 = vld [vmem:[%s2387 + $0x58] sm:$0xff]
        %v2400 = vld [vmem:[%s2387 + $0x60] sm:$0xff]
        %v2401 = vld [vmem:[%s2387 + $0x68] sm:$0xff]
        %v2402 = vld [vmem:[%s2387 + $0x70] sm:$0xff]
        %v2403 = vld [vmem:[%s2387 + $0x78] sm:$0xff]
        %s2404 = scalar_lea.vmem %s5, 16
        %v2405 = vld [vmem:[%s2404] sm:$0x1]
        %v2406 = vld [vmem:[%s2404 + $0x1] sm:$0x1]
        %v2407 = vld [vmem:[%s2404 + $0x2] sm:$0x1]
        %v2408 = vld [vmem:[%s2404 + $0x3] sm:$0x1]
        %s2409 = scalar_lea.vmem %s4, 128
        %v2410 = vld [vmem:[%s2409] sm:$0xff]
        %v2411 = vld [vmem:[%s2409 + $0x8] sm:$0xff]
        %v2412 = vld [vmem:[%s2409 + $0x10] sm:$0xff]
        %v2413 = vld [vmem:[%s2409 + $0x18] sm:$0xff]
        %v2414 = vpack.c.bf16 %v2386, %v2386
        %v2415 = vpack.c.bf16 %v2388, %v2388
        %v2416 = vpack.c.bf16 %v2389, %v2389
        %v2417 = vpack.c.bf16 %v2390, %v2390
        %v2418 = vpack.c.bf16 %v2391, %v2391
        %v2419 = vpack.c.bf16 %v2392, %v2392
        %v2420 = vpack.c.bf16 %v2393, %v2393
        %v2421 = vpack.c.bf16 %v2394, %v2394
        %v2422 = vpack.c.bf16 %v2395, %v2395
        %v2423 = vpack.c.bf16 %v2396, %v2396
        %v2424 = vpack.c.bf16 %v2397, %v2397
        %v2425 = vpack.c.bf16 %v2398, %v2398
        %v2426 = vpack.c.bf16 %v2399, %v2399
        %v2427 = vpack.c.bf16 %v2400, %v2400
        %v2428 = vpack.c.bf16 %v2401, %v2401
        %v2429 = vpack.c.bf16 %v2402, %v2402
        %v2430 = vpack.c.bf16 %v2403, %v2403
        %v2435 = vperm.slane %v2405, 0
        %v2436 = vperm.slane %v2406, 0
        %v2437 = vperm.slane %v2407, 0
        %v2438 = vperm.slane %v2408, 0
        %v2447 = vunpack.c.l.b16 %v2415
        %v2448 = vunpack.c.l.b16 %v2416
        %v2449 = vunpack.c.l.b16 %v2417
        %v2450 = vunpack.c.l.b16 %v2418
        %v2451 = vpack.c.b16 %v2448, %v2447
        %v2452 = vpack.c.b16 %v2450, %v2449
        %v2456 = vsel %vm555, %v2414, 0
        %2458 = vmatpush.bf16.msra.mxu0 0
        %2459 = vmatpush.bf16.msra.mxu0 0
        %2460 = vmatpush.bf16.msra.mxu0 0
        %2461 = vmatpush.bf16.msra.mxu0 0
        %2462 = vmatpush.bf16.msra.mxu0 0
        %2463 = vmatpush.bf16.msra.mxu0 0
        %2464 = vmatpush.bf16.msra.mxu0 %v2452
        %2465 = vmatpush.bf16.msra.mxu0 %v2451
        %2466 = vmatmul.bf16.gmra.mxu0 %v2456
        %v2467 = vpop.f32.mrf.mxu0
        %v2468 = vadd.f32 %v2435, %v2467
        %v2469 = vpop.f32.mrf.mxu0
        %2470 = vdwg.mxu0
        %v2475 = vunpack.c.l.b16 %v2419
        %v2476 = vunpack.c.l.b16 %v2420
        %v2477 = vunpack.c.l.b16 %v2421
        %v2478 = vunpack.c.l.b16 %v2422
        %v2479 = vpack.c.b16 %v2476, %v2475
        %v2480 = vpack.c.b16 %v2478, %v2477
        %2483 = vmatpush.bf16.msra.mxu0 0
        %2484 = vmatpush.bf16.msra.mxu0 0
        %2485 = vmatpush.bf16.msra.mxu0 0
        %2486 = vmatpush.bf16.msra.mxu0 0
        %2487 = vmatpush.bf16.msra.mxu0 0
        %2488 = vmatpush.bf16.msra.mxu0 0
        %2489 = vmatpush.bf16.msra.mxu0 %v2480
        %2490 = vmatpush.bf16.msra.mxu0 %v2479
        %2491 = vmatmul.bf16.gmra.mxu0 %v2456
        %v2492 = vpop.f32.mrf.mxu0
        %v2493 = vadd.f32 %v2436, %v2492
        %v2494 = vpop.f32.mrf.mxu0
        %2495 = vdwg.mxu0
        %v2500 = vunpack.c.l.b16 %v2423
        %v2501 = vunpack.c.l.b16 %v2424
        %v2502 = vunpack.c.l.b16 %v2425
        %v2503 = vunpack.c.l.b16 %v2426
        %v2504 = vpack.c.b16 %v2501, %v2500
        %v2505 = vpack.c.b16 %v2503, %v2502
        %2508 = vmatpush.bf16.msra.mxu0 0
        %2509 = vmatpush.bf16.msra.mxu0 0
        %2510 = vmatpush.bf16.msra.mxu0 0
        %2511 = vmatpush.bf16.msra.mxu0 0
        %2512 = vmatpush.bf16.msra.mxu0 0
        %2513 = vmatpush.bf16.msra.mxu0 0
        %2514 = vmatpush.bf16.msra.mxu0 %v2505
        %2515 = vmatpush.bf16.msra.mxu0 %v2504
        %2516 = vmatmul.bf16.gmra.mxu0 %v2456
        %v2517 = vpop.f32.mrf.mxu0
        %v2518 = vadd.f32 %v2437, %v2517
        %v2519 = vpop.f32.mrf.mxu0
        %2520 = vdwg.mxu0
        %v2525 = vunpack.c.l.b16 %v2427
        %v2526 = vunpack.c.l.b16 %v2428
        %v2527 = vunpack.c.l.b16 %v2429
        %v2528 = vunpack.c.l.b16 %v2430
        %v2529 = vpack.c.b16 %v2526, %v2525
        %v2530 = vpack.c.b16 %v2528, %v2527
        %2533 = vmatpush.bf16.msra.mxu0 0
        %2534 = vmatpush.bf16.msra.mxu0 0
        %2535 = vmatpush.bf16.msra.mxu0 0
        %2536 = vmatpush.bf16.msra.mxu0 0
        %2537 = vmatpush.bf16.msra.mxu0 0
        %2538 = vmatpush.bf16.msra.mxu0 0
        %2539 = vmatpush.bf16.msra.mxu0 %v2530
        %2540 = vmatpush.bf16.msra.mxu0 %v2529
        %2541 = vmatmul.bf16.gmra.mxu0 %v2456
        %v2542 = vpop.f32.mrf.mxu0
        %v2543 = vadd.f32 %v2438, %v2542
        %v2544 = vpop.f32.mrf.mxu0
        %2545 = vdwg.mxu0
        %v2546 = vpack.c.bf16 %v1839, %v1839
        %2547 = vrot.lane.b32.xlu0 %v2451, 120
        %v2548 = vpop.permute.xlu0 %2547
        %2549 = vrot.lane.b32.xlu0 %v2452, 120
        %v2550 = vpop.permute.xlu0 %2549
        %2553 = vrot.lane.b32.xlu0 %v2435, 120
        %v2554 = vpop.permute.xlu0 %2553
        %v2557 = vsel %vm555, %v2546, 0
        %2559 = vmatpush.bf16.msra.mxu0 0
        %2560 = vmatpush.bf16.msra.mxu0 0
        %2561 = vmatpush.bf16.msra.mxu0 0
        %2562 = vmatpush.bf16.msra.mxu0 0
        %2563 = vmatpush.bf16.msra.mxu0 0
        %2564 = vmatpush.bf16.msra.mxu0 0
        %2565 = vmatpush.bf16.msra.mxu0 %v2550
        %2566 = vmatpush.bf16.msra.mxu0 %v2548
        %2567 = vmatmul.bf16.gmra.mxu0 %v2557
        %v2568 = vpop.f32.mrf.mxu0
        %v2569 = vadd.f32 %v2554, %v2568
        %v2570 = vpop.f32.mrf.mxu0
        %2571 = vdwg.mxu0
        %2572 = vrot.lane.b32.xlu0 %v2479, 120
        %v2573 = vpop.permute.xlu0 %2572
        %2574 = vrot.lane.b32.xlu0 %v2480, 120
        %v2575 = vpop.permute.xlu0 %2574
        %2578 = vrot.lane.b32.xlu0 %v2436, 120
        %v2579 = vpop.permute.xlu0 %2578
        %2581 = vmatpush.bf16.msra.mxu0 0
        %2582 = vmatpush.bf16.msra.mxu0 0
        %2583 = vmatpush.bf16.msra.mxu0 0
        %2584 = vmatpush.bf16.msra.mxu0 0
        %2585 = vmatpush.bf16.msra.mxu0 0
        %2586 = vmatpush.bf16.msra.mxu0 0
        %2587 = vmatpush.bf16.msra.mxu0 %v2575
        %2588 = vmatpush.bf16.msra.mxu0 %v2573
        %2589 = vmatmul.bf16.gmra.mxu0 %v2557
        %v2590 = vpop.f32.mrf.mxu0
        %v2591 = vadd.f32 %v2579, %v2590
        %v2592 = vpop.f32.mrf.mxu0
        %2593 = vdwg.mxu0
        %2594 = vrot.lane.b32.xlu0 %v2504, 120
        %v2595 = vpop.permute.xlu0 %2594
        %2596 = vrot.lane.b32.xlu0 %v2505, 120
        %v2597 = vpop.permute.xlu0 %2596
        %2600 = vrot.lane.b32.xlu0 %v2437, 120
        %v2601 = vpop.permute.xlu0 %2600
        %2603 = vmatpush.bf16.msra.mxu0 0
        %2604 = vmatpush.bf16.msra.mxu0 0
        %2605 = vmatpush.bf16.msra.mxu0 0
        %2606 = vmatpush.bf16.msra.mxu0 0
        %2607 = vmatpush.bf16.msra.mxu0 0
        %2608 = vmatpush.bf16.msra.mxu0 0
        %2609 = vmatpush.bf16.msra.mxu0 %v2597
        %2610 = vmatpush.bf16.msra.mxu0 %v2595
        %2611 = vmatmul.bf16.gmra.mxu0 %v2557
        %v2612 = vpop.f32.mrf.mxu0
        %v2613 = vadd.f32 %v2601, %v2612
        %v2614 = vpop.f32.mrf.mxu0
        %2615 = vdwg.mxu0
        %2616 = vrot.lane.b32.xlu0 %v2529, 120
        %v2617 = vpop.permute.xlu0 %2616
        %2618 = vrot.lane.b32.xlu0 %v2530, 120
        %v2619 = vpop.permute.xlu0 %2618
        %2622 = vrot.lane.b32.xlu0 %v2438, 120
        %v2623 = vpop.permute.xlu0 %2622
        %2625 = vmatpush.bf16.msra.mxu0 0
        %2626 = vmatpush.bf16.msra.mxu0 0
        %2627 = vmatpush.bf16.msra.mxu0 0
        %2628 = vmatpush.bf16.msra.mxu0 0
        %2629 = vmatpush.bf16.msra.mxu0 0
        %2630 = vmatpush.bf16.msra.mxu0 0
        %2631 = vmatpush.bf16.msra.mxu0 %v2619
        %2632 = vmatpush.bf16.msra.mxu0 %v2617
        %2633 = vmatmul.bf16.gmra.mxu0 %v2557
        %v2634 = vpop.f32.mrf.mxu0
        %v2635 = vadd.f32 %v2623, %v2634
        %v2636 = vpop.f32.mrf.mxu0
        %2637 = vdwg.mxu0
        %v2638 = vpack.c.bf16 %v2468, %v2468
        %v2639 = vpack.c.bf16 %v2493, %v2493
        %v2640 = vpack.c.bf16 %v2518, %v2518
        %v2641 = vpack.c.bf16 %v2543, %v2543
        %v2642 = vpack.c.bf16 %v2569, %v2569
        %v2643 = vpack.c.bf16 %v2591, %v2591
        %v2644 = vpack.c.bf16 %v2613, %v2613
        %v2645 = vpack.c.bf16 %v2635, %v2635
        %v2647 = vsel %vm754, %v2638, 0
        %v2650 = vsel %vm754, %v2642, 0
        %2652 = vmatpush.bf16.xpose.msra.mxu0 0
        %2653 = vmatpush.bf16.xpose.msra.mxu0 0
        %2654 = vmatpush.bf16.xpose.msra.mxu0 0
        %2655 = vmatpush.bf16.xpose.msra.mxu0 0
        %2656 = vmatpush.bf16.xpose.msra.mxu0 0
        %2657 = vmatpush.bf16.xpose.msra.mxu0 0
        %2658 = vmatpush.bf16.xpose.msra.mxu0 0
        %2659 = vmatpush.bf16.xpose.msra.mxu0 %v2650
        %2660 = vmatmul.bf16.gmra.mxu0 %v2647
        %v2661 = vpop.f32.mrf.mxu0
        %v2662 = vadd.f32 0.0, %v2661
        %v2663 = vpop.f32.mrf.mxu0
        %2664 = vdwg.mxu0
        %v2666 = vsel %vm754, %v2639, 0
        %v2669 = vsel %vm754, %v2643, 0
        %2671 = vmatpush.bf16.xpose.msra.mxu0 0
        %2672 = vmatpush.bf16.xpose.msra.mxu0 0
        %2673 = vmatpush.bf16.xpose.msra.mxu0 0
        %2674 = vmatpush.bf16.xpose.msra.mxu0 0
        %2675 = vmatpush.bf16.xpose.msra.mxu0 0
        %2676 = vmatpush.bf16.xpose.msra.mxu0 0
        %2677 = vmatpush.bf16.xpose.msra.mxu0 0
        %2678 = vmatpush.bf16.xpose.msra.mxu0 %v2669
        %2679 = vmatmul.bf16.gmra.mxu0 %v2666
        %v2680 = vpop.f32.mrf.mxu0
        %v2681 = vadd.f32 0.0, %v2680
        %v2682 = vpop.f32.mrf.mxu0
        %2683 = vdwg.mxu0
        %v2685 = vsel %vm754, %v2640, 0
        %v2688 = vsel %vm754, %v2644, 0
        %2690 = vmatpush.bf16.xpose.msra.mxu0 0
        %2691 = vmatpush.bf16.xpose.msra.mxu0 0
        %2692 = vmatpush.bf16.xpose.msra.mxu0 0
        %2693 = vmatpush.bf16.xpose.msra.mxu0 0
        %2694 = vmatpush.bf16.xpose.msra.mxu0 0
        %2695 = vmatpush.bf16.xpose.msra.mxu0 0
        %2696 = vmatpush.bf16.xpose.msra.mxu0 0
        %2697 = vmatpush.bf16.xpose.msra.mxu0 %v2688
        %2698 = vmatmul.bf16.gmra.mxu0 %v2685
        %v2699 = vpop.f32.mrf.mxu0
        %v2700 = vadd.f32 0.0, %v2699
        %v2701 = vpop.f32.mrf.mxu0
        %2702 = vdwg.mxu0
        %v2704 = vsel %vm754, %v2641, 0
        %v2707 = vsel %vm754, %v2645, 0
        %2709 = vmatpush.bf16.xpose.msra.mxu0 0
        %2710 = vmatpush.bf16.xpose.msra.mxu0 0
        %2711 = vmatpush.bf16.xpose.msra.mxu0 0
        %2712 = vmatpush.bf16.xpose.msra.mxu0 0
        %2713 = vmatpush.bf16.xpose.msra.mxu0 0
        %2714 = vmatpush.bf16.xpose.msra.mxu0 0
        %2715 = vmatpush.bf16.xpose.msra.mxu0 0
        %2716 = vmatpush.bf16.xpose.msra.mxu0 %v2707
        %2717 = vmatmul.bf16.gmra.mxu0 %v2704
        %v2718 = vpop.f32.mrf.mxu0
        %v2719 = vadd.f32 0.0, %v2718
        %v2720 = vpop.f32.mrf.mxu0
        %2721 = vdwg.mxu0
        %v2722 = vmul.f32 %v2662, 0.35355338
        %v2723 = vmul.f32 %v2681, 0.35355338
        %v2724 = vmul.f32 %v2700, 0.35355338
        %v2725 = vmul.f32 %v2719, 0.35355338
        %v2726 = vsel %vm754, %v2722, -inf
        %2727 = vmax.xlane.f32.xlu0 %v2726
        %v2728 = vpop.xlane.xlu0 %2727
        %v2729 = vsel %vm754, %v2723, -inf
        %2730 = vmax.xlane.f32.xlu0 %v2729
        %v2731 = vpop.xlane.xlu0 %2730
        %v2732 = vsel %vm754, %v2724, -inf
        %2733 = vmax.xlane.f32.xlu0 %v2732
        %v2734 = vpop.xlane.xlu0 %2733
        %v2735 = vsel %vm754, %v2725, -inf
        %2736 = vmax.xlane.f32.xlu0 %v2735
        %v2737 = vpop.xlane.xlu0 %2736
        %v2738 = vsub.f32 %v2722, %v2728
        %v2739 = vsub.f32 %v2723, %v2731
        %v2740 = vsub.f32 %v2724, %v2734
        %v2741 = vsub.f32 %v2725, %v2737
        %v2742 = vmul.f32 %v2738, 1.442695
        %v2743 = vpow.pop %v2742
        %v2744 = vmul.f32 %v2739, 1.442695
        %v2745 = vpow.pop %v2744
        %v2746 = vmul.f32 %v2740, 1.442695
        %v2747 = vpow.pop %v2746
        %v2748 = vmul.f32 %v2741, 1.442695
        %v2749 = vpow.pop %v2748
        %v2750 = vsel %vm754, %v2743, 0.0
        %2751 = vadd.xlane.f32.xlu0 %v2750
        %v2752 = vpop.xlane.xlu0 %2751
        %v2753 = vsel %vm754, %v2745, 0.0
        %2754 = vadd.xlane.f32.xlu0 %v2753
        %v2755 = vpop.xlane.xlu0 %2754
        %v2756 = vsel %vm754, %v2747, 0.0
        %2757 = vadd.xlane.f32.xlu0 %v2756
        %v2758 = vpop.xlane.xlu0 %2757
        %v2759 = vsel %vm754, %v2749, 0.0
        %2760 = vadd.xlane.f32.xlu0 %v2759
        %v2761 = vpop.xlane.xlu0 %2760
        %v2762 = vrcp.pop %v2752
        %v2763 = vrcp.pop %v2755
        %v2764 = vrcp.pop %v2758
        %v2765 = vrcp.pop %v2761
        %v2766 = vmul.f32 %v2743, %v2762
        %v2767 = vmul.f32 %v2745, %v2763
        %v2768 = vmul.f32 %v2747, %v2764
        %v2769 = vmul.f32 %v2749, %v2765
        %v2770 = vpack.c.bf16 %v2766, %v2766
        %v2771 = vpack.c.bf16 %v2767, %v2767
        %v2772 = vpack.c.bf16 %v2768, %v2768
        %v2773 = vpack.c.bf16 %v2769, %v2769
        %v2775 = vunpack.c.l.b16 %v2642
        %v2776 = vpack.c.b16 %v2775, %v2775
        %2777 = vrot.lane.b32.xlu0 %v2776, 120
        %v2778 = vpop.permute.xlu0 %2777
        %v2780 = vsel %vm754, %v2770, 0
        %v2783 = vsel %vm910, %v2778, 0
        %2785 = vmatpush.bf16.msra.mxu0 0
        %2786 = vmatpush.bf16.msra.mxu0 0
        %2787 = vmatpush.bf16.msra.mxu0 0
        %2788 = vmatpush.bf16.msra.mxu0 0
        %2789 = vmatpush.bf16.msra.mxu0 0
        %2790 = vmatpush.bf16.msra.mxu0 0
        %2791 = vmatpush.bf16.msra.mxu0 0
        %2792 = vmatpush.bf16.msra.mxu0 %v2783
        %2793 = vmatmul.bf16.gmra.mxu0 %v2780
        %v2794 = vpop.f32.mrf.mxu0
        %v2795 = vadd.f32 0.0, %v2794
        %v2796 = vpop.f32.mrf.mxu0
        %2797 = vdwg.mxu0
        %v2799 = vunpack.c.l.b16 %v2643
        %v2800 = vpack.c.b16 %v2799, %v2799
        %2801 = vrot.lane.b32.xlu0 %v2800, 120
        %v2802 = vpop.permute.xlu0 %2801
        %v2804 = vsel %vm754, %v2771, 0
        %v2807 = vsel %vm910, %v2802, 0
        %2809 = vmatpush.bf16.msra.mxu0 0
        %2810 = vmatpush.bf16.msra.mxu0 0
        %2811 = vmatpush.bf16.msra.mxu0 0
        %2812 = vmatpush.bf16.msra.mxu0 0
        %2813 = vmatpush.bf16.msra.mxu0 0
        %2814 = vmatpush.bf16.msra.mxu0 0
        %2815 = vmatpush.bf16.msra.mxu0 0
        %2816 = vmatpush.bf16.msra.mxu0 %v2807
        %2817 = vmatmul.bf16.gmra.mxu0 %v2804
        %v2818 = vpop.f32.mrf.mxu0
        %v2819 = vadd.f32 0.0, %v2818
        %v2820 = vpop.f32.mrf.mxu0
        %2821 = vdwg.mxu0
        %v2823 = vunpack.c.l.b16 %v2644
        %v2824 = vpack.c.b16 %v2823, %v2823
        %2825 = vrot.lane.b32.xlu0 %v2824, 120
        %v2826 = vpop.permute.xlu0 %2825
        %v2828 = vsel %vm754, %v2772, 0
        %v2831 = vsel %vm910, %v2826, 0
        %2833 = vmatpush.bf16.msra.mxu0 0
        %2834 = vmatpush.bf16.msra.mxu0 0
        %2835 = vmatpush.bf16.msra.mxu0 0
        %2836 = vmatpush.bf16.msra.mxu0 0
        %2837 = vmatpush.bf16.msra.mxu0 0
        %2838 = vmatpush.bf16.msra.mxu0 0
        %2839 = vmatpush.bf16.msra.mxu0 0
        %2840 = vmatpush.bf16.msra.mxu0 %v2831
        %2841 = vmatmul.bf16.gmra.mxu0 %v2828
        %v2842 = vpop.f32.mrf.mxu0
        %v2843 = vadd.f32 0.0, %v2842
        %v2844 = vpop.f32.mrf.mxu0
        %2845 = vdwg.mxu0
        %v2847 = vunpack.c.l.b16 %v2645
        %v2848 = vpack.c.b16 %v2847, %v2847
        %2849 = vrot.lane.b32.xlu0 %v2848, 120
        %v2850 = vpop.permute.xlu0 %2849
        %v2852 = vsel %vm754, %v2773, 0
        %v2855 = vsel %vm910, %v2850, 0
        %2857 = vmatpush.bf16.msra.mxu0 0
        %2858 = vmatpush.bf16.msra.mxu0 0
        %2859 = vmatpush.bf16.msra.mxu0 0
        %2860 = vmatpush.bf16.msra.mxu0 0
        %2861 = vmatpush.bf16.msra.mxu0 0
        %2862 = vmatpush.bf16.msra.mxu0 0
        %2863 = vmatpush.bf16.msra.mxu0 0
        %2864 = vmatpush.bf16.msra.mxu0 %v2855
        %2865 = vmatmul.bf16.gmra.mxu0 %v2852
        %v2866 = vpop.f32.mrf.mxu0
        %v2867 = vadd.f32 0.0, %v2866
        %v2868 = vpop.f32.mrf.mxu0
        %2869 = vdwg.mxu0
        %v2870 = vpack.c.bf16 %v2795, %v2795
        %v2871 = vpack.c.bf16 %v2819, %v2819
        %v2872 = vpack.c.bf16 %v2843, %v2843
        %v2873 = vpack.c.bf16 %v2867, %v2867
        %v2874 = vpack.c.bf16 %v2410, %v2410
        %v2875 = vpack.c.bf16 %v2411, %v2411
        %v2876 = vpack.c.bf16 %v2412, %v2412
        %v2877 = vpack.c.bf16 %v2413, %v2413
        %v2879 = vsel %vm754, %v2870, 0
        %v2882 = vsel %vm910, %v2874, 0
        %2884 = vmatpush.bf16.msra.mxu0 0
        %2885 = vmatpush.bf16.msra.mxu0 0
        %2886 = vmatpush.bf16.msra.mxu0 0
        %2887 = vmatpush.bf16.msra.mxu0 0
        %2888 = vmatpush.bf16.msra.mxu0 0
        %2889 = vmatpush.bf16.msra.mxu0 0
        %2890 = vmatpush.bf16.msra.mxu0 0
        %2891 = vmatpush.bf16.msra.mxu0 %v2882
        %2892 = vmatmul.bf16.gmra.mxu0 %v2879
        %v2893 = vpop.f32.mrf.mxu0
        %v2894 = vadd.f32 0.0, %v2893
        %v2895 = vpop.f32.mrf.mxu0
        %2896 = vdwg.mxu0
        %v2898 = vsel %vm754, %v2871, 0
        %v2901 = vsel %vm910, %v2875, 0
        %2903 = vmatpush.bf16.msra.mxu0 0
        %2904 = vmatpush.bf16.msra.mxu0 0
        %2905 = vmatpush.bf16.msra.mxu0 0
        %2906 = vmatpush.bf16.msra.mxu0 0
        %2907 = vmatpush.bf16.msra.mxu0 0
        %2908 = vmatpush.bf16.msra.mxu0 0
        %2909 = vmatpush.bf16.msra.mxu0 0
        %2910 = vmatpush.bf16.msra.mxu0 %v2901
        %2911 = vmatmul.bf16.gmra.mxu0 %v2898
        %v2912 = vpop.f32.mrf.mxu0
        %v2913 = vadd.f32 0.0, %v2912
        %v2914 = vpop.f32.mrf.mxu0
        %2915 = vdwg.mxu0
        %v2917 = vsel %vm754, %v2872, 0
        %v2920 = vsel %vm910, %v2876, 0
        %2922 = vmatpush.bf16.msra.mxu0 0
        %2923 = vmatpush.bf16.msra.mxu0 0
        %2924 = vmatpush.bf16.msra.mxu0 0
        %2925 = vmatpush.bf16.msra.mxu0 0
        %2926 = vmatpush.bf16.msra.mxu0 0
        %2927 = vmatpush.bf16.msra.mxu0 0
        %2928 = vmatpush.bf16.msra.mxu0 0
        %2929 = vmatpush.bf16.msra.mxu0 %v2920
        %2930 = vmatmul.bf16.gmra.mxu0 %v2917
        %v2931 = vpop.f32.mrf.mxu0
        %v2932 = vadd.f32 0.0, %v2931
        %v2933 = vpop.f32.mrf.mxu0
        %2934 = vdwg.mxu0
        %v2936 = vsel %vm754, %v2873, 0
        %v2939 = vsel %vm910, %v2877, 0
        %2941 = vmatpush.bf16.msra.mxu0 0
        %2942 = vmatpush.bf16.msra.mxu0 0
        %2943 = vmatpush.bf16.msra.mxu0 0
        %2944 = vmatpush.bf16.msra.mxu0 0
        %2945 = vmatpush.bf16.msra.mxu0 0
        %2946 = vmatpush.bf16.msra.mxu0 0
        %2947 = vmatpush.bf16.msra.mxu0 0
        %2948 = vmatpush.bf16.msra.mxu0 %v2939
        %2949 = vmatmul.bf16.gmra.mxu0 %v2936
        %v2950 = vpop.f32.mrf.mxu0
        %v2951 = vadd.f32 0.0, %v2950
        %v2952 = vpop.f32.mrf.mxu0
        %2953 = vdwg.mxu0
        %v2954 = vsel %vm555, %v2894, 0.0
        %v2955 = vsel %vm555, %v2913, 0.0
        %v2956 = vadd.f32 %v2954, %v2955
        %v2957 = vsel %vm555, %v2932, 0.0
        %v2958 = vadd.f32 %v2956, %v2957
        %v2959 = vsel %vm555, %v2951, 0.0
        %v2960 = vadd.f32 %v2958, %v2959
        %v2961 = vperm.slane %v1840, 7
        %v2962 = vadd.f32 %v2960, %v2961
        %v2963 = vadd.f32 %v2360, %v2962
        %v2964 = vsel %vm555, %v2963, 0.0
        %2965 = vadd.xlane.f32.xlu0 %v2964
        %v2966 = vpop.xlane.xlu0 %2965
        %v2967 = vmul.f32 %v2966, %v565
        %v2968 = vsub.f32 %v2963, %v2967
        %v2969 = vmul.f32 %v2968, %v2968
        %v2970 = vsel %vm555, %v2969, 0.0
        %2971 = vadd.xlane.f32.xlu0 %v2970
        %v2972 = vpop.xlane.xlu0 %2971
        %v2973 = vmul.f32 %v2972, %v565
        %v2974 = vadd.f32 %v2973, 1e-05
        %v2975 = vrsqrt.pop %v2974
        %v2976 = vmul.f32 %v2975, %v2974
        %v2977 = vmul.f32 %v2976, %v2975
        %v2978 = vmul.f32 0.5, %v2977
        %v2979 = vsub.f32 1.5, %v2978
        %v2980 = vmul.f32 %v2975, %v2979
        %vm2981 = vweird.f32 %v2974
        %vm2982 = vweird.f32 %v2975
        %vm2983 = vmor %vm2981, %vm2982
        %v2984 = vsel %vm2983, %v2975, %v2980
        %v2985 = vmul.f32 %v2968, %v2984
        %v2986 = vperm.slane %v1840, 4
        %v2987 = vmul.f32 %v2985, %v2986
        %v2988 = vperm.slane %v1840, 5
        %v2989 = vadd.f32 %v2987, %v2988
        %s2990 = scalar_lea.vmem %s6, 64
        %v2991 = vld [vmem:[%s2990] sm:$0xff]
        %v2992 = vld [vmem:[%s2990 + $0x8] sm:$0xff]
        %v2993 = vld [vmem:[%s2990 + $0x10] sm:$0xff]
        %v2994 = vld [vmem:[%s2990 + $0x18] sm:$0xff]
        %s2995 = scalar_lea.vmem %s7, 2
        %v2996 = vld [vmem:[%s2995] sm:$0x1]
        %s2997 = scalar_lea.vmem %s8, 256
        %v2998 = vld [vmem:[%s2997] sm:$0xff]
        %v2999 = vld [vmem:[%s2997 + $0x8] sm:$0xff]
        %v3000 = vld [vmem:[%s2997 + $0x10] sm:$0xff]
        %v3001 = vld [vmem:[%s2997 + $0x18] sm:$0xff]
        %v3002 = vld [vmem:[%s2997 + $0x20] sm:$0xff]
        %v3003 = vld [vmem:[%s2997 + $0x28] sm:$0xff]
        %v3004 = vld [vmem:[%s2997 + $0x30] sm:$0xff]
        %v3005 = vld [vmem:[%s2997 + $0x38] sm:$0xff]
        %v3006 = vld [vmem:[%s2997 + $0x40] sm:$0xff]
        %v3007 = vld [vmem:[%s2997 + $0x48] sm:$0xff]
        %v3008 = vld [vmem:[%s2997 + $0x50] sm:$0xff]
        %v3009 = vld [vmem:[%s2997 + $0x58] sm:$0xff]
        %v3010 = vld [vmem:[%s2997 + $0x60] sm:$0xff]
        %v3011 = vld [vmem:[%s2997 + $0x68] sm:$0xff]
        %v3012 = vld [vmem:[%s2997 + $0x70] sm:$0xff]
        %v3013 = vld [vmem:[%s2997 + $0x78] sm:$0xff]
        %v3014 = vpack.c.bf16 %v2989, %v2989
        %v3015 = vpack.c.bf16 %v2992, %v2991
        %v3016 = vpack.c.bf16 %v2994, %v2993
        %v3018 = vperm.slane %v2996, 0
        %v3021 = vsel %vm555, %v3014, 0
        %3023 = vmatpush.bf16.msra.mxu0 0
        %3024 = vmatpush.bf16.msra.mxu0 0
        %3025 = vmatpush.bf16.msra.mxu0 0
        %3026 = vmatpush.bf16.msra.mxu0 0
        %3027 = vmatpush.bf16.msra.mxu0 0
        %3028 = vmatpush.bf16.msra.mxu0 0
        %3029 = vmatpush.bf16.msra.mxu0 %v3016
        %3030 = vmatpush.bf16.msra.mxu0 %v3015
        %3031 = vmatmul.bf16.gmra.mxu0 %v3021
        %v3032 = vpop.f32.mrf.mxu0
        %v3033 = vadd.f32 %v3018, %v3032
        %v3034 = vpop.f32.mrf.mxu0
        %3035 = vdwg.mxu0
        %v3036 = vmul.f32 %v3033, 0.5
        %v3037 = vmul.f32 %v3033, 0.044715
        %v3038 = vmul.f32 %v3037, %v3033
        %v3039 = vmul.f32 %v3038, %v3033
        %v3040 = vadd.f32 %v3033, %v3039
        %v3041 = vmul.f32 %v3040, 0.7978846
        %v3042 = vtanh.pop %v3041
        %v3043 = vadd.f32 %v3042, 1.0
        %v3044 = vmul.f32 %v3036, %v3043
        %v3045 = vpack.c.bf16 %v3044, %v3044
        %v3046 = vpack.c.bf16 %v2999, %v2998
        %v3047 = vpack.c.bf16 %v3001, %v3000
        %v3048 = vpack.c.bf16 %v3003, %v3002
        %v3049 = vpack.c.bf16 %v3005, %v3004
        %v3050 = vpack.c.bf16 %v3007, %v3006
        %v3051 = vpack.c.bf16 %v3009, %v3008
        %v3052 = vpack.c.bf16 %v3011, %v3010
        %v3053 = vpack.c.bf16 %v3013, %v3012
        %v3054 = vperm.slane %v1841, 0
        %3055 = vmatpush.bf16.msra.mxu0 %v3053
        %3056 = vmatpush.bf16.msra.mxu0 %v3052
        %3057 = vmatpush.bf16.msra.mxu0 %v3051
        %3058 = vmatpush.bf16.msra.mxu0 %v3050
        %3059 = vmatpush.bf16.msra.mxu0 %v3049
        %3060 = vmatpush.bf16.msra.mxu0 %v3048
        %3061 = vmatpush.bf16.msra.mxu0 %v3047
        %3062 = vmatpush.bf16.msra.mxu0 %v3046
        %3063 = vmatmul.bf16.gmra.mxu0 %v3045
        %v3064 = vpop.f32.mrf.mxu0
        %v3065 = vadd.f32 %v3054, %v3064
        %v3066 = vpop.f32.mrf.mxu0
        %3067 = vdwg.mxu0
        %v3068 = vadd.f32 %v2963, %v3065
        %s3069 = scalar_lea.vmem %s10, 16
        %v3070 = vld [vmem:[%s3069] sm:$0xff]
        %v3071 = vld [vmem:[%s3069 + $0x8] sm:$0x1]
        %v3072 = vsel %vm555, %v3068, 0.0
        %3073 = vadd.xlane.f32.xlu0 %v3072
        %v3074 = vpop.xlane.xlu0 %3073
        %v3075 = vmul.f32 %v3074, %v565
        %v3076 = vsub.f32 %v3068, %v3075
        %v3077 = vmul.f32 %v3076, %v3076
        %v3078 = vsel %vm555, %v3077, 0.0
        %3079 = vadd.xlane.f32.xlu0 %v3078
        %v3080 = vpop.xlane.xlu0 %3079
        %v3081 = vmul.f32 %v3080, %v565
        %v3082 = vadd.f32 %v3081, 1e-05
        %v3083 = vrsqrt.pop %v3082
        %v3084 = vmul.f32 %v3083, %v3082
        %v3085 = vmul.f32 %v3084, %v3083
        %v3086 = vmul.f32 0.5, %v3085
        %v3087 = vsub.f32 1.5, %v3086
        %v3088 = vmul.f32 %v3083, %v3087
        %vm3089 = vweird.f32 %v3082
        %vm3090 = vweird.f32 %v3083
        %vm3091 = vmor %vm3089, %vm3090
        %v3092 = vsel %vm3091, %v3083, %v3088
        %v3093 = vmul.f32 %v3076, %v3092
        %v3094 = vperm.slane %v3070, 0
        %v3095 = vmul.f32 %v3093, %v3094
        %v3096 = vperm.slane %v3070, 1
        %v3097 = vadd.f32 %v3095, %v3096
        %s3098 = scalar_lea.vmem %s3, 384
        %v3099 = vld [vmem:[%s3098] sm:$0xff]
        %v3100 = vld [vmem:[%s3098 + $0x8] sm:$0xff]
        %v3101 = vld [vmem:[%s3098 + $0x10] sm:$0xff]
        %v3102 = vld [vmem:[%s3098 + $0x18] sm:$0xff]
        %v3103 = vld [vmem:[%s3098 + $0x20] sm:$0xff]
        %v3104 = vld [vmem:[%s3098 + $0x28] sm:$0xff]
        %v3105 = vld [vmem:[%s3098 + $0x30] sm:$0xff]
        %v3106 = vld [vmem:[%s3098 + $0x38] sm:$0xff]
        %v3107 = vld [vmem:[%s3098 + $0x40] sm:$0xff]
        %v3108 = vld [vmem:[%s3098 + $0x48] sm:$0xff]
        %v3109 = vld [vmem:[%s3098 + $0x50] sm:$0xff]
        %v3110 = vld [vmem:[%s3098 + $0x58] sm:$0xff]
        %v3111 = vld [vmem:[%s3098 + $0x60] sm:$0xff]
        %v3112 = vld [vmem:[%s3098 + $0x68] sm:$0xff]
        %v3113 = vld [vmem:[%s3098 + $0x70] sm:$0xff]
        %v3114 = vld [vmem:[%s3098 + $0x78] sm:$0xff]
        %s3115 = scalar_lea.vmem %s5, 12
        %v3116 = vld [vmem:[%s3115] sm:$0x1]
        %v3117 = vld [vmem:[%s3115 + $0x1] sm:$0x1]
        %v3118 = vld [vmem:[%s3115 + $0x2] sm:$0x1]
        %v3119 = vld [vmem:[%s3115 + $0x3] sm:$0x1]
        %s3120 = scalar_lea.vmem %s4, 96
        %v3121 = vld [vmem:[%s3120] sm:$0xff]
        %v3122 = vld [vmem:[%s3120 + $0x8] sm:$0xff]
        %v3123 = vld [vmem:[%s3120 + $0x10] sm:$0xff]
        %v3124 = vld [vmem:[%s3120 + $0x18] sm:$0xff]
        %v3125 = vpack.c.bf16 %v3097, %v3097
        %v3126 = vpack.c.bf16 %v3099, %v3099
        %v3127 = vpack.c.bf16 %v3100, %v3100
        %v3128 = vpack.c.bf16 %v3101, %v3101
        %v3129 = vpack.c.bf16 %v3102, %v3102
        %v3130 = vpack.c.bf16 %v3103, %v3103
        %v3131 = vpack.c.bf16 %v3104, %v3104
        %v3132 = vpack.c.bf16 %v3105, %v3105
        %v3133 = vpack.c.bf16 %v3106, %v3106
        %v3134 = vpack.c.bf16 %v3107, %v3107
        %v3135 = vpack.c.bf16 %v3108, %v3108
        %v3136 = vpack.c.bf16 %v3109, %v3109
        %v3137 = vpack.c.bf16 %v3110, %v3110
        %v3138 = vpack.c.bf16 %v3111, %v3111
        %v3139 = vpack.c.bf16 %v3112, %v3112
        %v3140 = vpack.c.bf16 %v3113, %v3113
        %v3141 = vpack.c.bf16 %v3114, %v3114
        %v3146 = vperm.slane %v3116, 0
        %v3147 = vperm.slane %v3117, 0
        %v3148 = vperm.slane %v3118, 0
        %v3149 = vperm.slane %v3119, 0
        %v3158 = vunpack.c.l.b16 %v3126
        %v3159 = vunpack.c.l.b16 %v3127
        %v3160 = vunpack.c.l.b16 %v3128
        %v3161 = vunpack.c.l.b16 %v3129
        %v3162 = vpack.c.b16 %v3159, %v3158
        %v3163 = vpack.c.b16 %v3161, %v3160
        %v3167 = vsel %vm555, %v3125, 0
        %3169 = vmatpush.bf16.msra.mxu0 0
        %3170 = vmatpush.bf16.msra.mxu0 0
        %3171 = vmatpush.bf16.msra.mxu0 0
        %3172 = vmatpush.bf16.msra.mxu0 0
        %3173 = vmatpush.bf16.msra.mxu0 0
        %3174 = vmatpush.bf16.msra.mxu0 0
        %3175 = vmatpush.bf16.msra.mxu0 %v3163
        %3176 = vmatpush.bf16.msra.mxu0 %v3162
        %3177 = vmatmul.bf16.gmra.mxu0 %v3167
        %v3178 = vpop.f32.mrf.mxu0
        %v3179 = vadd.f32 %v3146, %v3178
        %v3180 = vpop.f32.mrf.mxu0
        %3181 = vdwg.mxu0
        %v3186 = vunpack.c.l.b16 %v3130
        %v3187 = vunpack.c.l.b16 %v3131
        %v3188 = vunpack.c.l.b16 %v3132
        %v3189 = vunpack.c.l.b16 %v3133
        %v3190 = vpack.c.b16 %v3187, %v3186
        %v3191 = vpack.c.b16 %v3189, %v3188
        %3194 = vmatpush.bf16.msra.mxu0 0
        %3195 = vmatpush.bf16.msra.mxu0 0
        %3196 = vmatpush.bf16.msra.mxu0 0
        %3197 = vmatpush.bf16.msra.mxu0 0
        %3198 = vmatpush.bf16.msra.mxu0 0
        %3199 = vmatpush.bf16.msra.mxu0 0
        %3200 = vmatpush.bf16.msra.mxu0 %v3191
        %3201 = vmatpush.bf16.msra.mxu0 %v3190
        %3202 = vmatmul.bf16.gmra.mxu0 %v3167
        %v3203 = vpop.f32.mrf.mxu0
        %v3204 = vadd.f32 %v3147, %v3203
        %v3205 = vpop.f32.mrf.mxu0
        %3206 = vdwg.mxu0
        %v3211 = vunpack.c.l.b16 %v3134
        %v3212 = vunpack.c.l.b16 %v3135
        %v3213 = vunpack.c.l.b16 %v3136
        %v3214 = vunpack.c.l.b16 %v3137
        %v3215 = vpack.c.b16 %v3212, %v3211
        %v3216 = vpack.c.b16 %v3214, %v3213
        %3219 = vmatpush.bf16.msra.mxu0 0
        %3220 = vmatpush.bf16.msra.mxu0 0
        %3221 = vmatpush.bf16.msra.mxu0 0
        %3222 = vmatpush.bf16.msra.mxu0 0
        %3223 = vmatpush.bf16.msra.mxu0 0
        %3224 = vmatpush.bf16.msra.mxu0 0
        %3225 = vmatpush.bf16.msra.mxu0 %v3216
        %3226 = vmatpush.bf16.msra.mxu0 %v3215
        %3227 = vmatmul.bf16.gmra.mxu0 %v3167
        %v3228 = vpop.f32.mrf.mxu0
        %v3229 = vadd.f32 %v3148, %v3228
        %v3230 = vpop.f32.mrf.mxu0
        %3231 = vdwg.mxu0
        %v3236 = vunpack.c.l.b16 %v3138
        %v3237 = vunpack.c.l.b16 %v3139
        %v3238 = vunpack.c.l.b16 %v3140
        %v3239 = vunpack.c.l.b16 %v3141
        %v3240 = vpack.c.b16 %v3237, %v3236
        %v3241 = vpack.c.b16 %v3239, %v3238
        %3244 = vmatpush.bf16.msra.mxu0 0
        %3245 = vmatpush.bf16.msra.mxu0 0
        %3246 = vmatpush.bf16.msra.mxu0 0
        %3247 = vmatpush.bf16.msra.mxu0 0
        %3248 = vmatpush.bf16.msra.mxu0 0
        %3249 = vmatpush.bf16.msra.mxu0 0
        %3250 = vmatpush.bf16.msra.mxu0 %v3241
        %3251 = vmatpush.bf16.msra.mxu0 %v3240
        %3252 = vmatmul.bf16.gmra.mxu0 %v3167
        %v3253 = vpop.f32.mrf.mxu0
        %v3254 = vadd.f32 %v3149, %v3253
        %v3255 = vpop.f32.mrf.mxu0
        %3256 = vdwg.mxu0
        %v3257 = vpack.c.bf16 %v3179, %v3179
        %v3258 = vpack.c.bf16 %v3204, %v3204
        %v3259 = vpack.c.bf16 %v3229, %v3229
        %v3260 = vpack.c.bf16 %v3254, %v3254
        %v3262 = vunpack.c.l.b16 %v3257
        %v3263 = vpack.c.b16 %v3262, %v3262
        %3264 = vrot.lane.b32.xlu0 %v3263, 120
        %v3265 = vpop.permute.xlu0 %3264
        %v3267 = vsel %vm754, %v3257, 0
        %v3270 = vsel %vm754, %v3265, 0
        %3272 = vmatpush.bf16.xpose.msra.mxu0 0
        %3273 = vmatpush.bf16.xpose.msra.mxu0 0
        %3274 = vmatpush.bf16.xpose.msra.mxu0 0
        %3275 = vmatpush.bf16.xpose.msra.mxu0 0
        %3276 = vmatpush.bf16.xpose.msra.mxu0 0
        %3277 = vmatpush.bf16.xpose.msra.mxu0 0
        %3278 = vmatpush.bf16.xpose.msra.mxu0 0
        %3279 = vmatpush.bf16.xpose.msra.mxu0 %v3270
        %3280 = vmatmul.bf16.gmra.mxu0 %v3267
        %v3281 = vpop.f32.mrf.mxu0
        %v3282 = vadd.f32 0.0, %v3281
        %v3283 = vpop.f32.mrf.mxu0
        %3284 = vdwg.mxu0
        %v3286 = vunpack.c.l.b16 %v3258
        %v3287 = vpack.c.b16 %v3286, %v3286
        %3288 = vrot.lane.b32.xlu0 %v3287, 120
        %v3289 = vpop.permute.xlu0 %3288
        %v3291 = vsel %vm754, %v3258, 0
        %v3294 = vsel %vm754, %v3289, 0
        %3296 = vmatpush.bf16.xpose.msra.mxu0 0
        %3297 = vmatpush.bf16.xpose.msra.mxu0 0
        %3298 = vmatpush.bf16.xpose.msra.mxu0 0
        %3299 = vmatpush.bf16.xpose.msra.mxu0 0
        %3300 = vmatpush.bf16.xpose.msra.mxu0 0
        %3301 = vmatpush.bf16.xpose.msra.mxu0 0
        %3302 = vmatpush.bf16.xpose.msra.mxu0 0
        %3303 = vmatpush.bf16.xpose.msra.mxu0 %v3294
        %3304 = vmatmul.bf16.gmra.mxu0 %v3291
        %v3305 = vpop.f32.mrf.mxu0
        %v3306 = vadd.f32 0.0, %v3305
        %v3307 = vpop.f32.mrf.mxu0
        %3308 = vdwg.mxu0
        %v3310 = vunpack.c.l.b16 %v3259
        %v3311 = vpack.c.b16 %v3310, %v3310
        %3312 = vrot.lane.b32.xlu0 %v3311, 120
        %v3313 = vpop.permute.xlu0 %3312
        %v3315 = vsel %vm754, %v3259, 0
        %v3318 = vsel %vm754, %v3313, 0
        %3320 = vmatpush.bf16.xpose.msra.mxu0 0
        %3321 = vmatpush.bf16.xpose.msra.mxu0 0
        %3322 = vmatpush.bf16.xpose.msra.mxu0 0
        %3323 = vmatpush.bf16.xpose.msra.mxu0 0
        %3324 = vmatpush.bf16.xpose.msra.mxu0 0
        %3325 = vmatpush.bf16.xpose.msra.mxu0 0
        %3326 = vmatpush.bf16.xpose.msra.mxu0 0
        %3327 = vmatpush.bf16.xpose.msra.mxu0 %v3318
        %3328 = vmatmul.bf16.gmra.mxu0 %v3315
        %v3329 = vpop.f32.mrf.mxu0
        %v3330 = vadd.f32 0.0, %v3329
        %v3331 = vpop.f32.mrf.mxu0
        %3332 = vdwg.mxu0
        %v3334 = vunpack.c.l.b16 %v3260
        %v3335 = vpack.c.b16 %v3334, %v3334
        %3336 = vrot.lane.b32.xlu0 %v3335, 120
        %v3337 = vpop.permute.xlu0 %3336
        %v3339 = vsel %vm754, %v3260, 0
        %v3342 = vsel %vm754, %v3337, 0
        %3344 = vmatpush.bf16.xpose.msra.mxu0 0
        %3345 = vmatpush.bf16.xpose.msra.mxu0 0
        %3346 = vmatpush.bf16.xpose.msra.mxu0 0
        %3347 = vmatpush.bf16.xpose.msra.mxu0 0
        %3348 = vmatpush.bf16.xpose.msra.mxu0 0
        %3349 = vmatpush.bf16.xpose.msra.mxu0 0
        %3350 = vmatpush.bf16.xpose.msra.mxu0 0
        %3351 = vmatpush.bf16.xpose.msra.mxu0 %v3342
        %3352 = vmatmul.bf16.gmra.mxu0 %v3339
        %v3353 = vpop.f32.mrf.mxu0
        %v3354 = vadd.f32 0.0, %v3353
        %v3355 = vpop.f32.mrf.mxu0
        %3356 = vdwg.mxu0
        %v3357 = vmul.f32 %v3282, 0.35355338
        %v3358 = vmul.f32 %v3306, 0.35355338
        %v3359 = vmul.f32 %v3330, 0.35355338
        %v3360 = vmul.f32 %v3354, 0.35355338
        %v3361 = vadd.f32 %v3357, %v553
        %v3362 = vadd.f32 %v3358, %v553
        %v3363 = vadd.f32 %v3359, %v553
        %v3364 = vadd.f32 %v3360, %v553
        %v3365 = vsel %vm754, %v3361, -inf
        %3366 = vmax.xlane.f32.xlu0 %v3365
        %v3367 = vpop.xlane.xlu0 %3366
        %v3368 = vsel %vm754, %v3362, -inf
        %3369 = vmax.xlane.f32.xlu0 %v3368
        %v3370 = vpop.xlane.xlu0 %3369
        %v3371 = vsel %vm754, %v3363, -inf
        %3372 = vmax.xlane.f32.xlu0 %v3371
        %v3373 = vpop.xlane.xlu0 %3372
        %v3374 = vsel %vm754, %v3364, -inf
        %3375 = vmax.xlane.f32.xlu0 %v3374
        %v3376 = vpop.xlane.xlu0 %3375
        %v3377 = vsub.f32 %v3361, %v3367
        %v3378 = vsub.f32 %v3362, %v3370
        %v3379 = vsub.f32 %v3363, %v3373
        %v3380 = vsub.f32 %v3364, %v3376
        %v3381 = vmul.f32 %v3377, 1.442695
        %v3382 = vpow.pop %v3381
        %v3383 = vmul.f32 %v3378, 1.442695
        %v3384 = vpow.pop %v3383
        %v3385 = vmul.f32 %v3379, 1.442695
        %v3386 = vpow.pop %v3385
        %v3387 = vmul.f32 %v3380, 1.442695
        %v3388 = vpow.pop %v3387
        %v3389 = vsel %vm754, %v3382, 0.0
        %3390 = vadd.xlane.f32.xlu0 %v3389
        %v3391 = vpop.xlane.xlu0 %3390
        %v3392 = vsel %vm754, %v3384, 0.0
        %3393 = vadd.xlane.f32.xlu0 %v3392
        %v3394 = vpop.xlane.xlu0 %3393
        %v3395 = vsel %vm754, %v3386, 0.0
        %3396 = vadd.xlane.f32.xlu0 %v3395
        %v3397 = vpop.xlane.xlu0 %3396
        %v3398 = vsel %vm754, %v3388, 0.0
        %3399 = vadd.xlane.f32.xlu0 %v3398
        %v3400 = vpop.xlane.xlu0 %3399
        %v3401 = vrcp.pop %v3391
        %v3402 = vrcp.pop %v3394
        %v3403 = vrcp.pop %v3397
        %v3404 = vrcp.pop %v3400
        %v3405 = vmul.f32 %v3382, %v3401
        %v3406 = vmul.f32 %v3384, %v3402
        %v3407 = vmul.f32 %v3386, %v3403
        %v3408 = vmul.f32 %v3388, %v3404
        %v3409 = vpack.c.bf16 %v3405, %v3405
        %v3410 = vpack.c.bf16 %v3406, %v3406
        %v3411 = vpack.c.bf16 %v3407, %v3407
        %v3412 = vpack.c.bf16 %v3408, %v3408
        %3413 = vrot.lane.b32.xlu0 %v3263, 112
        %v3414 = vpop.permute.xlu0 %3413
        %v3416 = vsel %vm754, %v3409, 0
        %v3419 = vsel %vm910, %v3414, 0
        %3421 = vmatpush.bf16.msra.mxu0 0
        %3422 = vmatpush.bf16.msra.mxu0 0
        %3423 = vmatpush.bf16.msra.mxu0 0
        %3424 = vmatpush.bf16.msra.mxu0 0
        %3425 = vmatpush.bf16.msra.mxu0 0
        %3426 = vmatpush.bf16.msra.mxu0 0
        %3427 = vmatpush.bf16.msra.mxu0 0
        %3428 = vmatpush.bf16.msra.mxu0 %v3419
        %3429 = vmatmul.bf16.gmra.mxu0 %v3416
        %v3430 = vpop.f32.mrf.mxu0
        %v3431 = vadd.f32 0.0, %v3430
        %v3432 = vpop.f32.mrf.mxu0
        %3433 = vdwg.mxu0
        %3434 = vrot.lane.b32.xlu0 %v3287, 112
        %v3435 = vpop.permute.xlu0 %3434
        %v3437 = vsel %vm754, %v3410, 0
        %v3440 = vsel %vm910, %v3435, 0
        %3442 = vmatpush.bf16.msra.mxu0 0
        %3443 = vmatpush.bf16.msra.mxu0 0
        %3444 = vmatpush.bf16.msra.mxu0 0
        %3445 = vmatpush.bf16.msra.mxu0 0
        %3446 = vmatpush.bf16.msra.mxu0 0
        %3447 = vmatpush.bf16.msra.mxu0 0
        %3448 = vmatpush.bf16.msra.mxu0 0
        %3449 = vmatpush.bf16.msra.mxu0 %v3440
        %3450 = vmatmul.bf16.gmra.mxu0 %v3437
        %v3451 = vpop.f32.mrf.mxu0
        %v3452 = vadd.f32 0.0, %v3451
        %v3453 = vpop.f32.mrf.mxu0
        %3454 = vdwg.mxu0
        %3455 = vrot.lane.b32.xlu0 %v3311, 112
        %v3456 = vpop.permute.xlu0 %3455
        %v3458 = vsel %vm754, %v3411, 0
        %v3461 = vsel %vm910, %v3456, 0
        %3463 = vmatpush.bf16.msra.mxu0 0
        %3464 = vmatpush.bf16.msra.mxu0 0
        %3465 = vmatpush.bf16.msra.mxu0 0
        %3466 = vmatpush.bf16.msra.mxu0 0
        %3467 = vmatpush.bf16.msra.mxu0 0
        %3468 = vmatpush.bf16.msra.mxu0 0
        %3469 = vmatpush.bf16.msra.mxu0 0
        %3470 = vmatpush.bf16.msra.mxu0 %v3461
        %3471 = vmatmul.bf16.gmra.mxu0 %v3458
        %v3472 = vpop.f32.mrf.mxu0
        %v3473 = vadd.f32 0.0, %v3472
        %v3474 = vpop.f32.mrf.mxu0
        %3475 = vdwg.mxu0
        %3476 = vrot.lane.b32.xlu0 %v3335, 112
        %v3477 = vpop.permute.xlu0 %3476
        %v3479 = vsel %vm754, %v3412, 0
        %v3482 = vsel %vm910, %v3477, 0
        %3484 = vmatpush.bf16.msra.mxu0 0
        %3485 = vmatpush.bf16.msra.mxu0 0
        %3486 = vmatpush.bf16.msra.mxu0 0
        %3487 = vmatpush.bf16.msra.mxu0 0
        %3488 = vmatpush.bf16.msra.mxu0 0
        %3489 = vmatpush.bf16.msra.mxu0 0
        %3490 = vmatpush.bf16.msra.mxu0 0
        %3491 = vmatpush.bf16.msra.mxu0 %v3482
        %3492 = vmatmul.bf16.gmra.mxu0 %v3479
        %v3493 = vpop.f32.mrf.mxu0
        %v3494 = vadd.f32 0.0, %v3493
        %v3495 = vpop.f32.mrf.mxu0
        %3496 = vdwg.mxu0
        %v3497 = vpack.c.bf16 %v3431, %v3431
        %v3498 = vpack.c.bf16 %v3452, %v3452
        %v3499 = vpack.c.bf16 %v3473, %v3473
        %v3500 = vpack.c.bf16 %v3494, %v3494
        %v3501 = vpack.c.bf16 %v3121, %v3121
        %v3502 = vpack.c.bf16 %v3122, %v3122
        %v3503 = vpack.c.bf16 %v3123, %v3123
        %v3504 = vpack.c.bf16 %v3124, %v3124
        %v3506 = vsel %vm754, %v3497, 0
        %v3509 = vsel %vm910, %v3501, 0
        %3511 = vmatpush.bf16.msra.mxu0 0
        %3512 = vmatpush.bf16.msra.mxu0 0
        %3513 = vmatpush.bf16.msra.mxu0 0
        %3514 = vmatpush.bf16.msra.mxu0 0
        %3515 = vmatpush.bf16.msra.mxu0 0
        %3516 = vmatpush.bf16.msra.mxu0 0
        %3517 = vmatpush.bf16.msra.mxu0 0
        %3518 = vmatpush.bf16.msra.mxu0 %v3509
        %3519 = vmatmul.bf16.gmra.mxu0 %v3506
        %v3520 = vpop.f32.mrf.mxu0
        %v3521 = vadd.f32 0.0, %v3520
        %v3522 = vpop.f32.mrf.mxu0
        %3523 = vdwg.mxu0
        %v3525 = vsel %vm754, %v3498, 0
        %v3528 = vsel %vm910, %v3502, 0
        %3530 = vmatpush.bf16.msra.mxu0 0
        %3531 = vmatpush.bf16.msra.mxu0 0
        %3532 = vmatpush.bf16.msra.mxu0 0
        %3533 = vmatpush.bf16.msra.mxu0 0
        %3534 = vmatpush.bf16.msra.mxu0 0
        %3535 = vmatpush.bf16.msra.mxu0 0
        %3536 = vmatpush.bf16.msra.mxu0 0
        %3537 = vmatpush.bf16.msra.mxu0 %v3528
        %3538 = vmatmul.bf16.gmra.mxu0 %v3525
        %v3539 = vpop.f32.mrf.mxu0
        %v3540 = vadd.f32 0.0, %v3539
        %v3541 = vpop.f32.mrf.mxu0
        %3542 = vdwg.mxu0
        %v3544 = vsel %vm754, %v3499, 0
        %v3547 = vsel %vm910, %v3503, 0
        %3549 = vmatpush.bf16.msra.mxu0 0
        %3550 = vmatpush.bf16.msra.mxu0 0
        %3551 = vmatpush.bf16.msra.mxu0 0
        %3552 = vmatpush.bf16.msra.mxu0 0
        %3553 = vmatpush.bf16.msra.mxu0 0
        %3554 = vmatpush.bf16.msra.mxu0 0
        %3555 = vmatpush.bf16.msra.mxu0 0
        %3556 = vmatpush.bf16.msra.mxu0 %v3547
        %3557 = vmatmul.bf16.gmra.mxu0 %v3544
        %v3558 = vpop.f32.mrf.mxu0
        %v3559 = vadd.f32 0.0, %v3558
        %v3560 = vpop.f32.mrf.mxu0
        %3561 = vdwg.mxu0
        %v3563 = vsel %vm754, %v3500, 0
        %v3566 = vsel %vm910, %v3504, 0
        %3568 = vmatpush.bf16.msra.mxu0 0
        %3569 = vmatpush.bf16.msra.mxu0 0
        %3570 = vmatpush.bf16.msra.mxu0 0
        %3571 = vmatpush.bf16.msra.mxu0 0
        %3572 = vmatpush.bf16.msra.mxu0 0
        %3573 = vmatpush.bf16.msra.mxu0 0
        %3574 = vmatpush.bf16.msra.mxu0 0
        %3575 = vmatpush.bf16.msra.mxu0 %v3566
        %3576 = vmatmul.bf16.gmra.mxu0 %v3563
        %v3577 = vpop.f32.mrf.mxu0
        %v3578 = vadd.f32 0.0, %v3577
        %v3579 = vpop.f32.mrf.mxu0
        %3580 = vdwg.mxu0
        %v3581 = vsel %vm555, %v3521, 0.0
        %v3582 = vsel %vm555, %v3540, 0.0
        %v3583 = vadd.f32 %v3581, %v3582
        %v3584 = vsel %vm555, %v3559, 0.0
        %v3585 = vadd.f32 %v3583, %v3584
        %v3586 = vsel %vm555, %v3578, 0.0
        %v3587 = vadd.f32 %v3585, %v3586
        %v3588 = vperm.slane %v3070, 6
        %v3589 = vadd.f32 %v3587, %v3588
        %v3590 = vadd.f32 %v3068, %v3589
        %v3591 = vsel %vm555, %v3590, 0.0
        %3592 = vadd.xlane.f32.xlu0 %v3591
        %v3593 = vpop.xlane.xlu0 %3592
        %v3594 = vmul.f32 %v3593, %v565
        %v3595 = vsub.f32 %v3590, %v3594
        %v3596 = vmul.f32 %v3595, %v3595
        %v3597 = vsel %vm555, %v3596, 0.0
        %3598 = vadd.xlane.f32.xlu0 %v3597
        %v3599 = vpop.xlane.xlu0 %3598
        %v3600 = vmul.f32 %v3599, %v565
        %v3601 = vadd.f32 %v3600, 1e-05
        %v3602 = vrsqrt.pop %v3601
        %v3603 = vmul.f32 %v3602, %v3601
        %v3604 = vmul.f32 %v3603, %v3602
        %v3605 = vmul.f32 0.5, %v3604
        %v3606 = vsub.f32 1.5, %v3605
        %v3607 = vmul.f32 %v3602, %v3606
        %vm3608 = vweird.f32 %v3601
        %vm3609 = vweird.f32 %v3602
        %vm3610 = vmor %vm3608, %vm3609
        %v3611 = vsel %vm3610, %v3602, %v3607
        %v3612 = vmul.f32 %v3595, %v3611
        %v3613 = vperm.slane %v3070, 2
        %v3614 = vmul.f32 %v3612, %v3613
        %v3615 = vperm.slane %v3070, 3
        %v3616 = vadd.f32 %v3614, %v3615
        %s3617 = scalar_lea.vmem %s3, 640
        %v3618 = vld [vmem:[%s3617] sm:$0xff]
        %v3619 = vld [vmem:[%s3617 + $0x8] sm:$0xff]
        %v3620 = vld [vmem:[%s3617 + $0x10] sm:$0xff]
        %v3621 = vld [vmem:[%s3617 + $0x18] sm:$0xff]
        %v3622 = vld [vmem:[%s3617 + $0x20] sm:$0xff]
        %v3623 = vld [vmem:[%s3617 + $0x28] sm:$0xff]
        %v3624 = vld [vmem:[%s3617 + $0x30] sm:$0xff]
        %v3625 = vld [vmem:[%s3617 + $0x38] sm:$0xff]
        %v3626 = vld [vmem:[%s3617 + $0x40] sm:$0xff]
        %v3627 = vld [vmem:[%s3617 + $0x48] sm:$0xff]
        %v3628 = vld [vmem:[%s3617 + $0x50] sm:$0xff]
        %v3629 = vld [vmem:[%s3617 + $0x58] sm:$0xff]
        %v3630 = vld [vmem:[%s3617 + $0x60] sm:$0xff]
        %v3631 = vld [vmem:[%s3617 + $0x68] sm:$0xff]
        %v3632 = vld [vmem:[%s3617 + $0x70] sm:$0xff]
        %v3633 = vld [vmem:[%s3617 + $0x78] sm:$0xff]
        %s3634 = scalar_lea.vmem %s5, 20
        %v3635 = vld [vmem:[%s3634] sm:$0x1]
        %v3636 = vld [vmem:[%s3634 + $0x1] sm:$0x1]
        %v3637 = vld [vmem:[%s3634 + $0x2] sm:$0x1]
        %v3638 = vld [vmem:[%s3634 + $0x3] sm:$0x1]
        %s3639 = scalar_lea.vmem %s4, 160
        %v3640 = vld [vmem:[%s3639] sm:$0xff]
        %v3641 = vld [vmem:[%s3639 + $0x8] sm:$0xff]
        %v3642 = vld [vmem:[%s3639 + $0x10] sm:$0xff]
        %v3643 = vld [vmem:[%s3639 + $0x18] sm:$0xff]
        %v3644 = vpack.c.bf16 %v3616, %v3616
        %v3645 = vpack.c.bf16 %v3618, %v3618
        %v3646 = vpack.c.bf16 %v3619, %v3619
        %v3647 = vpack.c.bf16 %v3620, %v3620
        %v3648 = vpack.c.bf16 %v3621, %v3621
        %v3649 = vpack.c.bf16 %v3622, %v3622
        %v3650 = vpack.c.bf16 %v3623, %v3623
        %v3651 = vpack.c.bf16 %v3624, %v3624
        %v3652 = vpack.c.bf16 %v3625, %v3625
        %v3653 = vpack.c.bf16 %v3626, %v3626
        %v3654 = vpack.c.bf16 %v3627, %v3627
        %v3655 = vpack.c.bf16 %v3628, %v3628
        %v3656 = vpack.c.bf16 %v3629, %v3629
        %v3657 = vpack.c.bf16 %v3630, %v3630
        %v3658 = vpack.c.bf16 %v3631, %v3631
        %v3659 = vpack.c.bf16 %v3632, %v3632
        %v3660 = vpack.c.bf16 %v3633, %v3633
        %v3665 = vperm.slane %v3635, 0
        %v3666 = vperm.slane %v3636, 0
        %v3667 = vperm.slane %v3637, 0
        %v3668 = vperm.slane %v3638, 0
        %v3677 = vunpack.c.l.b16 %v3645
        %v3678 = vunpack.c.l.b16 %v3646
        %v3679 = vunpack.c.l.b16 %v3647
        %v3680 = vunpack.c.l.b16 %v3648
        %v3681 = vpack.c.b16 %v3678, %v3677
        %v3682 = vpack.c.b16 %v3680, %v3679
        %v3686 = vsel %vm555, %v3644, 0
        %3688 = vmatpush.bf16.msra.mxu0 0
        %3689 = vmatpush.bf16.msra.mxu0 0
        %3690 = vmatpush.bf16.msra.mxu0 0
        %3691 = vmatpush.bf16.msra.mxu0 0
        %3692 = vmatpush.bf16.msra.mxu0 0
        %3693 = vmatpush.bf16.msra.mxu0 0
        %3694 = vmatpush.bf16.msra.mxu0 %v3682
        %3695 = vmatpush.bf16.msra.mxu0 %v3681
        %3696 = vmatmul.bf16.gmra.mxu0 %v3686
        %v3697 = vpop.f32.mrf.mxu0
        %v3698 = vadd.f32 %v3665, %v3697
        %v3699 = vpop.f32.mrf.mxu0
        %3700 = vdwg.mxu0
        %v3705 = vunpack.c.l.b16 %v3649
        %v3706 = vunpack.c.l.b16 %v3650
        %v3707 = vunpack.c.l.b16 %v3651
        %v3708 = vunpack.c.l.b16 %v3652
        %v3709 = vpack.c.b16 %v3706, %v3705
        %v3710 = vpack.c.b16 %v3708, %v3707
        %3713 = vmatpush.bf16.msra.mxu0 0
        %3714 = vmatpush.bf16.msra.mxu0 0
        %3715 = vmatpush.bf16.msra.mxu0 0
        %3716 = vmatpush.bf16.msra.mxu0 0
        %3717 = vmatpush.bf16.msra.mxu0 0
        %3718 = vmatpush.bf16.msra.mxu0 0
        %3719 = vmatpush.bf16.msra.mxu0 %v3710
        %3720 = vmatpush.bf16.msra.mxu0 %v3709
        %3721 = vmatmul.bf16.gmra.mxu0 %v3686
        %v3722 = vpop.f32.mrf.mxu0
        %v3723 = vadd.f32 %v3666, %v3722
        %v3724 = vpop.f32.mrf.mxu0
        %3725 = vdwg.mxu0
        %v3730 = vunpack.c.l.b16 %v3653
        %v3731 = vunpack.c.l.b16 %v3654
        %v3732 = vunpack.c.l.b16 %v3655
        %v3733 = vunpack.c.l.b16 %v3656
        %v3734 = vpack.c.b16 %v3731, %v3730
        %v3735 = vpack.c.b16 %v3733, %v3732
        %3738 = vmatpush.bf16.msra.mxu0 0
        %3739 = vmatpush.bf16.msra.mxu0 0
        %3740 = vmatpush.bf16.msra.mxu0 0
        %3741 = vmatpush.bf16.msra.mxu0 0
        %3742 = vmatpush.bf16.msra.mxu0 0
        %3743 = vmatpush.bf16.msra.mxu0 0
        %3744 = vmatpush.bf16.msra.mxu0 %v3735
        %3745 = vmatpush.bf16.msra.mxu0 %v3734
        %3746 = vmatmul.bf16.gmra.mxu0 %v3686
        %v3747 = vpop.f32.mrf.mxu0
        %v3748 = vadd.f32 %v3667, %v3747
        %v3749 = vpop.f32.mrf.mxu0
        %3750 = vdwg.mxu0
        %v3755 = vunpack.c.l.b16 %v3657
        %v3756 = vunpack.c.l.b16 %v3658
        %v3757 = vunpack.c.l.b16 %v3659
        %v3758 = vunpack.c.l.b16 %v3660
        %v3759 = vpack.c.b16 %v3756, %v3755
        %v3760 = vpack.c.b16 %v3758, %v3757
        %3763 = vmatpush.bf16.msra.mxu0 0
        %3764 = vmatpush.bf16.msra.mxu0 0
        %3765 = vmatpush.bf16.msra.mxu0 0
        %3766 = vmatpush.bf16.msra.mxu0 0
        %3767 = vmatpush.bf16.msra.mxu0 0
        %3768 = vmatpush.bf16.msra.mxu0 0
        %3769 = vmatpush.bf16.msra.mxu0 %v3760
        %3770 = vmatpush.bf16.msra.mxu0 %v3759
        %3771 = vmatmul.bf16.gmra.mxu0 %v3686
        %v3772 = vpop.f32.mrf.mxu0
        %v3773 = vadd.f32 %v3668, %v3772
        %v3774 = vpop.f32.mrf.mxu0
        %3775 = vdwg.mxu0
        %3776 = vrot.lane.b32.xlu0 %v3681, 120
        %v3777 = vpop.permute.xlu0 %3776
        %3778 = vrot.lane.b32.xlu0 %v3682, 120
        %v3779 = vpop.permute.xlu0 %3778
        %3782 = vrot.lane.b32.xlu0 %v3665, 120
        %v3783 = vpop.permute.xlu0 %3782
        %3785 = vmatpush.bf16.msra.mxu0 0
        %3786 = vmatpush.bf16.msra.mxu0 0
        %3787 = vmatpush.bf16.msra.mxu0 0
        %3788 = vmatpush.bf16.msra.mxu0 0
        %3789 = vmatpush.bf16.msra.mxu0 0
        %3790 = vmatpush.bf16.msra.mxu0 0
        %3791 = vmatpush.bf16.msra.mxu0 %v3779
        %3792 = vmatpush.bf16.msra.mxu0 %v3777
        %3793 = vmatmul.bf16.gmra.mxu0 %v2557
        %v3794 = vpop.f32.mrf.mxu0
        %v3795 = vadd.f32 %v3783, %v3794
        %v3796 = vpop.f32.mrf.mxu0
        %3797 = vdwg.mxu0
        %3798 = vrot.lane.b32.xlu0 %v3709, 120
        %v3799 = vpop.permute.xlu0 %3798
        %3800 = vrot.lane.b32.xlu0 %v3710, 120
        %v3801 = vpop.permute.xlu0 %3800
        %3804 = vrot.lane.b32.xlu0 %v3666, 120
        %v3805 = vpop.permute.xlu0 %3804
        %3807 = vmatpush.bf16.msra.mxu0 0
        %3808 = vmatpush.bf16.msra.mxu0 0
        %3809 = vmatpush.bf16.msra.mxu0 0
        %3810 = vmatpush.bf16.msra.mxu0 0
        %3811 = vmatpush.bf16.msra.mxu0 0
        %3812 = vmatpush.bf16.msra.mxu0 0
        %3813 = vmatpush.bf16.msra.mxu0 %v3801
        %3814 = vmatpush.bf16.msra.mxu0 %v3799
        %3815 = vmatmul.bf16.gmra.mxu0 %v2557
        %v3816 = vpop.f32.mrf.mxu0
        %v3817 = vadd.f32 %v3805, %v3816
        %v3818 = vpop.f32.mrf.mxu0
        %3819 = vdwg.mxu0
        %3820 = vrot.lane.b32.xlu0 %v3734, 120
        %v3821 = vpop.permute.xlu0 %3820
        %3822 = vrot.lane.b32.xlu0 %v3735, 120
        %v3823 = vpop.permute.xlu0 %3822
        %3826 = vrot.lane.b32.xlu0 %v3667, 120
        %v3827 = vpop.permute.xlu0 %3826
        %3829 = vmatpush.bf16.msra.mxu0 0
        %3830 = vmatpush.bf16.msra.mxu0 0
        %3831 = vmatpush.bf16.msra.mxu0 0
        %3832 = vmatpush.bf16.msra.mxu0 0
        %3833 = vmatpush.bf16.msra.mxu0 0
        %3834 = vmatpush.bf16.msra.mxu0 0
        %3835 = vmatpush.bf16.msra.mxu0 %v3823
        %3836 = vmatpush.bf16.msra.mxu0 %v3821
        %3837 = vmatmul.bf16.gmra.mxu0 %v2557
        %v3838 = vpop.f32.mrf.mxu0
        %v3839 = vadd.f32 %v3827, %v3838
        %v3840 = vpop.f32.mrf.mxu0
        %3841 = vdwg.mxu0
        %3842 = vrot.lane.b32.xlu0 %v3759, 120
        %v3843 = vpop.permute.xlu0 %3842
        %3844 = vrot.lane.b32.xlu0 %v3760, 120
        %v3845 = vpop.permute.xlu0 %3844
        %3848 = vrot.lane.b32.xlu0 %v3668, 120
        %v3849 = vpop.permute.xlu0 %3848
        %3851 = vmatpush.bf16.msra.mxu0 0
        %3852 = vmatpush.bf16.msra.mxu0 0
        %3853 = vmatpush.bf16.msra.mxu0 0
        %3854 = vmatpush.bf16.msra.mxu0 0
        %3855 = vmatpush.bf16.msra.mxu0 0
        %3856 = vmatpush.bf16.msra.mxu0 0
        %3857 = vmatpush.bf16.msra.mxu0 %v3845
        %3858 = vmatpush.bf16.msra.mxu0 %v3843
        %3859 = vmatmul.bf16.gmra.mxu0 %v2557
        %v3860 = vpop.f32.mrf.mxu0
        %v3861 = vadd.f32 %v3849, %v3860
        %v3862 = vpop.f32.mrf.mxu0
        %3863 = vdwg.mxu0
        %v3864 = vpack.c.bf16 %v3698, %v3698
        %v3865 = vpack.c.bf16 %v3723, %v3723
        %v3866 = vpack.c.bf16 %v3748, %v3748
        %v3867 = vpack.c.bf16 %v3773, %v3773
        %v3868 = vpack.c.bf16 %v3795, %v3795
        %v3869 = vpack.c.bf16 %v3817, %v3817
        %v3870 = vpack.c.bf16 %v3839, %v3839
        %v3871 = vpack.c.bf16 %v3861, %v3861
        %v3873 = vsel %vm754, %v3864, 0
        %v3876 = vsel %vm754, %v3868, 0
        %3878 = vmatpush.bf16.xpose.msra.mxu0 0
        %3879 = vmatpush.bf16.xpose.msra.mxu0 0
        %3880 = vmatpush.bf16.xpose.msra.mxu0 0
        %3881 = vmatpush.bf16.xpose.msra.mxu0 0
        %3882 = vmatpush.bf16.xpose.msra.mxu0 0
        %3883 = vmatpush.bf16.xpose.msra.mxu0 0
        %3884 = vmatpush.bf16.xpose.msra.mxu0 0
        %3885 = vmatpush.bf16.xpose.msra.mxu0 %v3876
        %3886 = vmatmul.bf16.gmra.mxu0 %v3873
        %v3887 = vpop.f32.mrf.mxu0
        %v3888 = vadd.f32 0.0, %v3887
        %v3889 = vpop.f32.mrf.mxu0
        %3890 = vdwg.mxu0
        %v3892 = vsel %vm754, %v3865, 0
        %v3895 = vsel %vm754, %v3869, 0
        %3897 = vmatpush.bf16.xpose.msra.mxu0 0
        %3898 = vmatpush.bf16.xpose.msra.mxu0 0
        %3899 = vmatpush.bf16.xpose.msra.mxu0 0
        %3900 = vmatpush.bf16.xpose.msra.mxu0 0
        %3901 = vmatpush.bf16.xpose.msra.mxu0 0
        %3902 = vmatpush.bf16.xpose.msra.mxu0 0
        %3903 = vmatpush.bf16.xpose.msra.mxu0 0
        %3904 = vmatpush.bf16.xpose.msra.mxu0 %v3895
        %3905 = vmatmul.bf16.gmra.mxu0 %v3892
        %v3906 = vpop.f32.mrf.mxu0
        %v3907 = vadd.f32 0.0, %v3906
        %v3908 = vpop.f32.mrf.mxu0
        %3909 = vdwg.mxu0
        %v3911 = vsel %vm754, %v3866, 0
        %v3914 = vsel %vm754, %v3870, 0
        %3916 = vmatpush.bf16.xpose.msra.mxu0 0
        %3917 = vmatpush.bf16.xpose.msra.mxu0 0
        %3918 = vmatpush.bf16.xpose.msra.mxu0 0
        %3919 = vmatpush.bf16.xpose.msra.mxu0 0
        %3920 = vmatpush.bf16.xpose.msra.mxu0 0
        %3921 = vmatpush.bf16.xpose.msra.mxu0 0
        %3922 = vmatpush.bf16.xpose.msra.mxu0 0
        %3923 = vmatpush.bf16.xpose.msra.mxu0 %v3914
        %3924 = vmatmul.bf16.gmra.mxu0 %v3911
        %v3925 = vpop.f32.mrf.mxu0
        %v3926 = vadd.f32 0.0, %v3925
        %v3927 = vpop.f32.mrf.mxu0
        %3928 = vdwg.mxu0
        %v3930 = vsel %vm754, %v3867, 0
        %v3933 = vsel %vm754, %v3871, 0
        %3935 = vmatpush.bf16.xpose.msra.mxu0 0
        %3936 = vmatpush.bf16.xpose.msra.mxu0 0
        %3937 = vmatpush.bf16.xpose.msra.mxu0 0
        %3938 = vmatpush.bf16.xpose.msra.mxu0 0
        %3939 = vmatpush.bf16.xpose.msra.mxu0 0
        %3940 = vmatpush.bf16.xpose.msra.mxu0 0
        %3941 = vmatpush.bf16.xpose.msra.mxu0 0
        %3942 = vmatpush.bf16.xpose.msra.mxu0 %v3933
        %3943 = vmatmul.bf16.gmra.mxu0 %v3930
        %v3944 = vpop.f32.mrf.mxu0
        %v3945 = vadd.f32 0.0, %v3944
        %v3946 = vpop.f32.mrf.mxu0
        %3947 = vdwg.mxu0
        %v3948 = vmul.f32 %v3888, 0.35355338
        %v3949 = vmul.f32 %v3907, 0.35355338
        %v3950 = vmul.f32 %v3926, 0.35355338
        %v3951 = vmul.f32 %v3945, 0.35355338
        %v3952 = vsel %vm754, %v3948, -inf
        %3953 = vmax.xlane.f32.xlu0 %v3952
        %v3954 = vpop.xlane.xlu0 %3953
        %v3955 = vsel %vm754, %v3949, -inf
        %3956 = vmax.xlane.f32.xlu0 %v3955
        %v3957 = vpop.xlane.xlu0 %3956
        %v3958 = vsel %vm754, %v3950, -inf
        %3959 = vmax.xlane.f32.xlu0 %v3958
        %v3960 = vpop.xlane.xlu0 %3959
        %v3961 = vsel %vm754, %v3951, -inf
        %3962 = vmax.xlane.f32.xlu0 %v3961
        %v3963 = vpop.xlane.xlu0 %3962
        %v3964 = vsub.f32 %v3948, %v3954
        %v3965 = vsub.f32 %v3949, %v3957
        %v3966 = vsub.f32 %v3950, %v3960
        %v3967 = vsub.f32 %v3951, %v3963
        %v3968 = vmul.f32 %v3964, 1.442695
        %v3969 = vpow.pop %v3968
        %v3970 = vmul.f32 %v3965, 1.442695
        %v3971 = vpow.pop %v3970
        %v3972 = vmul.f32 %v3966, 1.442695
        %v3973 = vpow.pop %v3972
        %v3974 = vmul.f32 %v3967, 1.442695
        %v3975 = vpow.pop %v3974
        %v3976 = vsel %vm754, %v3969, 0.0
        %3977 = vadd.xlane.f32.xlu0 %v3976
        %v3978 = vpop.xlane.xlu0 %3977
        %v3979 = vsel %vm754, %v3971, 0.0
        %3980 = vadd.xlane.f32.xlu0 %v3979
        %v3981 = vpop.xlane.xlu0 %3980
        %v3982 = vsel %vm754, %v3973, 0.0
        %3983 = vadd.xlane.f32.xlu0 %v3982
        %v3984 = vpop.xlane.xlu0 %3983
        %v3985 = vsel %vm754, %v3975, 0.0
        %3986 = vadd.xlane.f32.xlu0 %v3985
        %v3987 = vpop.xlane.xlu0 %3986
        %v3988 = vrcp.pop %v3978
        %v3989 = vrcp.pop %v3981
        %v3990 = vrcp.pop %v3984
        %v3991 = vrcp.pop %v3987
        %v3992 = vmul.f32 %v3969, %v3988
        %v3993 = vmul.f32 %v3971, %v3989
        %v3994 = vmul.f32 %v3973, %v3990
        %v3995 = vmul.f32 %v3975, %v3991
        %v3996 = vpack.c.bf16 %v3992, %v3992
        %v3997 = vpack.c.bf16 %v3993, %v3993
        %v3998 = vpack.c.bf16 %v3994, %v3994
        %v3999 = vpack.c.bf16 %v3995, %v3995
        %v4001 = vunpack.c.l.b16 %v3868
        %v4002 = vpack.c.b16 %v4001, %v4001
        %4003 = vrot.lane.b32.xlu0 %v4002, 120
        %v4004 = vpop.permute.xlu0 %4003
        %v4006 = vsel %vm754, %v3996, 0
        %v4009 = vsel %vm910, %v4004, 0
        %4011 = vmatpush.bf16.msra.mxu0 0
        %4012 = vmatpush.bf16.msra.mxu0 0
        %4013 = vmatpush.bf16.msra.mxu0 0
        %4014 = vmatpush.bf16.msra.mxu0 0
        %4015 = vmatpush.bf16.msra.mxu0 0
        %4016 = vmatpush.bf16.msra.mxu0 0
        %4017 = vmatpush.bf16.msra.mxu0 0
        %4018 = vmatpush.bf16.msra.mxu0 %v4009
        %4019 = vmatmul.bf16.gmra.mxu0 %v4006
        %v4020 = vpop.f32.mrf.mxu0
        %v4021 = vadd.f32 0.0, %v4020
        %v4022 = vpop.f32.mrf.mxu0
        %4023 = vdwg.mxu0
        %v4025 = vunpack.c.l.b16 %v3869
        %v4026 = vpack.c.b16 %v4025, %v4025
        %4027 = vrot.lane.b32.xlu0 %v4026, 120
        %v4028 = vpop.permute.xlu0 %4027
        %v4030 = vsel %vm754, %v3997, 0
        %v4033 = vsel %vm910, %v4028, 0
        %4035 = vmatpush.bf16.msra.mxu0 0
        %4036 = vmatpush.bf16.msra.mxu0 0
        %4037 = vmatpush.bf16.msra.mxu0 0
        %4038 = vmatpush.bf16.msra.mxu0 0
        %4039 = vmatpush.bf16.msra.mxu0 0
        %4040 = vmatpush.bf16.msra.mxu0 0
        %4041 = vmatpush.bf16.msra.mxu0 0
        %4042 = vmatpush.bf16.msra.mxu0 %v4033
        %4043 = vmatmul.bf16.gmra.mxu0 %v4030
        %v4044 = vpop.f32.mrf.mxu0
        %v4045 = vadd.f32 0.0, %v4044
        %v4046 = vpop.f32.mrf.mxu0
        %4047 = vdwg.mxu0
        %v4049 = vunpack.c.l.b16 %v3870
        %v4050 = vpack.c.b16 %v4049, %v4049
        %4051 = vrot.lane.b32.xlu0 %v4050, 120
        %v4052 = vpop.permute.xlu0 %4051
        %v4054 = vsel %vm754, %v3998, 0
        %v4057 = vsel %vm910, %v4052, 0
        %4059 = vmatpush.bf16.msra.mxu0 0
        %4060 = vmatpush.bf16.msra.mxu0 0
        %4061 = vmatpush.bf16.msra.mxu0 0
        %4062 = vmatpush.bf16.msra.mxu0 0
        %4063 = vmatpush.bf16.msra.mxu0 0
        %4064 = vmatpush.bf16.msra.mxu0 0
        %4065 = vmatpush.bf16.msra.mxu0 0
        %4066 = vmatpush.bf16.msra.mxu0 %v4057
        %4067 = vmatmul.bf16.gmra.mxu0 %v4054
        %v4068 = vpop.f32.mrf.mxu0
        %v4069 = vadd.f32 0.0, %v4068
        %v4070 = vpop.f32.mrf.mxu0
        %4071 = vdwg.mxu0
        %v4073 = vunpack.c.l.b16 %v3871
        %v4074 = vpack.c.b16 %v4073, %v4073
        %4075 = vrot.lane.b32.xlu0 %v4074, 120
        %v4076 = vpop.permute.xlu0 %4075
        %v4078 = vsel %vm754, %v3999, 0
        %v4081 = vsel %vm910, %v4076, 0
        %4083 = vmatpush.bf16.msra.mxu0 0
        %4084 = vmatpush.bf16.msra.mxu0 0
        %4085 = vmatpush.bf16.msra.mxu0 0
        %4086 = vmatpush.bf16.msra.mxu0 0
        %4087 = vmatpush.bf16.msra.mxu0 0
        %4088 = vmatpush.bf16.msra.mxu0 0
        %4089 = vmatpush.bf16.msra.mxu0 0
        %4090 = vmatpush.bf16.msra.mxu0 %v4081
        %4091 = vmatmul.bf16.gmra.mxu0 %v4078
        %v4092 = vpop.f32.mrf.mxu0
        %v4093 = vadd.f32 0.0, %v4092
        %v4094 = vpop.f32.mrf.mxu0
        %4095 = vdwg.mxu0
        %v4096 = vpack.c.bf16 %v4021, %v4021
        %v4097 = vpack.c.bf16 %v4045, %v4045
        %v4098 = vpack.c.bf16 %v4069, %v4069
        %v4099 = vpack.c.bf16 %v4093, %v4093
        %v4100 = vpack.c.bf16 %v3640, %v3640
        %v4101 = vpack.c.bf16 %v3641, %v3641
        %v4102 = vpack.c.bf16 %v3642, %v3642
        %v4103 = vpack.c.bf16 %v3643, %v3643
        %v4105 = vsel %vm754, %v4096, 0
        %v4108 = vsel %vm910, %v4100, 0
        %4110 = vmatpush.bf16.msra.mxu0 0
        %4111 = vmatpush.bf16.msra.mxu0 0
        %4112 = vmatpush.bf16.msra.mxu0 0
        %4113 = vmatpush.bf16.msra.mxu0 0
        %4114 = vmatpush.bf16.msra.mxu0 0
        %4115 = vmatpush.bf16.msra.mxu0 0
        %4116 = vmatpush.bf16.msra.mxu0 0
        %4117 = vmatpush.bf16.msra.mxu0 %v4108
        %4118 = vmatmul.bf16.gmra.mxu0 %v4105
        %v4119 = vpop.f32.mrf.mxu0
        %v4120 = vadd.f32 0.0, %v4119
        %v4121 = vpop.f32.mrf.mxu0
        %4122 = vdwg.mxu0
        %v4124 = vsel %vm754, %v4097, 0
        %v4127 = vsel %vm910, %v4101, 0
        %4129 = vmatpush.bf16.msra.mxu0 0
        %4130 = vmatpush.bf16.msra.mxu0 0
        %4131 = vmatpush.bf16.msra.mxu0 0
        %4132 = vmatpush.bf16.msra.mxu0 0
        %4133 = vmatpush.bf16.msra.mxu0 0
        %4134 = vmatpush.bf16.msra.mxu0 0
        %4135 = vmatpush.bf16.msra.mxu0 0
        %4136 = vmatpush.bf16.msra.mxu0 %v4127
        %4137 = vmatmul.bf16.gmra.mxu0 %v4124
        %v4138 = vpop.f32.mrf.mxu0
        %v4139 = vadd.f32 0.0, %v4138
        %v4140 = vpop.f32.mrf.mxu0
        %4141 = vdwg.mxu0
        %v4143 = vsel %vm754, %v4098, 0
        %v4146 = vsel %vm910, %v4102, 0
        %4148 = vmatpush.bf16.msra.mxu0 0
        %4149 = vmatpush.bf16.msra.mxu0 0
        %4150 = vmatpush.bf16.msra.mxu0 0
        %4151 = vmatpush.bf16.msra.mxu0 0
        %4152 = vmatpush.bf16.msra.mxu0 0
        %4153 = vmatpush.bf16.msra.mxu0 0
        %4154 = vmatpush.bf16.msra.mxu0 0
        %4155 = vmatpush.bf16.msra.mxu0 %v4146
        %4156 = vmatmul.bf16.gmra.mxu0 %v4143
        %v4157 = vpop.f32.mrf.mxu0
        %v4158 = vadd.f32 0.0, %v4157
        %v4159 = vpop.f32.mrf.mxu0
        %4160 = vdwg.mxu0
        %v4162 = vsel %vm754, %v4099, 0
        %v4165 = vsel %vm910, %v4103, 0
        %4167 = vmatpush.bf16.msra.mxu0 0
        %4168 = vmatpush.bf16.msra.mxu0 0
        %4169 = vmatpush.bf16.msra.mxu0 0
        %4170 = vmatpush.bf16.msra.mxu0 0
        %4171 = vmatpush.bf16.msra.mxu0 0
        %4172 = vmatpush.bf16.msra.mxu0 0
        %4173 = vmatpush.bf16.msra.mxu0 0
        %4174 = vmatpush.bf16.msra.mxu0 %v4165
        %4175 = vmatmul.bf16.gmra.mxu0 %v4162
        %v4176 = vpop.f32.mrf.mxu0
        %v4177 = vadd.f32 0.0, %v4176
        %v4178 = vpop.f32.mrf.mxu0
        %4179 = vdwg.mxu0
        %v4180 = vsel %vm555, %v4120, 0.0
        %v4181 = vsel %vm555, %v4139, 0.0
        %v4182 = vadd.f32 %v4180, %v4181
        %v4183 = vsel %vm555, %v4158, 0.0
        %v4184 = vadd.f32 %v4182, %v4183
        %v4185 = vsel %vm555, %v4177, 0.0
        %v4186 = vadd.f32 %v4184, %v4185
        %v4187 = vperm.slane %v3070, 7
        %v4188 = vadd.f32 %v4186, %v4187
        %v4189 = vadd.f32 %v3590, %v4188
        %v4190 = vsel %vm555, %v4189, 0.0
        %4191 = vadd.xlane.f32.xlu0 %v4190
        %v4192 = vpop.xlane.xlu0 %4191
        %v4193 = vmul.f32 %v4192, %v565
        %v4194 = vsub.f32 %v4189, %v4193
        %v4195 = vmul.f32 %v4194, %v4194
        %v4196 = vsel %vm555, %v4195, 0.0
        %4197 = vadd.xlane.f32.xlu0 %v4196
        %v4198 = vpop.xlane.xlu0 %4197
        %v4199 = vmul.f32 %v4198, %v565
        %v4200 = vadd.f32 %v4199, 1e-05
        %v4201 = vrsqrt.pop %v4200
        %v4202 = vmul.f32 %v4201, %v4200
        %v4203 = vmul.f32 %v4202, %v4201
        %v4204 = vmul.f32 0.5, %v4203
        %v4205 = vsub.f32 1.5, %v4204
        %v4206 = vmul.f32 %v4201, %v4205
        %vm4207 = vweird.f32 %v4200
        %vm4208 = vweird.f32 %v4201
        %vm4209 = vmor %vm4207, %vm4208
        %v4210 = vsel %vm4209, %v4201, %v4206
        %v4211 = vmul.f32 %v4194, %v4210
        %v4212 = vperm.slane %v3070, 4
        %v4213 = vmul.f32 %v4211, %v4212
        %v4214 = vperm.slane %v3070, 5
        %v4215 = vadd.f32 %v4213, %v4214
        %s4216 = scalar_lea.vmem %s6, 96
        %v4217 = vld [vmem:[%s4216] sm:$0xff]
        %v4218 = vld [vmem:[%s4216 + $0x8] sm:$0xff]
        %v4219 = vld [vmem:[%s4216 + $0x10] sm:$0xff]
        %v4220 = vld [vmem:[%s4216 + $0x18] sm:$0xff]
        %s4221 = scalar_lea.vmem %s7, 3
        %v4222 = vld [vmem:[%s4221] sm:$0x1]
        %s4223 = scalar_lea.vmem %s8, 384
        %v4224 = vld [vmem:[%s4223] sm:$0xff]
        %v4225 = vld [vmem:[%s4223 + $0x8] sm:$0xff]
        %v4226 = vld [vmem:[%s4223 + $0x10] sm:$0xff]
        %v4227 = vld [vmem:[%s4223 + $0x18] sm:$0xff]
        %v4228 = vld [vmem:[%s4223 + $0x20] sm:$0xff]
        %v4229 = vld [vmem:[%s4223 + $0x28] sm:$0xff]
        %v4230 = vld [vmem:[%s4223 + $0x30] sm:$0xff]
        %v4231 = vld [vmem:[%s4223 + $0x38] sm:$0xff]
        %v4232 = vld [vmem:[%s4223 + $0x40] sm:$0xff]
        %v4233 = vld [vmem:[%s4223 + $0x48] sm:$0xff]
        %v4234 = vld [vmem:[%s4223 + $0x50] sm:$0xff]
        %v4235 = vld [vmem:[%s4223 + $0x58] sm:$0xff]
        %v4236 = vld [vmem:[%s4223 + $0x60] sm:$0xff]
        %v4237 = vld [vmem:[%s4223 + $0x68] sm:$0xff]
        %v4238 = vld [vmem:[%s4223 + $0x70] sm:$0xff]
        %v4239 = vld [vmem:[%s4223 + $0x78] sm:$0xff]
        %v4240 = vpack.c.bf16 %v4215, %v4215
        %v4241 = vpack.c.bf16 %v4218, %v4217
        %v4242 = vpack.c.bf16 %v4220, %v4219
        %v4244 = vperm.slane %v4222, 0
        %v4247 = vsel %vm555, %v4240, 0
        %4249 = vmatpush.bf16.msra.mxu0 0
        %4250 = vmatpush.bf16.msra.mxu0 0
        %4251 = vmatpush.bf16.msra.mxu0 0
        %4252 = vmatpush.bf16.msra.mxu0 0
        %4253 = vmatpush.bf16.msra.mxu0 0
        %4254 = vmatpush.bf16.msra.mxu0 0
        %4255 = vmatpush.bf16.msra.mxu0 %v4242
        %4256 = vmatpush.bf16.msra.mxu0 %v4241
        %4257 = vmatmul.bf16.gmra.mxu0 %v4247
        %v4258 = vpop.f32.mrf.mxu0
        %v4259 = vadd.f32 %v4244, %v4258
        %v4260 = vpop.f32.mrf.mxu0
        %4261 = vdwg.mxu0
        %v4262 = vmul.f32 %v4259, 0.5
        %v4263 = vmul.f32 %v4259, 0.044715
        %v4264 = vmul.f32 %v4263, %v4259
        %v4265 = vmul.f32 %v4264, %v4259
        %v4266 = vadd.f32 %v4259, %v4265
        %v4267 = vmul.f32 %v4266, 0.7978846
        %v4268 = vtanh.pop %v4267
        %v4269 = vadd.f32 %v4268, 1.0
        %v4270 = vmul.f32 %v4262, %v4269
        %v4271 = vpack.c.bf16 %v4270, %v4270
        %v4272 = vpack.c.bf16 %v4225, %v4224
        %v4273 = vpack.c.bf16 %v4227, %v4226
        %v4274 = vpack.c.bf16 %v4229, %v4228
        %v4275 = vpack.c.bf16 %v4231, %v4230
        %v4276 = vpack.c.bf16 %v4233, %v4232
        %v4277 = vpack.c.bf16 %v4235, %v4234
        %v4278 = vpack.c.bf16 %v4237, %v4236
        %v4279 = vpack.c.bf16 %v4239, %v4238
        %v4280 = vperm.slane %v3071, 0
        %4281 = vmatpush.bf16.msra.mxu0 %v4279
        %4282 = vmatpush.bf16.msra.mxu0 %v4278
        %4283 = vmatpush.bf16.msra.mxu0 %v4277
        %4284 = vmatpush.bf16.msra.mxu0 %v4276
        %4285 = vmatpush.bf16.msra.mxu0 %v4275
        %4286 = vmatpush.bf16.msra.mxu0 %v4274
        %4287 = vmatpush.bf16.msra.mxu0 %v4273
        %4288 = vmatpush.bf16.msra.mxu0 %v4272
        %4289 = vmatmul.bf16.gmra.mxu0 %v4271
        %v4290 = vpop.f32.mrf.mxu0
        %v4291 = vadd.f32 %v4280, %v4290
        %v4292 = vpop.f32.mrf.mxu0
        %4293 = vdwg.mxu0
        %v4294 = vadd.f32 %v4189, %v4291
        %v4295 = vld [vmem:[%s11 + $0x2] sm:$0x1]
        %v4296 = vld [vmem:[%s11 + $0x3] sm:$0x1]
        %v4297 = vsel %vm555, %v4294, 0.0
        %4298 = vadd.xlane.f32.xlu0 %v4297
        %v4299 = vpop.xlane.xlu0 %4298
        %v4300 = vmul.f32 %v4299, %v565
        %v4301 = vsub.f32 %v4294, %v4300
        %v4302 = vmul.f32 %v4301, %v4301
        %v4303 = vsel %vm555, %v4302, 0.0
        %4304 = vadd.xlane.f32.xlu0 %v4303
        %v4305 = vpop.xlane.xlu0 %4304
        %v4306 = vmul.f32 %v4305, %v565
        %v4307 = vadd.f32 %v4306, 1e-05
        %v4308 = vrsqrt.pop %v4307
        %v4309 = vmul.f32 %v4308, %v4307
        %v4310 = vmul.f32 %v4309, %v4308
        %v4311 = vmul.f32 0.5, %v4310
        %v4312 = vsub.f32 1.5, %v4311
        %v4313 = vmul.f32 %v4308, %v4312
        %vm4314 = vweird.f32 %v4307
        %vm4315 = vweird.f32 %v4308
        %vm4316 = vmor %vm4314, %vm4315
        %v4317 = vsel %vm4316, %v4308, %v4313
        %v4318 = vmul.f32 %v4301, %v4317
        %v4319 = vperm.slane %v4295, 0
        %v4320 = vmul.f32 %v4318, %v4319
        %v4321 = vperm.slane %v4296, 0
        %v4322 = vadd.f32 %v4320, %v4321
        %v4323 = vpack.c.bf16 %v4322, %v4322
        %v4324 = vld [vmem:[%s12] sm:$0xff]
        %v4325 = vld [vmem:[%s12 + $0x8] sm:$0xff]
        %v4326 = vld [vmem:[%s12 + $0x10] sm:$0xff]
        %v4327 = vld [vmem:[%s12 + $0x18] sm:$0xff]
        %v4328 = vpack.c.bf16 %v4325, %v4324
        %v4329 = vpack.c.bf16 %v4327, %v4326
        %v4331 = vsel %vm555, %v4323, 0
        %4333 = vmatpush.bf16.msra.mxu0 0
        %4334 = vmatpush.bf16.msra.mxu0 0
        %4335 = vmatpush.bf16.msra.mxu0 0
        %4336 = vmatpush.bf16.msra.mxu0 0
        %4337 = vmatpush.bf16.msra.mxu0 0
        %4338 = vmatpush.bf16.msra.mxu0 0
        %4339 = vmatpush.bf16.msra.mxu0 %v4329
        %4340 = vmatpush.bf16.msra.mxu0 %v4328
        %4341 = vmatmul.bf16.gmra.mxu0 %v4331
        %v4342 = vpop.f32.mrf.mxu0
        %v4343 = vadd.f32 0.0, %v4342
        %v4344 = vpop.f32.mrf.mxu0
        %4345 = vdwg.mxu0
        %vm4346 = vcmask 523264
        %4347 = vst.msk [vmem:[%s512] sm:$0xff] %vm4346, %v4343
        %v4348 = vld [vmem:[%s534] sm:$0xff]
        %v4349 = vsel %vm4346, %v4343, -inf
        %4350 = vmax.xlane.f32.xlu0 %v4349
        %v4351 = vpop.xlane.xlu0 %4350
        %v4352 = vsub.f32 %v4343, %v4351
        %v4353 = vmul.f32 %v4352, 1.442695
        %v4354 = vpow.pop %v4353
        %v4355 = vsel %vm4346, %v4354, 0.0
        %4356 = vadd.xlane.f32.xlu0 %v4355
        %v4357 = vpop.xlane.xlu0 %4356
        %v4358 = vlog2.pop %v4357
        %v4359 = vmul.f32 %v4358, 0.6931472
        %v4360 = vadd.f32 %v4351, %v4359
        %4361 = vset.pattern.permute.xlu0 0
        %4362 = vperm.xlu0 %4361, %v4348
        %v4363 = vpop.permute.xlu0 %4362
        %vm4364 = vcmp.eq.s32.totalorder %v551, %v4363
        %v4365 = vsel %vm4364, %v4343, 0.0
        %v4366 = vsel %vm4346, %v4365, 0.0
        %4367 = vadd.xlane.f32.xlu0 %v4366
        %v4368 = vpop.xlane.xlu0 %4367
        %vm4369 = vcmp.ne.s32.totalorder %v4348, 0
        %v4370 = vsel %vm4369, 1, 0
        %v4371 = vcvt.s32.f32 %v4370
        %v4372 = vsub.f32 %v4360, %v4368
        %v4373 = vmul.f32 %v4372, %v4371
        %vm4374 = vcmask 7168
        %v4375 = vsel %vm4374, %v4373, 0.0
        %v4376 = vrot.slane %v4375, 4
        %v4377 = vadd.f32 %v4375, %v4376
        %v4378 = vrot.slane %v4377, 2
        %v4379 = vadd.f32 %v4377, %v4378
        %v4380 = vrot.slane %v4379, 1
        %v4381 = vadd.f32 %v4379, %v4380
        %vm4382 = vcmask 0
        %4383 = vst.msk [vmem:[%s537] sm:$0x1] %vm4382, %v4381
        %v4384 = vsel %vm4374, %v4371, 0.0
        %v4385 = vrot.slane %v4384, 4
        %v4386 = vadd.f32 %v4384, %v4385
        %v4387 = vrot.slane %v4386, 2
        %v4388 = vadd.f32 %v4386, %v4387
        %v4389 = vrot.slane %v4388, 1
        %v4390 = vadd.f32 %v4388, %v4389
        %4391 = vst.msk [vmem:[%s540] sm:$0x1] %vm4382, %v4390
        %s4392 = sand.u32 %s326, 1
        %s4393 = scalar_lea.sflag [#allocation3], %s4392
        %s4394 = sand.u32 %s326, 1
        %s4395 = smul.addr %s4394, 8
        %s4396 = scalar_lea.vmem [#allocation2], %s4395
        %p4397 = scmp.lt.s32.totalorder %s30, 1
        %s4398 = scalar_select %p4397, %s30, 1
        %s4399 = scalar_lea.vmem %s14, %s4398
        %p4400 = scmp.lt.s32.totalorder %s30, 1
        %s4401 = scalar_select %p4400, %s30, 1
        %s4402 = scalar_lea.vmem %s15, %s4401
        // Predicated region
        $region73: #{_lambda_.1} parent=71 // pred_check
          %p4403 = pneg %p336
        $region74: #{_lambda_.1} parent=71 // pred_check_branch
          %4405 = sbr.rel (%p4403) target = $region76
        $region75: #{_lambda_.1} parent=71 // pred_region
          %4407 = vsyncadd %s4393, 0
          %s4408 = smul.addr %s30, 8
          %s4409 = scalar_lea.hbm %s13, %s4408
          %s4411 = sshll.u32 %s4396, 4
          %s4412 = int_to_ptr.vmem [resolvable:$true] %s4411
          %s4413 = sshll.u32 %s4409, 4
          %s4414 = int_to_ptr.hbm [resolvable:$true] %s4413
          %4416 = dma.vmem_to_hbm [thread:$0]  %s4412, 128, %s4414, %s4393
        $region76: #{_lambda_.1} parent=71 // pred_fallthru
          _
        // Predicated region
        $region77: #{_lambda_.1} parent=71 // pred_check
          %p4417 = pneg %p362
        $region78: #{_lambda_.1} parent=71 // pred_check_branch
          %4419 = sbr.rel (%p4417) target = $region80
        $region79: #{_lambda_.1} parent=71 // pred_region
          _
        $region80: #{_lambda_.1} parent=71 // pred_fallthru
          _
        // Predicated region
        $region81: #{_lambda_.1} parent=71 // pred_check
          %p4420 = pneg %p388
        $region82: #{_lambda_.1} parent=71 // pred_check_branch
          %4422 = sbr.rel (%p4420) target = $region84
        $region83: #{_lambda_.1} parent=71 // pred_region
          _
        $region84: #{_lambda_.1} parent=71 // pred_fallthru
          _
      $region72: #{_lambda_.1} parent=5 // pred_fallthru
        _
      %p4423 = scmp.le.s32.totalorder 2, %s25
      // Predicated region
      $region85: #{_lambda_.1} parent=5 // pred_check
        %p4424 = pneg %p4423
      $region86: #{_lambda_.1} parent=5 // pred_check_branch
        %4426 = sbr.rel (%p4424) target = $region88
      $region87: #{_lambda_.1} parent=5 // pred_region
        %s4427 = ssub.s32 %s25, 2
        // Predicated region
        $region89: #{_lambda_.1} parent=87 // pred_check
          %p4428 = pneg %p342
        $region90: #{_lambda_.1} parent=87 // pred_check_branch
          %4430 = sbr.rel (%p4428) target = $region92
        $region91: #{_lambda_.1} parent=87 // pred_region
          %s4431 = sand.u32 %s327, 1
          %s4432 = scalar_lea.sflag [#allocation3], %s4431
          %s4433 = sand.u32 %s327, 1
          %s4434 = smul.addr %s4433, 8
          %s4435 = scalar_lea.vmem [#allocation2], %s4434
          %4437 = dma.done %s4432, 128
        $region92: #{_lambda_.1} parent=87 // pred_fallthru
          _
        // Predicated region
        $region93: #{_lambda_.1} parent=87 // pred_check
          %p4438 = pneg %p368
        $region94: #{_lambda_.1} parent=87 // pred_check_branch
          %4440 = sbr.rel (%p4438) target = $region96
        $region95: #{_lambda_.1} parent=87 // pred_region
          %p4441 = scmp.lt.s32.totalorder %s31, 1
          %s4442 = scalar_select %p4441, %s31, 1
          %s4443 = scalar_lea.vmem %s14, %s4442
        $region96: #{_lambda_.1} parent=87 // pred_fallthru
          _
        // Predicated region
        $region97: #{_lambda_.1} parent=87 // pred_check
          %p4444 = pneg %p394
        $region98: #{_lambda_.1} parent=87 // pred_check_branch
          %4446 = sbr.rel (%p4444) target = $region100
        $region99: #{_lambda_.1} parent=87 // pred_region
          %p4447 = scmp.lt.s32.totalorder %s31, 1
          %s4448 = scalar_select %p4447, %s31, 1
          %s4449 = scalar_lea.vmem %s15, %s4448
        $region100: #{_lambda_.1} parent=87 // pred_fallthru
          _
      $region88: #{_lambda_.1} parent=5 // pred_fallthru
        _
    $region6: #{_lambda_.1} parent=1 // loop_footer
      %s29 = sadd.s32 1, %s25
    $region7: #{_lambda_.1} parent=1 // loop_footer_branch
      %24 = sbr.rel target = $region3
    $region8: #{_lambda_.1} parent=1 // loop_exit
      _
    %4450 = vsyncpa [#allocation3], 1
    %s4451 = scalar_lea.sflag [#allocation3], 1
    %4452 = vsyncpa %s4451, 1

</llo_original>
